<compile_context>
chip_gen: v7x
topology: tpu7x:2x2x1
jax: 0.10.0
libtpu: 0.0.40
codegen_flags: <defaults>
</compile_context>

<pallas_src>
import functools
import math

import jax
import jax.numpy as jnp
from jax.experimental import pallas as pl
from jax.experimental.pallas import tpu as pltpu

EPS = 1e-5  # PyTorch LayerNorm default eps


def _layernorm(v, gamma, beta, n_real):
    # Padded channel lanes are zero, so plain sums over the full (padded) lane
    # width divided by the real channel count give the masked statistics, and
    # zero-padded gamma/beta keep padded lanes exactly zero in the output.
    inv_n = 1.0 / n_real
    mean = jnp.sum(v, axis=-1, keepdims=True) * inv_n
    var = jnp.sum(v * v, axis=-1, keepdims=True) * inv_n - mean * mean
    return (v - mean) * jax.lax.rsqrt(var + EPS) * gamma + beta


def _gelu_exact(x):
    # PyTorch nn.GELU() default is the exact (erf) formulation.
    return 0.5 * x * (1.0 + jax.lax.erf(x * 0.7071067811865476))


def cross_attention_kernel(n_heads, c_real, has_cond, use_bf16, *refs):
    if has_cond:
        (x_ref, cond_ref, vec_ref, wq_ref, wkv_ref, wo_ref, w1_ref, w2_ref,
         out_ref, o_acc) = refs
    else:
        (x_ref, vec_ref, wq_ref, wkv_ref, wo_ref, w1_ref, w2_ref,
         out_ref, o_acc) = refs
        cond_ref = None

    Bt, S, Cp = x_ref.shape
    H = n_heads
    D = c_real // H
    M = Bt * S
    mm = jnp.bfloat16 if use_bf16 else jnp.float32

    # --- unpack the row-packed per-channel vectors (single (8, Cv) DMA) -----
    vecs = vec_ref[...]
    ln1_g, ln1_b = vecs[0:1, :Cp], vecs[1:2, :Cp]
    bo = vecs[2:3, :Cp]
    ln2_g, ln2_b = vecs[3:4, :Cp], vecs[4:5, :Cp]
    b1, b2 = vecs[5:6, :Cp], vecs[6:7, :Cp]
    bq = vecs[7:8, 0:c_real]                       # pre-scaled by 1/sqrt(D)
    bkv = vecs[7:8, c_real:3 * c_real]             # [bk | bv]

    # --- LN1 (batch tile folded to rows; tile-aligned leading-dim merge) ----
    x = x_ref[...].astype(jnp.float32).reshape(M, Cp)
    x_ln = _layernorm(x, ln1_g, ln1_b, c_real)

    if has_cond:
        Skv = cond_ref.shape[1]
        kv_src = cond_ref[...].astype(jnp.float32).reshape(Bt * Skv, Cp)
    else:
        Skv = S
        kv_src = x_ln                              # self-attention on LN(x)

    x_mm = x_ln.astype(mm)
    c_mm = kv_src.astype(mm)

    # --- fused full-width projections (2 dots instead of 3*H per-head dots) -
    q = jnp.dot(x_mm, wq_ref[...], preferred_element_type=jnp.float32) + bq
    kv = jnp.dot(c_mm, wkv_ref[...], preferred_element_type=jnp.float32) + bkv
    q = q.astype(mm)                               # cast exactly once
    kv = kv.astype(mm)

    # --- per-head scores / softmax / PV --------------------------------------
    # H is small; static unroll.  Per-head intermediates are tiny (D=C/H).
    for h in range(H):
        q3 = q[:, h * D:(h + 1) * D].reshape(Bt, S, D)
        k3 = kv[:, h * D:(h + 1) * D].reshape(Bt, Skv, D)
        v3 = kv[:, c_real + h * D:c_real + (h + 1) * D].reshape(Bt, Skv, D)

        s = jnp.einsum("bqd,bkd->bqk", q3, k3,
                       preferred_element_type=jnp.float32)   # scale folded in Wq
        s = s - jnp.max(s, axis=-1, keepdims=True)
        e = jnp.exp(s)
        inv = pl.reciprocal(jnp.sum(e, axis=-1, keepdims=True), approx=use_bf16)
        p = (e * inv).astype(mm)
        o3 = jnp.einsum("bqk,bkd->bqd", p, v3,
                        preferred_element_type=jnp.float32)  # (Bt, S, D)
        o_acc[:, h * D:(h + 1) * D] = o3.reshape(M, D)

    # --- single stacked (H*D)-contraction output projection ------------------
    attn = jnp.dot(o_acc[...].astype(mm), wo_ref[...],
                   preferred_element_type=jnp.float32) + bo
    y1 = attn + x                                  # residual 1 (f32)

    # --- FFN ------------------------------------------------------------------
    z = _layernorm(y1, ln2_g, ln2_b, c_real)
    h1 = _gelu_exact(
        jnp.dot(z.astype(mm), w1_ref[...],
                preferred_element_type=jnp.float32) + b1)
    out = (jnp.dot(h1.astype(mm), w2_ref[...],
                   preferred_element_type=jnp.float32) + b2 + y1)

    out_ref[...] = out.reshape(Bt, S, Cp).astype(out_ref.dtype)


def _pick_batch_tile(batch, seq, target_rows=512, min_grid=2):
    """Smallest divisor Bt of `batch` whose folded row count Bt*seq reaches
    `target_rows` (v6e/v5e roofline), capped so the grid keeps >= `min_grid`
    steps when possible (v7x has 2 TensorCores; a grid of 1 idles one)."""
    cap = max(1, batch // min_grid) if batch >= min_grid else max(1, batch)
    best = 1
    for bt in range(1, cap + 1):
        if batch % bt == 0:
            best = bt
            if bt * seq >= target_rows:
                break
    return best


def _pad_to(a, shape):
    pads = [(0, t - s) for s, t in zip(a.shape, shape)]
    return jnp.pad(a, pads) if any(p[1] for p in pads) else a


def cross_attention(x, params, n_heads, cond=None, use_bf16=True):
    B, S, C = x.shape
    H = n_heads
    assert C % H == 0, f"channels ({C}) must be divisible by n_heads ({H})"
    assert S % 8 == 0, f"sequence length ({S}) must be a multiple of 8"
    D = C // H
    has_cond = cond is not None
    if has_cond:
        Bc, Skv, Cc = cond.shape
        assert Bc == B and Cc == C, "cond must be [B, Skv, C]"
        assert Skv % 8 == 0, f"cond sequence length ({Skv}) must be a multiple of 8"
    else:
        Skv = S

    # Lane-dense channel padding (no-op when C is already a multiple of 128).
    Cp = ((C + 127) // 128) * 128
    Cv = max(Cp, ((3 * C + 127) // 128) * 128)     # width of packed bias rows

    scale = 1.0 / math.sqrt(D)
    f32 = jnp.float32
    wdt = jnp.bfloat16 if use_bf16 else f32

    # --- inputs padded to the lane-dense channel width ----------------------
    x_p = _pad_to(x, (B, S, Cp))
    cond_p = _pad_to(cond, (B, Skv, Cp)) if has_cond else None

    # --- packed per-channel vectors: one (8, Cv) f32 array ------------------
    row = lambda v: _pad_to(v.astype(f32), (Cv,))
    vecs = jnp.stack([
        row(params["ln1_g"]), row(params["ln1_b"]), row(params["bo"]),
        row(params["ln2_g"]), row(params["ln2_b"]),
        row(params["b1"]), row(params["b2"]),
        row(jnp.concatenate([params["bq"] * scale, params["bk"], params["bv"]])),
    ])                                                               # (8, Cv)

    # --- weights: transposed, zero-padded, 1/sqrt(D) folded into Wq, cast once
    wqT = _pad_to(params["wq"].T * scale, (Cp, C)).astype(wdt)       # (Cp, C)
    wkvT = _pad_to(jnp.concatenate([params["wk"].T, params["wv"].T], axis=1),
                   (Cp, 2 * C)).astype(wdt)                          # (Cp, 2C)
    woT = _pad_to(params["wo"].T, (C, Cp)).astype(wdt)               # (C, Cp)
    w1T = _pad_to(params["w1"].T, (Cp, Cp)).astype(wdt)
    w2T = _pad_to(params["w2"].T, (Cp, Cp)).astype(wdt)
    consts = [vecs, wqT, wkvT, woT, w1T, w2T]

    Bt = _pick_batch_tile(B, S)
    grid = (B // Bt,)

    # --- VMEM budget / advisory cost estimate --------------------------------
    w_bytes = 2 if use_bf16 else 4
    weight_bytes = vecs.size * 4 + sum(w.size for w in consts[1:]) * w_bytes
    est = (2 * 2 * Bt * S * Cp * 4                      # x in + out (double-buffered)
           + (2 * Bt * Skv * Cp * 4 if has_cond else 0)
           + weight_bytes
           + 8 * Bt * S * Cp * 4                        # f32 intermediates headroom
           + Bt * S * C * 4                             # o_acc scratch
           + 2 * Bt * S * Skv * 4)                      # scores
    vmem_limit = int(min(48 * 2**20, max(32 * 2**20, 2 * est)))

    Mq, Mk = B * S, B * Skv
    flops = 2 * (Mq * Cp * C + Mk * Cp * 2 * C + 2 * B * S * Skv * C
                 + Mq * C * Cp + 2 * Mq * Cp * Cp)
    transcendentals = B * H * S * Skv + Mq * Cp
    bytes_accessed = (x_p.size + (cond_p.size if has_cond else 0)
                      + B * S * Cp) * 4 + weight_bytes

    kernel = functools.partial(cross_attention_kernel, H, C, has_cond, use_bf16)

    def build(single_buffer_weights):
        def const_spec(shape):
            idx = lambda i, _n=len(shape): (0,) * _n
            if single_buffer_weights and hasattr(pl, "Buffered"):
                try:
                    # Constant index_map -> no need to double-buffer weights.
                    return pl.BlockSpec(shape, idx, pipeline_mode=pl.Buffered(1))
                except TypeError:
                    pass
            return pl.BlockSpec(shape, idx)

        io_spec = pl.BlockSpec((Bt, S, Cp), lambda i: (i, 0, 0))
        in_specs = [io_spec]
        if has_cond:
            in_specs.append(pl.BlockSpec((Bt, Skv, Cp), lambda i: (i, 0, 0)))
        in_specs += [const_spec(a.shape) for a in consts]

        return pl.pallas_call(
            kernel,
            out_shape=jax.ShapeDtypeStruct((B, S, Cp), x.dtype),
            grid_spec=pltpu.PrefetchScalarGridSpec(
                num_scalar_prefetch=0,
                grid=grid,
                in_specs=in_specs,
                out_specs=io_spec,
                scratch_shapes=[pltpu.VMEM((Bt * S, C), jnp.float32)],
            ),
            compiler_params=pltpu.CompilerParams(
                dimension_semantics=("parallel",),
                vmem_limit_bytes=vmem_limit),
            cost_estimate=pl.CostEstimate(
                flops=int(flops),
                transcendentals=int(transcendentals),
                bytes_accessed=int(bytes_accessed)),
        )

    arrays = [x_p] + ([cond_p] if has_cond else []) + consts
    try:
        out_p = build(single_buffer_weights=True)(*arrays)
    except Exception:
        # Fallback if this JAX build does not support pipeline_mode=Buffered(1)
        # on pallas_call BlockSpecs; identical semantics, default buffering.
        out_p = build(single_buffer_weights=False)(*arrays)

    return out_p[..., :C]


def reference(x, params, n_heads, cond=None):
    """Pure-JAX f32 reference matching the PyTorch module."""
    def ln(v, g, b):
        m = v.mean(-1, keepdims=True)
        var = ((v - m) ** 2).mean(-1, keepdims=True)
        return (v - m) / jnp.sqrt(var + EPS) * g + b

    x_ln = ln(x, params["ln1_g"], params["ln1_b"])
    c = x_ln if cond is None else cond
    q = x_ln @ params["wq"].T + params["bq"]
    k = c @ params["wk"].T + params["bk"]
    v = c @ params["wv"].T + params["bv"]
    B, S, C = x.shape
    D = C // n_heads
    qh = q.reshape(B, S, n_heads, D).transpose(0, 2, 1, 3)
    kh = k.reshape(B, -1, n_heads, D).transpose(0, 2, 1, 3)
    vh = v.reshape(B, -1, n_heads, D).transpose(0, 2, 1, 3)
    s = jnp.einsum("bhqd,bhkd->bhqk", qh, kh) / jnp.sqrt(jnp.float32(D))
    p = jax.nn.softmax(s, axis=-1)
    o = jnp.einsum("bhqk,bhkd->bhqd", p, vh).transpose(0, 2, 1, 3).reshape(B, S, C)
    o = o @ params["wo"].T + params["bo"]
    y1 = o + x
    z = ln(y1, params["ln2_g"], params["ln2_b"])
    h = jax.nn.gelu(z @ params["w1"].T + params["b1"], approximate=False)
    return h @ params["w2"].T + params["b2"] + y1


def init_params(key, channels):
    C = channels
    keys = jax.random.split(key, 12)
    std = 1.0 / (C ** 0.5)
    return {
        "ln1_g": jnp.ones((C,), jnp.float32),
        "ln1_b": jnp.zeros((C,), jnp.float32),
        "wq": jax.random.normal(keys[0], (C, C), jnp.float32) * std,
        "wk": jax.random.normal(keys[1], (C, C), jnp.float32) * std,
        "wv": jax.random.normal(keys[2], (C, C), jnp.float32) * std,
        "bq": jax.random.normal(keys[3], (C,), jnp.float32) * 0.02,
        "bk": jax.random.normal(keys[4], (C,), jnp.float32) * 0.02,
        "bv": jax.random.normal(keys[5], (C,), jnp.float32) * 0.02,
        "wo": jax.random.normal(keys[6], (C, C), jnp.float32) * std,
        "bo": jax.random.normal(keys[7], (C,), jnp.float32) * 0.02,
        "ln2_g": jnp.ones((C,), jnp.float32),
        "ln2_b": jnp.zeros((C,), jnp.float32),
        "w1": jax.random.normal(keys[8], (C, C), jnp.float32) * std,
        "b1": jax.random.normal(keys[9], (C,), jnp.float32) * 0.02,
        "w2": jax.random.normal(keys[10], (C, C), jnp.float32) * std,
        "b2": jax.random.normal(keys[11], (C,), jnp.float32) * 0.02,
    }


if __name__ == "__main__":
    B, S, C, H = 2, 16, 32, 4      # batch, seq (= w*h = 4*4), channels, heads
    SKV = 8                        # cond sequence length for the cross path

    key = jax.random.PRNGKey(0)
    kx, kc, kp = jax.random.split(key, 3)
    x = jax.random.normal(kx, (B, S, C), jnp.float32)
    cond = jax.random.normal(kc, (B, SKV, C), jnp.float32)
    params = init_params(kp, C)

    for cnd, name in ((None, "self"), (cond, "cross")):
        ref = reference(x, params, H, cond=cnd)

        # Accurate (f32 matmul) path — strict check.
        out_f32 = jax.block_until_ready(
            cross_attention(x, params, H, cond=cnd, use_bf16=False))
        assert out_f32.shape == (B, S, C)
        err = float(jnp.max(jnp.abs(out_f32 - ref)))
        assert jnp.allclose(out_f32, ref, atol=1e-3, rtol=1e-3), (
            f"[{name}/f32] max abs err = {err}")

        # Fast (bf16 MXU, f32 accumulation) path — bf16-level tolerance.
        out_bf16 = jax.block_until_ready(
            cross_attention(x, params, H, cond=cnd, use_bf16=True))
        assert out_bf16.shape == (B, S, C)
        err = float(jnp.max(jnp.abs(out_bf16 - ref)))
        assert jnp.allclose(out_bf16, ref, atol=5e-2, rtol=5e-2), (
            f"[{name}/bf16] max abs err = {err}")

    print("KERNEL_OK")
</pallas_src>

<mosaic_0001>
module attributes {stable_mosaic.version = 11 : i64} {
  func.func @cross_attention_kernel(%arg0: i32, %arg1: memref<1x16x128xf32, #tpu.memory_space<vmem>>, %arg2: memref<8x128xf32, #tpu.memory_space<vmem>>, %arg3: memref<128x32xf32, #tpu.memory_space<vmem>>, %arg4: memref<128x64xf32, #tpu.memory_space<vmem>>, %arg5: memref<32x128xf32, #tpu.memory_space<vmem>>, %arg6: memref<128x128xf32, #tpu.memory_space<vmem>>, %arg7: memref<128x128xf32, #tpu.memory_space<vmem>>, %arg8: memref<1x16x128xf32, #tpu.memory_space<vmem>>, %arg9: memref<16x32xf32, #tpu.memory_space<vmem>>) attributes {dimension_semantics = [#tpu.dimension_semantics<parallel>], iteration_bounds = array<i64: 2>, scalar_prefetch = 0 : i64, scratch_operands = 1 : i64, tpu.core_type = #tpu.core_type<tc>, window_params = [{transform_indices = @transform_0, window_bounds = array<i64: 1, 16, 128>}, {pipeline_mode = #tpu.pipeline_mode<synchronous>, transform_indices = @transform_1, window_bounds = array<i64: 8, 128>}, {pipeline_mode = #tpu.pipeline_mode<synchronous>, transform_indices = @transform_2, window_bounds = array<i64: 128, 32>}, {pipeline_mode = #tpu.pipeline_mode<synchronous>, transform_indices = @transform_3, window_bounds = array<i64: 128, 64>}, {pipeline_mode = #tpu.pipeline_mode<synchronous>, transform_indices = @transform_4, window_bounds = array<i64: 32, 128>}, {pipeline_mode = #tpu.pipeline_mode<synchronous>, transform_indices = @transform_5, window_bounds = array<i64: 128, 128>}, {pipeline_mode = #tpu.pipeline_mode<synchronous>, transform_indices = @transform_6, window_bounds = array<i64: 128, 128>}, {transform_indices = @transform_7, window_bounds = array<i64: 1, 16, 128>}]} {
    %c0 = arith.constant 0 : index
    %c0_0 = arith.constant 0 : index
    %0 = vector.load %arg2[%c0, %c0_0] : memref<8x128xf32, #tpu.memory_space<vmem>>, vector<8x128xf32>
    %1 = vector.extract_strided_slice %0 {offsets = [0, 0], sizes = [1, 128], strides = [1, 1]} : vector<8x128xf32> to vector<1x128xf32>
    %2 = vector.extract_strided_slice %0 {offsets = [1, 0], sizes = [1, 128], strides = [1, 1]} : vector<8x128xf32> to vector<1x128xf32>
    %3 = vector.extract_strided_slice %0 {offsets = [2, 0], sizes = [1, 128], strides = [1, 1]} : vector<8x128xf32> to vector<1x128xf32>
    %4 = vector.extract_strided_slice %0 {offsets = [3, 0], sizes = [1, 128], strides = [1, 1]} : vector<8x128xf32> to vector<1x128xf32>
    %5 = vector.extract_strided_slice %0 {offsets = [4, 0], sizes = [1, 128], strides = [1, 1]} : vector<8x128xf32> to vector<1x128xf32>
    %6 = vector.extract_strided_slice %0 {offsets = [5, 0], sizes = [1, 128], strides = [1, 1]} : vector<8x128xf32> to vector<1x128xf32>
    %7 = vector.extract_strided_slice %0 {offsets = [6, 0], sizes = [1, 128], strides = [1, 1]} : vector<8x128xf32> to vector<1x128xf32>
    %8 = vector.extract_strided_slice %0 {offsets = [7, 0], sizes = [1, 32], strides = [1, 1]} : vector<8x128xf32> to vector<1x32xf32>
    %9 = vector.extract_strided_slice %0 {offsets = [7, 32], sizes = [1, 64], strides = [1, 1]} : vector<8x128xf32> to vector<1x64xf32>
    %c0_1 = arith.constant 0 : index
    %c0_2 = arith.constant 0 : index
    %c0_3 = arith.constant 0 : index
    %10 = vector.load %arg1[%c0_1, %c0_2, %c0_3] : memref<1x16x128xf32, #tpu.memory_space<vmem>>, vector<1x16x128xf32>
    %11 = vector.shape_cast %10 : vector<1x16x128xf32> to vector<16x128xf32>
    %cst = arith.constant dense<0.000000e+00> : vector<16xf32>
    %12 = vector.multi_reduction <add>, %11, %cst [1] : vector<16x128xf32> to vector<16xf32>
    %13 = vector.shape_cast %12 : vector<16xf32> to vector<16x1xf32>
    %cst_4 = arith.constant 3.125000e-02 : f32
    %14 = vector.broadcast %cst_4 : f32 to vector<16x1xf32>
    %15 = arith.mulf %13, %14 : vector<16x1xf32>
    %16 = arith.mulf %11, %11 : vector<16x128xf32>
    %cst_5 = arith.constant dense<0.000000e+00> : vector<16xf32>
    %17 = vector.multi_reduction <add>, %16, %cst_5 [1] : vector<16x128xf32> to vector<16xf32>
    %18 = vector.shape_cast %17 : vector<16xf32> to vector<16x1xf32>
    %cst_6 = arith.constant 3.125000e-02 : f32
    %19 = vector.broadcast %cst_6 : f32 to vector<16x1xf32>
    %20 = arith.mulf %18, %19 : vector<16x1xf32>
    %21 = arith.mulf %15, %15 : vector<16x1xf32>
    %22 = arith.subf %20, %21 : vector<16x1xf32>
    %23 = vector.broadcast %15 : vector<16x1xf32> to vector<16x128xf32>
    %24 = arith.subf %11, %23 : vector<16x128xf32>
    %cst_7 = arith.constant 9.99999974E-6 : f32
    %25 = vector.broadcast %cst_7 : f32 to vector<16x1xf32>
    %26 = arith.addf %22, %25 : vector<16x1xf32>
    %27 = math.rsqrt %26 : vector<16x1xf32>
    %28 = vector.broadcast %27 : vector<16x1xf32> to vector<16x128xf32>
    %29 = arith.mulf %24, %28 : vector<16x128xf32>
    %30 = vector.broadcast %1 : vector<1x128xf32> to vector<16x128xf32>
    %31 = arith.mulf %29, %30 : vector<16x128xf32>
    %32 = vector.broadcast %2 : vector<1x128xf32> to vector<16x128xf32>
    %33 = arith.addf %31, %32 : vector<16x128xf32>
    %c0_8 = arith.constant 0 : index
    %c0_9 = arith.constant 0 : index
    %34 = vector.load %arg3[%c0_8, %c0_9] : memref<128x32xf32, #tpu.memory_space<vmem>>, vector<128x32xf32>
    %cst_10 = arith.constant dense<0.000000e+00> : vector<16x32xf32>
    %35 = tpu.matmul %33, %34, %cst_10 {dimension_numbers = #tpu.dot_dimension_numbers<[1], [0], [0], [1], [0, 0, 1, 1], [], []>} : vector<16x128xf32>, vector<128x32xf32>, vector<16x32xf32> -> vector<16x32xf32>
    %36 = vector.broadcast %8 : vector<1x32xf32> to vector<16x32xf32>
    %37 = arith.addf %35, %36 : vector<16x32xf32>
    %c0_11 = arith.constant 0 : index
    %c0_12 = arith.constant 0 : index
    %38 = vector.load %arg4[%c0_11, %c0_12] : memref<128x64xf32, #tpu.memory_space<vmem>>, vector<128x64xf32>
    %cst_13 = arith.constant dense<0.000000e+00> : vector<16x64xf32>
    %39 = tpu.matmul %33, %38, %cst_13 {dimension_numbers = #tpu.dot_dimension_numbers<[1], [0], [0], [1], [0, 0, 1, 1], [], []>} : vector<16x128xf32>, vector<128x64xf32>, vector<16x64xf32> -> vector<16x64xf32>
    %40 = vector.broadcast %9 : vector<1x64xf32> to vector<16x64xf32>
    %41 = arith.addf %39, %40 : vector<16x64xf32>
    %42 = vector.extract_strided_slice %37 {offsets = [0, 0], sizes = [16, 8], strides = [1, 1]} : vector<16x32xf32> to vector<16x8xf32>
    %43 = vector.shape_cast %42 : vector<16x8xf32> to vector<1x16x8xf32>
    %44 = vector.extract_strided_slice %41 {offsets = [0, 0], sizes = [16, 8], strides = [1, 1]} : vector<16x64xf32> to vector<16x8xf32>
    %45 = vector.shape_cast %44 : vector<16x8xf32> to vector<1x16x8xf32>
    %46 = vector.extract_strided_slice %41 {offsets = [0, 32], sizes = [16, 8], strides = [1, 1]} : vector<16x64xf32> to vector<16x8xf32>
    %47 = vector.shape_cast %46 : vector<16x8xf32> to vector<1x16x8xf32>
    "tpu.trace_start"() <{level = 10 : i32, message = "bqd,bkd->bqk"}> : () -> ()
    %cst_14 = arith.constant dense<0.000000e+00> : vector<1x16x16xf32>
    %48 = tpu.matmul %43, %45, %cst_14 {dimension_numbers = #tpu.dot_dimension_numbers<[2], [2], [1], [1], [0, 0, 0, 1, 1, 1], [0], [0]>} : vector<1x16x8xf32>, vector<1x16x8xf32>, vector<1x16x16xf32> -> vector<1x16x16xf32>
    "tpu.trace_stop"() : () -> ()
    %cst_15 = arith.constant dense<0xFF800000> : vector<1x16xf32>
    %49 = vector.multi_reduction <maximumf>, %48, %cst_15 [2] : vector<1x16x16xf32> to vector<1x16xf32>
    %50 = vector.shape_cast %49 : vector<1x16xf32> to vector<1x16x1xf32>
    %51 = vector.broadcast %50 : vector<1x16x1xf32> to vector<1x16x16xf32>
    %52 = arith.subf %48, %51 : vector<1x16x16xf32>
    %53 = math.exp %52 : vector<1x16x16xf32>
    %cst_16 = arith.constant dense<0.000000e+00> : vector<1x16xf32>
    %54 = vector.multi_reduction <add>, %53, %cst_16 [2] : vector<1x16x16xf32> to vector<1x16xf32>
    %55 = vector.shape_cast %54 : vector<1x16xf32> to vector<1x16x1xf32>
    %56 = tpu.reciprocal %55 : vector<1x16x1xf32> -> vector<1x16x1xf32>
    %57 = vector.broadcast %56 : vector<1x16x1xf32> to vector<1x16x16xf32>
    %58 = arith.mulf %53, %57 : vector<1x16x16xf32>
    "tpu.trace_start"() <{level = 10 : i32, message = "bqk,bkd->bqd"}> : () -> ()
    %cst_17 = arith.constant dense<0.000000e+00> : vector<1x16x8xf32>
    %59 = tpu.matmul %58, %47, %cst_17 {dimension_numbers = #tpu.dot_dimension_numbers<[2], [1], [1], [2], [0, 0, 0, 1, 1, 2], [0], [0]>} : vector<1x16x16xf32>, vector<1x16x8xf32>, vector<1x16x8xf32> -> vector<1x16x8xf32>
    "tpu.trace_stop"() : () -> ()
    %60 = vector.shape_cast %59 : vector<1x16x8xf32> to vector<16x8xf32>
    %c0_18 = arith.constant 0 : index
    %c0_19 = arith.constant 0 : index
    %61 = vector.load %arg9[%c0_18, %c0_19] : memref<16x32xf32, #tpu.memory_space<vmem>>, vector<16x8xf32>
    tpu.vector_store %arg9[%c0_18, %c0_19], %60 {strides = array<i32>} : memref<16x32xf32, #tpu.memory_space<vmem>>, vector<16x8xf32>,
    %62 = vector.extract_strided_slice %37 {offsets = [0, 8], sizes = [16, 8], strides = [1, 1]} : vector<16x32xf32> to vector<16x8xf32>
    %63 = vector.shape_cast %62 : vector<16x8xf32> to vector<1x16x8xf32>
    %64 = vector.extract_strided_slice %41 {offsets = [0, 8], sizes = [16, 8], strides = [1, 1]} : vector<16x64xf32> to vector<16x8xf32>
    %65 = vector.shape_cast %64 : vector<16x8xf32> to vector<1x16x8xf32>
    %66 = vector.extract_strided_slice %41 {offsets = [0, 40], sizes = [16, 8], strides = [1, 1]} : vector<16x64xf32> to vector<16x8xf32>
    %67 = vector.shape_cast %66 : vector<16x8xf32> to vector<1x16x8xf32>
    "tpu.trace_start"() <{level = 10 : i32, message = "bqd,bkd->bqk"}> : () -> ()
    %cst_20 = arith.constant dense<0.000000e+00> : vector<1x16x16xf32>
    %68 = tpu.matmul %63, %65, %cst_20 {dimension_numbers = #tpu.dot_dimension_numbers<[2], [2], [1], [1], [0, 0, 0, 1, 1, 1], [0], [0]>} : vector<1x16x8xf32>, vector<1x16x8xf32>, vector<1x16x16xf32> -> vector<1x16x16xf32>
    "tpu.trace_stop"() : () -> ()
    %cst_21 = arith.constant dense<0xFF800000> : vector<1x16xf32>
    %69 = vector.multi_reduction <maximumf>, %68, %cst_21 [2] : vector<1x16x16xf32> to vector<1x16xf32>
    %70 = vector.shape_cast %69 : vector<1x16xf32> to vector<1x16x1xf32>
    %71 = vector.broadcast %70 : vector<1x16x1xf32> to vector<1x16x16xf32>
    %72 = arith.subf %68, %71 : vector<1x16x16xf32>
    %73 = math.exp %72 : vector<1x16x16xf32>
    %cst_22 = arith.constant dense<0.000000e+00> : vector<1x16xf32>
    %74 = vector.multi_reduction <add>, %73, %cst_22 [2] : vector<1x16x16xf32> to vector<1x16xf32>
    %75 = vector.shape_cast %74 : vector<1x16xf32> to vector<1x16x1xf32>
    %76 = tpu.reciprocal %75 : vector<1x16x1xf32> -> vector<1x16x1xf32>
    %77 = vector.broadcast %76 : vector<1x16x1xf32> to vector<1x16x16xf32>
    %78 = arith.mulf %73, %77 : vector<1x16x16xf32>
    "tpu.trace_start"() <{level = 10 : i32, message = "bqk,bkd->bqd"}> : () -> ()
    %cst_23 = arith.constant dense<0.000000e+00> : vector<1x16x8xf32>
    %79 = tpu.matmul %78, %67, %cst_23 {dimension_numbers = #tpu.dot_dimension_numbers<[2], [1], [1], [2], [0, 0, 0, 1, 1, 2], [0], [0]>} : vector<1x16x16xf32>, vector<1x16x8xf32>, vector<1x16x8xf32> -> vector<1x16x8xf32>
    "tpu.trace_stop"() : () -> ()
    %80 = vector.shape_cast %79 : vector<1x16x8xf32> to vector<16x8xf32>
    %c0_24 = arith.constant 0 : index
    %c8 = arith.constant 8 : index
    %81 = vector.load %arg9[%c0_24, %c8] : memref<16x32xf32, #tpu.memory_space<vmem>>, vector<16x8xf32>
    tpu.vector_store %arg9[%c0_24, %c8], %80 {strides = array<i32>} : memref<16x32xf32, #tpu.memory_space<vmem>>, vector<16x8xf32>,
    %82 = vector.extract_strided_slice %37 {offsets = [0, 16], sizes = [16, 8], strides = [1, 1]} : vector<16x32xf32> to vector<16x8xf32>
    %83 = vector.shape_cast %82 : vector<16x8xf32> to vector<1x16x8xf32>
    %84 = vector.extract_strided_slice %41 {offsets = [0, 16], sizes = [16, 8], strides = [1, 1]} : vector<16x64xf32> to vector<16x8xf32>
    %85 = vector.shape_cast %84 : vector<16x8xf32> to vector<1x16x8xf32>
    %86 = vector.extract_strided_slice %41 {offsets = [0, 48], sizes = [16, 8], strides = [1, 1]} : vector<16x64xf32> to vector<16x8xf32>
    %87 = vector.shape_cast %86 : vector<16x8xf32> to vector<1x16x8xf32>
    "tpu.trace_start"() <{level = 10 : i32, message = "bqd,bkd->bqk"}> : () -> ()
    %cst_25 = arith.constant dense<0.000000e+00> : vector<1x16x16xf32>
    %88 = tpu.matmul %83, %85, %cst_25 {dimension_numbers = #tpu.dot_dimension_numbers<[2], [2], [1], [1], [0, 0, 0, 1, 1, 1], [0], [0]>} : vector<1x16x8xf32>, vector<1x16x8xf32>, vector<1x16x16xf32> -> vector<1x16x16xf32>
    "tpu.trace_stop"() : () -> ()
    %cst_26 = arith.constant dense<0xFF800000> : vector<1x16xf32>
    %89 = vector.multi_reduction <maximumf>, %88, %cst_26 [2] : vector<1x16x16xf32> to vector<1x16xf32>
    %90 = vector.shape_cast %89 : vector<1x16xf32> to vector<1x16x1xf32>
    %91 = vector.broadcast %90 : vector<1x16x1xf32> to vector<1x16x16xf32>
    %92 = arith.subf %88, %91 : vector<1x16x16xf32>
    %93 = math.exp %92 : vector<1x16x16xf32>
    %cst_27 = arith.constant dense<0.000000e+00> : vector<1x16xf32>
    %94 = vector.multi_reduction <add>, %93, %cst_27 [2] : vector<1x16x16xf32> to vector<1x16xf32>
    %95 = vector.shape_cast %94 : vector<1x16xf32> to vector<1x16x1xf32>
    %96 = tpu.reciprocal %95 : vector<1x16x1xf32> -> vector<1x16x1xf32>
    %97 = vector.broadcast %96 : vector<1x16x1xf32> to vector<1x16x16xf32>
    %98 = arith.mulf %93, %97 : vector<1x16x16xf32>
    "tpu.trace_start"() <{level = 10 : i32, message = "bqk,bkd->bqd"}> : () -> ()
    %cst_28 = arith.constant dense<0.000000e+00> : vector<1x16x8xf32>
    %99 = tpu.matmul %98, %87, %cst_28 {dimension_numbers = #tpu.dot_dimension_numbers<[2], [1], [1], [2], [0, 0, 0, 1, 1, 2], [0], [0]>} : vector<1x16x16xf32>, vector<1x16x8xf32>, vector<1x16x8xf32> -> vector<1x16x8xf32>
    "tpu.trace_stop"() : () -> ()
    %100 = vector.shape_cast %99 : vector<1x16x8xf32> to vector<16x8xf32>
    %c0_29 = arith.constant 0 : index
    %c16 = arith.constant 16 : index
    %101 = vector.load %arg9[%c0_29, %c16] : memref<16x32xf32, #tpu.memory_space<vmem>>, vector<16x8xf32>
    tpu.vector_store %arg9[%c0_29, %c16], %100 {strides = array<i32>} : memref<16x32xf32, #tpu.memory_space<vmem>>, vector<16x8xf32>,
    %102 = vector.extract_strided_slice %37 {offsets = [0, 24], sizes = [16, 8], strides = [1, 1]} : vector<16x32xf32> to vector<16x8xf32>
    %103 = vector.shape_cast %102 : vector<16x8xf32> to vector<1x16x8xf32>
    %104 = vector.extract_strided_slice %41 {offsets = [0, 24], sizes = [16, 8], strides = [1, 1]} : vector<16x64xf32> to vector<16x8xf32>
    %105 = vector.shape_cast %104 : vector<16x8xf32> to vector<1x16x8xf32>
    %106 = vector.extract_strided_slice %41 {offsets = [0, 56], sizes = [16, 8], strides = [1, 1]} : vector<16x64xf32> to vector<16x8xf32>
    %107 = vector.shape_cast %106 : vector<16x8xf32> to vector<1x16x8xf32>
    "tpu.trace_start"() <{level = 10 : i32, message = "bqd,bkd->bqk"}> : () -> ()
    %cst_30 = arith.constant dense<0.000000e+00> : vector<1x16x16xf32>
    %108 = tpu.matmul %103, %105, %cst_30 {dimension_numbers = #tpu.dot_dimension_numbers<[2], [2], [1], [1], [0, 0, 0, 1, 1, 1], [0], [0]>} : vector<1x16x8xf32>, vector<1x16x8xf32>, vector<1x16x16xf32> -> vector<1x16x16xf32>
    "tpu.trace_stop"() : () -> ()
    %cst_31 = arith.constant dense<0xFF800000> : vector<1x16xf32>
    %109 = vector.multi_reduction <maximumf>, %108, %cst_31 [2] : vector<1x16x16xf32> to vector<1x16xf32>
    %110 = vector.shape_cast %109 : vector<1x16xf32> to vector<1x16x1xf32>
    %111 = vector.broadcast %110 : vector<1x16x1xf32> to vector<1x16x16xf32>
    %112 = arith.subf %108, %111 : vector<1x16x16xf32>
    %113 = math.exp %112 : vector<1x16x16xf32>
    %cst_32 = arith.constant dense<0.000000e+00> : vector<1x16xf32>
    %114 = vector.multi_reduction <add>, %113, %cst_32 [2] : vector<1x16x16xf32> to vector<1x16xf32>
    %115 = vector.shape_cast %114 : vector<1x16xf32> to vector<1x16x1xf32>
    %116 = tpu.reciprocal %115 : vector<1x16x1xf32> -> vector<1x16x1xf32>
    %117 = vector.broadcast %116 : vector<1x16x1xf32> to vector<1x16x16xf32>
    %118 = arith.mulf %113, %117 : vector<1x16x16xf32>
    "tpu.trace_start"() <{level = 10 : i32, message = "bqk,bkd->bqd"}> : () -> ()
    %cst_33 = arith.constant dense<0.000000e+00> : vector<1x16x8xf32>
    %119 = tpu.matmul %118, %107, %cst_33 {dimension_numbers = #tpu.dot_dimension_numbers<[2], [1], [1], [2], [0, 0, 0, 1, 1, 2], [0], [0]>} : vector<1x16x16xf32>, vector<1x16x8xf32>, vector<1x16x8xf32> -> vector<1x16x8xf32>
    "tpu.trace_stop"() : () -> ()
    %120 = vector.shape_cast %119 : vector<1x16x8xf32> to vector<16x8xf32>
    %c0_34 = arith.constant 0 : index
    %c24 = arith.constant 24 : index
    %121 = vector.load %arg9[%c0_34, %c24] : memref<16x32xf32, #tpu.memory_space<vmem>>, vector<16x8xf32>
    tpu.vector_store %arg9[%c0_34, %c24], %120 {strides = array<i32>} : memref<16x32xf32, #tpu.memory_space<vmem>>, vector<16x8xf32>,
    %c0_35 = arith.constant 0 : index
    %c0_36 = arith.constant 0 : index
    %122 = vector.load %arg9[%c0_35, %c0_36] : memref<16x32xf32, #tpu.memory_space<vmem>>, vector<16x32xf32>
    %c0_37 = arith.constant 0 : index
    %c0_38 = arith.constant 0 : index
    %123 = vector.load %arg5[%c0_37, %c0_38] : memref<32x128xf32, #tpu.memory_space<vmem>>, vector<32x128xf32>
    %cst_39 = arith.constant dense<0.000000e+00> : vector<16x128xf32>
    %124 = tpu.matmul %122, %123, %cst_39 {dimension_numbers = #tpu.dot_dimension_numbers<[1], [0], [0], [1], [0, 0, 1, 1], [], []>} : vector<16x32xf32>, vector<32x128xf32>, vector<16x128xf32> -> vector<16x128xf32>
    %125 = vector.broadcast %3 : vector<1x128xf32> to vector<16x128xf32>
    %126 = arith.addf %124, %125 : vector<16x128xf32>
    %127 = arith.addf %126, %11 : vector<16x128xf32>
    %cst_40 = arith.constant dense<0.000000e+00> : vector<16xf32>
    %128 = vector.multi_reduction <add>, %127, %cst_40 [1] : vector<16x128xf32> to vector<16xf32>
    %129 = vector.shape_cast %128 : vector<16xf32> to vector<16x1xf32>
    %cst_41 = arith.constant 3.125000e-02 : f32
    %130 = vector.broadcast %cst_41 : f32 to vector<16x1xf32>
    %131 = arith.mulf %129, %130 : vector<16x1xf32>
    %132 = arith.mulf %127, %127 : vector<16x128xf32>
    %cst_42 = arith.constant dense<0.000000e+00> : vector<16xf32>
    %133 = vector.multi_reduction <add>, %132, %cst_42 [1] : vector<16x128xf32> to vector<16xf32>
    %134 = vector.shape_cast %133 : vector<16xf32> to vector<16x1xf32>
    %cst_43 = arith.constant 3.125000e-02 : f32
    %135 = vector.broadcast %cst_43 : f32 to vector<16x1xf32>
    %136 = arith.mulf %134, %135 : vector<16x1xf32>
    %137 = arith.mulf %131, %131 : vector<16x1xf32>
    %138 = arith.subf %136, %137 : vector<16x1xf32>
    %139 = vector.broadcast %131 : vector<16x1xf32> to vector<16x128xf32>
    %140 = arith.subf %127, %139 : vector<16x128xf32>
    %cst_44 = arith.constant 9.99999974E-6 : f32
    %141 = vector.broadcast %cst_44 : f32 to vector<16x1xf32>
    %142 = arith.addf %138, %141 : vector<16x1xf32>
    %143 = math.rsqrt %142 : vector<16x1xf32>
    %144 = vector.broadcast %143 : vector<16x1xf32> to vector<16x128xf32>
    %145 = arith.mulf %140, %144 : vector<16x128xf32>
    %146 = vector.broadcast %4 : vector<1x128xf32> to vector<16x128xf32>
    %147 = arith.mulf %145, %146 : vector<16x128xf32>
    %148 = vector.broadcast %5 : vector<1x128xf32> to vector<16x128xf32>
    %149 = arith.addf %147, %148 : vector<16x128xf32>
    %c0_45 = arith.constant 0 : index
    %c0_46 = arith.constant 0 : index
    %150 = vector.load %arg6[%c0_45, %c0_46] : memref<128x128xf32, #tpu.memory_space<vmem>>, vector<128x128xf32>
    %cst_47 = arith.constant dense<0.000000e+00> : vector<16x128xf32>
    %151 = tpu.matmul %149, %150, %cst_47 {dimension_numbers = #tpu.dot_dimension_numbers<[1], [0], [0], [1], [0, 0, 1, 1], [], []>} : vector<16x128xf32>, vector<128x128xf32>, vector<16x128xf32> -> vector<16x128xf32>
    %152 = vector.broadcast %6 : vector<1x128xf32> to vector<16x128xf32>
    %153 = arith.addf %151, %152 : vector<16x128xf32>
    %cst_48 = arith.constant 5.000000e-01 : f32
    %154 = vector.broadcast %cst_48 : f32 to vector<16x128xf32>
    %155 = arith.mulf %154, %153 : vector<16x128xf32>
    %cst_49 = arith.constant 0.707106769 : f32
    %156 = vector.broadcast %cst_49 : f32 to vector<16x128xf32>
    %157 = arith.mulf %153, %156 : vector<16x128xf32>
    %158 = math.erf %157 : vector<16x128xf32>
    %cst_50 = arith.constant 1.000000e+00 : f32
    %159 = vector.broadcast %cst_50 : f32 to vector<16x128xf32>
    %160 = arith.addf %159, %158 : vector<16x128xf32>
    %161 = arith.mulf %155, %160 : vector<16x128xf32>
    %c0_51 = arith.constant 0 : index
    %c0_52 = arith.constant 0 : index
    %162 = vector.load %arg7[%c0_51, %c0_52] : memref<128x128xf32, #tpu.memory_space<vmem>>, vector<128x128xf32>
    %cst_53 = arith.constant dense<0.000000e+00> : vector<16x128xf32>
    %163 = tpu.matmul %161, %162, %cst_53 {dimension_numbers = #tpu.dot_dimension_numbers<[1], [0], [0], [1], [0, 0, 1, 1], [], []>} : vector<16x128xf32>, vector<128x128xf32>, vector<16x128xf32> -> vector<16x128xf32>
    %164 = vector.broadcast %7 : vector<1x128xf32> to vector<16x128xf32>
    %165 = arith.addf %163, %164 : vector<16x128xf32>
    %166 = arith.addf %165, %127 : vector<16x128xf32>
    %167 = vector.shape_cast %166 : vector<16x128xf32> to vector<1x16x128xf32>
    %c0_54 = arith.constant 0 : index
    %c0_55 = arith.constant 0 : index
    %c0_56 = arith.constant 0 : index
    %168 = vector.load %arg8[%c0_54, %c0_55, %c0_56] : memref<1x16x128xf32, #tpu.memory_space<vmem>>, vector<1x16x128xf32>
    tpu.vector_store %arg8[%c0_54, %c0_55, %c0_56], %167 {strides = array<i32>} : memref<1x16x128xf32, #tpu.memory_space<vmem>>, vector<1x16x128xf32>,
    return
  }
  func.func @transform_0(%arg0: i32) -> (i32, i32, i32) {
    %c0_i32 = arith.constant 0 : i32
    %c0_i32_0 = arith.constant 0 : i32
    %c0_i32_1 = arith.constant 0 : i32
    return %arg0, %c0_i32, %c0_i32_0 : i32, i32, i32
  }
  func.func @transform_1(%arg0: i32) -> (i32, i32) {
    %c0_i32 = arith.constant 0 : i32
    %c0_i32_0 = arith.constant 0 : i32
    %c0_i32_1 = arith.constant 0 : i32
    return %c0_i32, %c0_i32_0 : i32, i32
  }
  func.func @transform_2(%arg0: i32) -> (i32, i32) {
    %c0_i32 = arith.constant 0 : i32
    %c0_i32_0 = arith.constant 0 : i32
    %c0_i32_1 = arith.constant 0 : i32
    return %c0_i32, %c0_i32_0 : i32, i32
  }
  func.func @transform_3(%arg0: i32) -> (i32, i32) {
    %c0_i32 = arith.constant 0 : i32
    %c0_i32_0 = arith.constant 0 : i32
    %c0_i32_1 = arith.constant 0 : i32
    return %c0_i32, %c0_i32_0 : i32, i32
  }
  func.func @transform_4(%arg0: i32) -> (i32, i32) {
    %c0_i32 = arith.constant 0 : i32
    %c0_i32_0 = arith.constant 0 : i32
    %c0_i32_1 = arith.constant 0 : i32
    return %c0_i32, %c0_i32_0 : i32, i32
  }
  func.func @transform_5(%arg0: i32) -> (i32, i32) {
    %c0_i32 = arith.constant 0 : i32
    %c0_i32_0 = arith.constant 0 : i32
    %c0_i32_1 = arith.constant 0 : i32
    return %c0_i32, %c0_i32_0 : i32, i32
  }
  func.func @transform_6(%arg0: i32) -> (i32, i32) {
    %c0_i32 = arith.constant 0 : i32
    %c0_i32_0 = arith.constant 0 : i32
    %c0_i32_1 = arith.constant 0 : i32
    return %c0_i32, %c0_i32_0 : i32, i32
  }
  func.func @transform_7(%arg0: i32) -> (i32, i32, i32) {
    %c0_i32 = arith.constant 0 : i32
    %c0_i32_0 = arith.constant 0 : i32
    %c0_i32_1 = arith.constant 0 : i32
    return %arg0, %c0_i32, %c0_i32_0 : i32, i32, i32
  }
}

module attributes {stable_mosaic.version = 11 : i64} {
  func.func @cross_attention_kernel(%arg0: i32, %arg1: memref<1x16x128xf32, #tpu.memory_space<vmem>>, %arg2: memref<8x128xf32, #tpu.memory_space<vmem>>, %arg3: memref<128x32xf32, #tpu.memory_space<vmem>>, %arg4: memref<128x64xf32, #tpu.memory_space<vmem>>, %arg5: memref<32x128xf32, #tpu.memory_space<vmem>>, %arg6: memref<128x128xf32, #tpu.memory_space<vmem>>, %arg7: memref<128x128xf32, #tpu.memory_space<vmem>>, %arg8: memref<1x16x128xf32, #tpu.memory_space<vmem>>, %arg9: memref<16x32xf32, #tpu.memory_space<vmem>>) attributes {dimension_semantics = [#tpu.dimension_semantics<parallel>], iteration_bounds = array<i64: 2>, scalar_prefetch = 0 : i64, scratch_operands = 1 : i64, tpu.core_type = #tpu.core_type<tc>, window_params = [{transform_indices = @transform_0, window_bounds = array<i64: 1, 16, 128>}, {pipeline_mode = #tpu.pipeline_mode<synchronous>, transform_indices = @transform_1, window_bounds = array<i64: 8, 128>}, {pipeline_mode = #tpu.pipeline_mode<synchronous>, transform_indices = @transform_2, window_bounds = array<i64: 128, 32>}, {pipeline_mode = #tpu.pipeline_mode<synchronous>, transform_indices = @transform_3, window_bounds = array<i64: 128, 64>}, {pipeline_mode = #tpu.pipeline_mode<synchronous>, transform_indices = @transform_4, window_bounds = array<i64: 32, 128>}, {pipeline_mode = #tpu.pipeline_mode<synchronous>, transform_indices = @transform_5, window_bounds = array<i64: 128, 128>}, {pipeline_mode = #tpu.pipeline_mode<synchronous>, transform_indices = @transform_6, window_bounds = array<i64: 128, 128>}, {transform_indices = @transform_7, window_bounds = array<i64: 1, 16, 128>}]} {
    %c0 = arith.constant 0 : index
    %c0_0 = arith.constant 0 : index
    %0 = vector.load %arg2[%c0, %c0_0] : memref<8x128xf32, #tpu.memory_space<vmem>>, vector<8x128xf32>
    %1 = vector.extract_strided_slice %0 {offsets = [0, 0], sizes = [1, 128], strides = [1, 1]} : vector<8x128xf32> to vector<1x128xf32>
    %2 = vector.extract_strided_slice %0 {offsets = [1, 0], sizes = [1, 128], strides = [1, 1]} : vector<8x128xf32> to vector<1x128xf32>
    %3 = vector.extract_strided_slice %0 {offsets = [2, 0], sizes = [1, 128], strides = [1, 1]} : vector<8x128xf32> to vector<1x128xf32>
    %4 = vector.extract_strided_slice %0 {offsets = [3, 0], sizes = [1, 128], strides = [1, 1]} : vector<8x128xf32> to vector<1x128xf32>
    %5 = vector.extract_strided_slice %0 {offsets = [4, 0], sizes = [1, 128], strides = [1, 1]} : vector<8x128xf32> to vector<1x128xf32>
    %6 = vector.extract_strided_slice %0 {offsets = [5, 0], sizes = [1, 128], strides = [1, 1]} : vector<8x128xf32> to vector<1x128xf32>
    %7 = vector.extract_strided_slice %0 {offsets = [6, 0], sizes = [1, 128], strides = [1, 1]} : vector<8x128xf32> to vector<1x128xf32>
    %8 = vector.extract_strided_slice %0 {offsets = [7, 0], sizes = [1, 32], strides = [1, 1]} : vector<8x128xf32> to vector<1x32xf32>
    %9 = vector.extract_strided_slice %0 {offsets = [7, 32], sizes = [1, 64], strides = [1, 1]} : vector<8x128xf32> to vector<1x64xf32>
    %c0_1 = arith.constant 0 : index
    %c0_2 = arith.constant 0 : index
    %c0_3 = arith.constant 0 : index
    %10 = vector.load %arg1[%c0_1, %c0_2, %c0_3] : memref<1x16x128xf32, #tpu.memory_space<vmem>>, vector<1x16x128xf32>
    %11 = vector.shape_cast %10 : vector<1x16x128xf32> to vector<16x128xf32>
    %cst = arith.constant dense<0.000000e+00> : vector<16xf32>
    %12 = vector.multi_reduction <add>, %11, %cst [1] : vector<16x128xf32> to vector<16xf32>
    %13 = vector.shape_cast %12 : vector<16xf32> to vector<16x1xf32>
    %cst_4 = arith.constant 3.125000e-02 : f32
    %14 = vector.broadcast %cst_4 : f32 to vector<16x1xf32>
    %15 = arith.mulf %13, %14 : vector<16x1xf32>
    %16 = arith.mulf %11, %11 : vector<16x128xf32>
    %cst_5 = arith.constant dense<0.000000e+00> : vector<16xf32>
    %17 = vector.multi_reduction <add>, %16, %cst_5 [1] : vector<16x128xf32> to vector<16xf32>
    %18 = vector.shape_cast %17 : vector<16xf32> to vector<16x1xf32>
    %cst_6 = arith.constant 3.125000e-02 : f32
    %19 = vector.broadcast %cst_6 : f32 to vector<16x1xf32>
    %20 = arith.mulf %18, %19 : vector<16x1xf32>
    %21 = arith.mulf %15, %15 : vector<16x1xf32>
    %22 = arith.subf %20, %21 : vector<16x1xf32>
    %23 = vector.broadcast %15 : vector<16x1xf32> to vector<16x128xf32>
    %24 = arith.subf %11, %23 : vector<16x128xf32>
    %cst_7 = arith.constant 9.99999974E-6 : f32
    %25 = vector.broadcast %cst_7 : f32 to vector<16x1xf32>
    %26 = arith.addf %22, %25 : vector<16x1xf32>
    %27 = math.rsqrt %26 : vector<16x1xf32>
    %28 = vector.broadcast %27 : vector<16x1xf32> to vector<16x128xf32>
    %29 = arith.mulf %24, %28 : vector<16x128xf32>
    %30 = vector.broadcast %1 : vector<1x128xf32> to vector<16x128xf32>
    %31 = arith.mulf %29, %30 : vector<16x128xf32>
    %32 = vector.broadcast %2 : vector<1x128xf32> to vector<16x128xf32>
    %33 = arith.addf %31, %32 : vector<16x128xf32>
    %c0_8 = arith.constant 0 : index
    %c0_9 = arith.constant 0 : index
    %34 = vector.load %arg3[%c0_8, %c0_9] : memref<128x32xf32, #tpu.memory_space<vmem>>, vector<128x32xf32>
    %cst_10 = arith.constant dense<0.000000e+00> : vector<16x32xf32>
    %35 = tpu.matmul %33, %34, %cst_10 {dimension_numbers = #tpu.dot_dimension_numbers<[1], [0], [0], [1], [0, 0, 1, 1], [], []>} : vector<16x128xf32>, vector<128x32xf32>, vector<16x32xf32> -> vector<16x32xf32>
    %36 = vector.broadcast %8 : vector<1x32xf32> to vector<16x32xf32>
    %37 = arith.addf %35, %36 : vector<16x32xf32>
    %c0_11 = arith.constant 0 : index
    %c0_12 = arith.constant 0 : index
    %38 = vector.load %arg4[%c0_11, %c0_12] : memref<128x64xf32, #tpu.memory_space<vmem>>, vector<128x64xf32>
    %cst_13 = arith.constant dense<0.000000e+00> : vector<16x64xf32>
    %39 = tpu.matmul %33, %38, %cst_13 {dimension_numbers = #tpu.dot_dimension_numbers<[1], [0], [0], [1], [0, 0, 1, 1], [], []>} : vector<16x128xf32>, vector<128x64xf32>, vector<16x64xf32> -> vector<16x64xf32>
    %40 = vector.broadcast %9 : vector<1x64xf32> to vector<16x64xf32>
    %41 = arith.addf %39, %40 : vector<16x64xf32>
    %42 = vector.extract_strided_slice %37 {offsets = [0, 0], sizes = [16, 8], strides = [1, 1]} : vector<16x32xf32> to vector<16x8xf32>
    %43 = vector.shape_cast %42 : vector<16x8xf32> to vector<1x16x8xf32>
    %44 = vector.extract_strided_slice %41 {offsets = [0, 0], sizes = [16, 8], strides = [1, 1]} : vector<16x64xf32> to vector<16x8xf32>
    %45 = vector.shape_cast %44 : vector<16x8xf32> to vector<1x16x8xf32>
    %46 = vector.extract_strided_slice %41 {offsets = [0, 32], sizes = [16, 8], strides = [1, 1]} : vector<16x64xf32> to vector<16x8xf32>
    %47 = vector.shape_cast %46 : vector<16x8xf32> to vector<1x16x8xf32>
    "tpu.trace_start"() <{level = 10 : i32, message = "bqd,bkd->bqk"}> : () -> ()
    %cst_14 = arith.constant dense<0.000000e+00> : vector<1x16x16xf32>
    %48 = tpu.matmul %43, %45, %cst_14 {dimension_numbers = #tpu.dot_dimension_numbers<[2], [2], [1], [1], [0, 0, 0, 1, 1, 1], [0], [0]>} : vector<1x16x8xf32>, vector<1x16x8xf32>, vector<1x16x16xf32> -> vector<1x16x16xf32>
    "tpu.trace_stop"() : () -> ()
    %cst_15 = arith.constant dense<0xFF800000> : vector<1x16xf32>
    %49 = vector.multi_reduction <maximumf>, %48, %cst_15 [2] : vector<1x16x16xf32> to vector<1x16xf32>
    %50 = vector.shape_cast %49 : vector<1x16xf32> to vector<1x16x1xf32>
    %51 = vector.broadcast %50 : vector<1x16x1xf32> to vector<1x16x16xf32>
    %52 = arith.subf %48, %51 : vector<1x16x16xf32>
    %53 = math.exp %52 : vector<1x16x16xf32>
    %cst_16 = arith.constant dense<0.000000e+00> : vector<1x16xf32>
    %54 = vector.multi_reduction <add>, %53, %cst_16 [2] : vector<1x16x16xf32> to vector<1x16xf32>
    %55 = vector.shape_cast %54 : vector<1x16xf32> to vector<1x16x1xf32>
    %56 = tpu.reciprocal %55 : vector<1x16x1xf32> -> vector<1x16x1xf32>
    %57 = vector.broadcast %56 : vector<1x16x1xf32> to vector<1x16x16xf32>
    %58 = arith.mulf %53, %57 : vector<1x16x16xf32>
    "tpu.trace_start"() <{level = 10 : i32, message = "bqk,bkd->bqd"}> : () -> ()
    %cst_17 = arith.constant dense<0.000000e+00> : vector<1x16x8xf32>
    %59 = tpu.matmul %58, %47, %cst_17 {dimension_numbers = #tpu.dot_dimension_numbers<[2], [1], [1], [2], [0, 0, 0, 1, 1, 2], [0], [0]>} : vector<1x16x16xf32>, vector<1x16x8xf32>, vector<1x16x8xf32> -> vector<1x16x8xf32>
    "tpu.trace_stop"() : () -> ()
    %60 = vector.shape_cast %59 : vector<1x16x8xf32> to vector<16x8xf32>
    %c0_18 = arith.constant 0 : index
    %c0_19 = arith.constant 0 : index
    %61 = vector.load %arg9[%c0_18, %c0_19] : memref<16x32xf32, #tpu.memory_space<vmem>>, vector<16x8xf32>
    tpu.vector_store %arg9[%c0_18, %c0_19], %60 {strides = array<i32>} : memref<16x32xf32, #tpu.memory_space<vmem>>, vector<16x8xf32>,
    %62 = vector.extract_strided_slice %37 {offsets = [0, 8], sizes = [16, 8], strides = [1, 1]} : vector<16x32xf32> to vector<16x8xf32>
    %63 = vector.shape_cast %62 : vector<16x8xf32> to vector<1x16x8xf32>
    %64 = vector.extract_strided_slice %41 {offsets = [0, 8], sizes = [16, 8], strides = [1, 1]} : vector<16x64xf32> to vector<16x8xf32>
    %65 = vector.shape_cast %64 : vector<16x8xf32> to vector<1x16x8xf32>
    %66 = vector.extract_strided_slice %41 {offsets = [0, 40], sizes = [16, 8], strides = [1, 1]} : vector<16x64xf32> to vector<16x8xf32>
    %67 = vector.shape_cast %66 : vector<16x8xf32> to vector<1x16x8xf32>
    "tpu.trace_start"() <{level = 10 : i32, message = "bqd,bkd->bqk"}> : () -> ()
    %cst_20 = arith.constant dense<0.000000e+00> : vector<1x16x16xf32>
    %68 = tpu.matmul %63, %65, %cst_20 {dimension_numbers = #tpu.dot_dimension_numbers<[2], [2], [1], [1], [0, 0, 0, 1, 1, 1], [0], [0]>} : vector<1x16x8xf32>, vector<1x16x8xf32>, vector<1x16x16xf32> -> vector<1x16x16xf32>
    "tpu.trace_stop"() : () -> ()
    %cst_21 = arith.constant dense<0xFF800000> : vector<1x16xf32>
    %69 = vector.multi_reduction <maximumf>, %68, %cst_21 [2] : vector<1x16x16xf32> to vector<1x16xf32>
    %70 = vector.shape_cast %69 : vector<1x16xf32> to vector<1x16x1xf32>
    %71 = vector.broadcast %70 : vector<1x16x1xf32> to vector<1x16x16xf32>
    %72 = arith.subf %68, %71 : vector<1x16x16xf32>
    %73 = math.exp %72 : vector<1x16x16xf32>
    %cst_22 = arith.constant dense<0.000000e+00> : vector<1x16xf32>
    %74 = vector.multi_reduction <add>, %73, %cst_22 [2] : vector<1x16x16xf32> to vector<1x16xf32>
    %75 = vector.shape_cast %74 : vector<1x16xf32> to vector<1x16x1xf32>
    %76 = tpu.reciprocal %75 : vector<1x16x1xf32> -> vector<1x16x1xf32>
    %77 = vector.broadcast %76 : vector<1x16x1xf32> to vector<1x16x16xf32>
    %78 = arith.mulf %73, %77 : vector<1x16x16xf32>
    "tpu.trace_start"() <{level = 10 : i32, message = "bqk,bkd->bqd"}> : () -> ()
    %cst_23 = arith.constant dense<0.000000e+00> : vector<1x16x8xf32>
    %79 = tpu.matmul %78, %67, %cst_23 {dimension_numbers = #tpu.dot_dimension_numbers<[2], [1], [1], [2], [0, 0, 0, 1, 1, 2], [0], [0]>} : vector<1x16x16xf32>, vector<1x16x8xf32>, vector<1x16x8xf32> -> vector<1x16x8xf32>
    "tpu.trace_stop"() : () -> ()
    %80 = vector.shape_cast %79 : vector<1x16x8xf32> to vector<16x8xf32>
    %c0_24 = arith.constant 0 : index
    %c8 = arith.constant 8 : index
    %81 = vector.load %arg9[%c0_24, %c8] : memref<16x32xf32, #tpu.memory_space<vmem>>, vector<16x8xf32>
    tpu.vector_store %arg9[%c0_24, %c8], %80 {strides = array<i32>} : memref<16x32xf32, #tpu.memory_space<vmem>>, vector<16x8xf32>,
    %82 = vector.extract_strided_slice %37 {offsets = [0, 16], sizes = [16, 8], strides = [1, 1]} : vector<16x32xf32> to vector<16x8xf32>
    %83 = vector.shape_cast %82 : vector<16x8xf32> to vector<1x16x8xf32>
    %84 = vector.extract_strided_slice %41 {offsets = [0, 16], sizes = [16, 8], strides = [1, 1]} : vector<16x64xf32> to vector<16x8xf32>
    %85 = vector.shape_cast %84 : vector<16x8xf32> to vector<1x16x8xf32>
    %86 = vector.extract_strided_slice %41 {offsets = [0, 48], sizes = [16, 8], strides = [1, 1]} : vector<16x64xf32> to vector<16x8xf32>
    %87 = vector.shape_cast %86 : vector<16x8xf32> to vector<1x16x8xf32>
    "tpu.trace_start"() <{level = 10 : i32, message = "bqd,bkd->bqk"}> : () -> ()
    %cst_25 = arith.constant dense<0.000000e+00> : vector<1x16x16xf32>
    %88 = tpu.matmul %83, %85, %cst_25 {dimension_numbers = #tpu.dot_dimension_numbers<[2], [2], [1], [1], [0, 0, 0, 1, 1, 1], [0], [0]>} : vector<1x16x8xf32>, vector<1x16x8xf32>, vector<1x16x16xf32> -> vector<1x16x16xf32>
    "tpu.trace_stop"() : () -> ()
    %cst_26 = arith.constant dense<0xFF800000> : vector<1x16xf32>
    %89 = vector.multi_reduction <maximumf>, %88, %cst_26 [2] : vector<1x16x16xf32> to vector<1x16xf32>
    %90 = vector.shape_cast %89 : vector<1x16xf32> to vector<1x16x1xf32>
    %91 = vector.broadcast %90 : vector<1x16x1xf32> to vector<1x16x16xf32>
    %92 = arith.subf %88, %91 : vector<1x16x16xf32>
    %93 = math.exp %92 : vector<1x16x16xf32>
    %cst_27 = arith.constant dense<0.000000e+00> : vector<1x16xf32>
    %94 = vector.multi_reduction <add>, %93, %cst_27 [2] : vector<1x16x16xf32> to vector<1x16xf32>
    %95 = vector.shape_cast %94 : vector<1x16xf32> to vector<1x16x1xf32>
    %96 = tpu.reciprocal %95 : vector<1x16x1xf32> -> vector<1x16x1xf32>
    %97 = vector.broadcast %96 : vector<1x16x1xf32> to vector<1x16x16xf32>
    %98 = arith.mulf %93, %97 : vector<1x16x16xf32>
    "tpu.trace_start"() <{level = 10 : i32, message = "bqk,bkd->bqd"}> : () -> ()
    %cst_28 = arith.constant dense<0.000000e+00> : vector<1x16x8xf32>
    %99 = tpu.matmul %98, %87, %cst_28 {dimension_numbers = #tpu.dot_dimension_numbers<[2], [1], [1], [2], [0, 0, 0, 1, 1, 2], [0], [0]>} : vector<1x16x16xf32>, vector<1x16x8xf32>, vector<1x16x8xf32> -> vector<1x16x8xf32>
    "tpu.trace_stop"() : () -> ()
    %100 = vector.shape_cast %99 : vector<1x16x8xf32> to vector<16x8xf32>
    %c0_29 = arith.constant 0 : index
    %c16 = arith.constant 16 : index
    %101 = vector.load %arg9[%c0_29, %c16] : memref<16x32xf32, #tpu.memory_space<vmem>>, vector<16x8xf32>
    tpu.vector_store %arg9[%c0_29, %c16], %100 {strides = array<i32>} : memref<16x32xf32, #tpu.memory_space<vmem>>, vector<16x8xf32>,
    %102 = vector.extract_strided_slice %37 {offsets = [0, 24], sizes = [16, 8], strides = [1, 1]} : vector<16x32xf32> to vector<16x8xf32>
    %103 = vector.shape_cast %102 : vector<16x8xf32> to vector<1x16x8xf32>
    %104 = vector.extract_strided_slice %41 {offsets = [0, 24], sizes = [16, 8], strides = [1, 1]} : vector<16x64xf32> to vector<16x8xf32>
    %105 = vector.shape_cast %104 : vector<16x8xf32> to vector<1x16x8xf32>
    %106 = vector.extract_strided_slice %41 {offsets = [0, 56], sizes = [16, 8], strides = [1, 1]} : vector<16x64xf32> to vector<16x8xf32>
    %107 = vector.shape_cast %106 : vector<16x8xf32> to vector<1x16x8xf32>
    "tpu.trace_start"() <{level = 10 : i32, message = "bqd,bkd->bqk"}> : () -> ()
    %cst_30 = arith.constant dense<0.000000e+00> : vector<1x16x16xf32>
    %108 = tpu.matmul %103, %105, %cst_30 {dimension_numbers = #tpu.dot_dimension_numbers<[2], [2], [1], [1], [0, 0, 0, 1, 1, 1], [0], [0]>} : vector<1x16x8xf32>, vector<1x16x8xf32>, vector<1x16x16xf32> -> vector<1x16x16xf32>
    "tpu.trace_stop"() : () -> ()
    %cst_31 = arith.constant dense<0xFF800000> : vector<1x16xf32>
    %109 = vector.multi_reduction <maximumf>, %108, %cst_31 [2] : vector<1x16x16xf32> to vector<1x16xf32>
    %110 = vector.shape_cast %109 : vector<1x16xf32> to vector<1x16x1xf32>
    %111 = vector.broadcast %110 : vector<1x16x1xf32> to vector<1x16x16xf32>
    %112 = arith.subf %108, %111 : vector<1x16x16xf32>
    %113 = math.exp %112 : vector<1x16x16xf32>
    %cst_32 = arith.constant dense<0.000000e+00> : vector<1x16xf32>
    %114 = vector.multi_reduction <add>, %113, %cst_32 [2] : vector<1x16x16xf32> to vector<1x16xf32>
    %115 = vector.shape_cast %114 : vector<1x16xf32> to vector<1x16x1xf32>
    %116 = tpu.reciprocal %115 : vector<1x16x1xf32> -> vector<1x16x1xf32>
    %117 = vector.broadcast %116 : vector<1x16x1xf32> to vector<1x16x16xf32>
    %118 = arith.mulf %113, %117 : vector<1x16x16xf32>
    "tpu.trace_start"() <{level = 10 : i32, message = "bqk,bkd->bqd"}> : () -> ()
    %cst_33 = arith.constant dense<0.000000e+00> : vector<1x16x8xf32>
    %119 = tpu.matmul %118, %107, %cst_33 {dimension_numbers = #tpu.dot_dimension_numbers<[2], [1], [1], [2], [0, 0, 0, 1, 1, 2], [0], [0]>} : vector<1x16x16xf32>, vector<1x16x8xf32>, vector<1x16x8xf32> -> vector<1x16x8xf32>
    "tpu.trace_stop"() : () -> ()
    %120 = vector.shape_cast %119 : vector<1x16x8xf32> to vector<16x8xf32>
    %c0_34 = arith.constant 0 : index
    %c24 = arith.constant 24 : index
    %121 = vector.load %arg9[%c0_34, %c24] : memref<16x32xf32, #tpu.memory_space<vmem>>, vector<16x8xf32>
    tpu.vector_store %arg9[%c0_34, %c24], %120 {strides = array<i32>} : memref<16x32xf32, #tpu.memory_space<vmem>>, vector<16x8xf32>,
    %c0_35 = arith.constant 0 : index
    %c0_36 = arith.constant 0 : index
    %122 = vector.load %arg9[%c0_35, %c0_36] : memref<16x32xf32, #tpu.memory_space<vmem>>, vector<16x32xf32>
    %c0_37 = arith.constant 0 : index
    %c0_38 = arith.constant 0 : index
    %123 = vector.load %arg5[%c0_37, %c0_38] : memref<32x128xf32, #tpu.memory_space<vmem>>, vector<32x128xf32>
    %cst_39 = arith.constant dense<0.000000e+00> : vector<16x128xf32>
    %124 = tpu.matmul %122, %123, %cst_39 {dimension_numbers = #tpu.dot_dimension_numbers<[1], [0], [0], [1], [0, 0, 1, 1], [], []>} : vector<16x32xf32>, vector<32x128xf32>, vector<16x128xf32> -> vector<16x128xf32>
    %125 = vector.broadcast %3 : vector<1x128xf32> to vector<16x128xf32>
    %126 = arith.addf %124, %125 : vector<16x128xf32>
    %127 = arith.addf %126, %11 : vector<16x128xf32>
    %cst_40 = arith.constant dense<0.000000e+00> : vector<16xf32>
    %128 = vector.multi_reduction <add>, %127, %cst_40 [1] : vector<16x128xf32> to vector<16xf32>
    %129 = vector.shape_cast %128 : vector<16xf32> to vector<16x1xf32>
    %cst_41 = arith.constant 3.125000e-02 : f32
    %130 = vector.broadcast %cst_41 : f32 to vector<16x1xf32>
    %131 = arith.mulf %129, %130 : vector<16x1xf32>
    %132 = arith.mulf %127, %127 : vector<16x128xf32>
    %cst_42 = arith.constant dense<0.000000e+00> : vector<16xf32>
    %133 = vector.multi_reduction <add>, %132, %cst_42 [1] : vector<16x128xf32> to vector<16xf32>
    %134 = vector.shape_cast %133 : vector<16xf32> to vector<16x1xf32>
    %cst_43 = arith.constant 3.125000e-02 : f32
    %135 = vector.broadcast %cst_43 : f32 to vector<16x1xf32>
    %136 = arith.mulf %134, %135 : vector<16x1xf32>
    %137 = arith.mulf %131, %131 : vector<16x1xf32>
    %138 = arith.subf %136, %137 : vector<16x1xf32>
    %139 = vector.broadcast %131 : vector<16x1xf32> to vector<16x128xf32>
    %140 = arith.subf %127, %139 : vector<16x128xf32>
    %cst_44 = arith.constant 9.99999974E-6 : f32
    %141 = vector.broadcast %cst_44 : f32 to vector<16x1xf32>
    %142 = arith.addf %138, %141 : vector<16x1xf32>
    %143 = math.rsqrt %142 : vector<16x1xf32>
    %144 = vector.broadcast %143 : vector<16x1xf32> to vector<16x128xf32>
    %145 = arith.mulf %140, %144 : vector<16x128xf32>
    %146 = vector.broadcast %4 : vector<1x128xf32> to vector<16x128xf32>
    %147 = arith.mulf %145, %146 : vector<16x128xf32>
    %148 = vector.broadcast %5 : vector<1x128xf32> to vector<16x128xf32>
    %149 = arith.addf %147, %148 : vector<16x128xf32>
    %c0_45 = arith.constant 0 : index
    %c0_46 = arith.constant 0 : index
    %150 = vector.load %arg6[%c0_45, %c0_46] : memref<128x128xf32, #tpu.memory_space<vmem>>, vector<128x128xf32>
    %cst_47 = arith.constant dense<0.000000e+00> : vector<16x128xf32>
    %151 = tpu.matmul %149, %150, %cst_47 {dimension_numbers = #tpu.dot_dimension_numbers<[1], [0], [0], [1], [0, 0, 1, 1], [], []>} : vector<16x128xf32>, vector<128x128xf32>, vector<16x128xf32> -> vector<16x128xf32>
    %152 = vector.broadcast %6 : vector<1x128xf32> to vector<16x128xf32>
    %153 = arith.addf %151, %152 : vector<16x128xf32>
    %cst_48 = arith.constant 5.000000e-01 : f32
    %154 = vector.broadcast %cst_48 : f32 to vector<16x128xf32>
    %155 = arith.mulf %154, %153 : vector<16x128xf32>
    %cst_49 = arith.constant 0.707106769 : f32
    %156 = vector.broadcast %cst_49 : f32 to vector<16x128xf32>
    %157 = arith.mulf %153, %156 : vector<16x128xf32>
    %158 = math.erf %157 : vector<16x128xf32>
    %cst_50 = arith.constant 1.000000e+00 : f32
    %159 = vector.broadcast %cst_50 : f32 to vector<16x128xf32>
    %160 = arith.addf %159, %158 : vector<16x128xf32>
    %161 = arith.mulf %155, %160 : vector<16x128xf32>
    %c0_51 = arith.constant 0 : index
    %c0_52 = arith.constant 0 : index
    %162 = vector.load %arg7[%c0_51, %c0_52] : memref<128x128xf32, #tpu.memory_space<vmem>>, vector<128x128xf32>
    %cst_53 = arith.constant dense<0.000000e+00> : vector<16x128xf32>
    %163 = tpu.matmul %161, %162, %cst_53 {dimension_numbers = #tpu.dot_dimension_numbers<[1], [0], [0], [1], [0, 0, 1, 1], [], []>} : vector<16x128xf32>, vector<128x128xf32>, vector<16x128xf32> -> vector<16x128xf32>
    %164 = vector.broadcast %7 : vector<1x128xf32> to vector<16x128xf32>
    %165 = arith.addf %163, %164 : vector<16x128xf32>
    %166 = arith.addf %165, %127 : vector<16x128xf32>
    %167 = vector.shape_cast %166 : vector<16x128xf32> to vector<1x16x128xf32>
    %c0_54 = arith.constant 0 : index
    %c0_55 = arith.constant 0 : index
    %c0_56 = arith.constant 0 : index
    %168 = vector.load %arg8[%c0_54, %c0_55, %c0_56] : memref<1x16x128xf32, #tpu.memory_space<vmem>>, vector<1x16x128xf32>
    tpu.vector_store %arg8[%c0_54, %c0_55, %c0_56], %167 {strides = array<i32>} : memref<1x16x128xf32, #tpu.memory_space<vmem>>, vector<1x16x128xf32>,
    return
  }
  func.func @transform_0(%arg0: i32) -> (i32, i32, i32) {
    %c0_i32 = arith.constant 0 : i32
    %c0_i32_0 = arith.constant 0 : i32
    %c0_i32_1 = arith.constant 0 : i32
    return %arg0, %c0_i32, %c0_i32_0 : i32, i32, i32
  }
  func.func @transform_1(%arg0: i32) -> (i32, i32) {
    %c0_i32 = arith.constant 0 : i32
    %c0_i32_0 = arith.constant 0 : i32
    %c0_i32_1 = arith.constant 0 : i32
    return %c0_i32, %c0_i32_0 : i32, i32
  }
  func.func @transform_2(%arg0: i32) -> (i32, i32) {
    %c0_i32 = arith.constant 0 : i32
    %c0_i32_0 = arith.constant 0 : i32
    %c0_i32_1 = arith.constant 0 : i32
    return %c0_i32, %c0_i32_0 : i32, i32
  }
  func.func @transform_3(%arg0: i32) -> (i32, i32) {
    %c0_i32 = arith.constant 0 : i32
    %c0_i32_0 = arith.constant 0 : i32
    %c0_i32_1 = arith.constant 0 : i32
    return %c0_i32, %c0_i32_0 : i32, i32
  }
  func.func @transform_4(%arg0: i32) -> (i32, i32) {
    %c0_i32 = arith.constant 0 : i32
    %c0_i32_0 = arith.constant 0 : i32
    %c0_i32_1 = arith.constant 0 : i32
    return %c0_i32, %c0_i32_0 : i32, i32
  }
  func.func @transform_5(%arg0: i32) -> (i32, i32) {
    %c0_i32 = arith.constant 0 : i32
    %c0_i32_0 = arith.constant 0 : i32
    %c0_i32_1 = arith.constant 0 : i32
    return %c0_i32, %c0_i32_0 : i32, i32
  }
  func.func @transform_6(%arg0: i32) -> (i32, i32) {
    %c0_i32 = arith.constant 0 : i32
    %c0_i32_0 = arith.constant 0 : i32
    %c0_i32_1 = arith.constant 0 : i32
    return %c0_i32, %c0_i32_0 : i32, i32
  }
  func.func @transform_7(%arg0: i32) -> (i32, i32, i32) {
    %c0_i32 = arith.constant 0 : i32
    %c0_i32_0 = arith.constant 0 : i32
    %c0_i32_1 = arith.constant 0 : i32
    return %arg0, %c0_i32, %c0_i32_0 : i32, i32, i32
  }
}

</mosaic_0001>

<llo_original>
// kernel: tpu_custom_call.1
$region0: #{tpu_custom_call.1}
  #allocation0 [shape = 'u32[]', space=smem, size = 0x4, offset = 0x4, fixed_abs, tag = 'smem constant byte address 0x4 - core index']
  #allocation1 [shape = 'u32[144,128]{1,0:T(1,128)}', space=vmem, size = 0x12000, scoped, tag = 'internal scratch']
  #allocation2 [shape = 'f32[16,32]{1,0:T(8,128)}', space=vmem, size = 0x2000, scoped, tag = 'scratch operand']
  %s0 = inlined_call_operand.vmem [shape: f32[2,16,128], index: 0, kind: input, shape index: {}]
  %s1 = inlined_call_operand.hbm [shape: f32[8,128], index: 1, kind: input, shape index: {}]
  %s2 = inlined_call_operand.vmem [shape: f32[128,32], index: 2, kind: input, shape index: {}]
  %s3 = inlined_call_operand.vmem [shape: f32[128,64], index: 3, kind: input, shape index: {}]
  %s4 = inlined_call_operand.hbm [shape: f32[32,128], index: 4, kind: input, shape index: {}]
  %s5 = inlined_call_operand.vmem [shape: f32[128,128], index: 5, kind: input, shape index: {}]
  %s6 = inlined_call_operand.vmem [shape: f32[128,128], index: 6, kind: input, shape index: {}]
  %s7 = inlined_call_operand.hbm [shape: f32[2,16,128], index: 7, kind: output, shape index: {}]
  %s8 = sld [smem:[#allocation0]]
  $region69: #{tpu_custom_call.1} parent=0
    _
  %s10 = ssub.s32 1, %s8
  %s11 = scalar_select 0, %s10, %s8
  $region1: #{tpu_custom_call.1} parent=0
    #allocation3 [shape = 'u8[4096]{0}', space=vmem, size = 0x1000, scoped, tag = 'input window, operand 1, single buffered']
    #allocation4 [shape = 's32[2]{0}', space=sflag, size = 0x8, scoped, tag = 'scoped memory for tpu_custom_call.1']
    #allocation5 [shape = 's32[2]{0}', space=sflag, size = 0x8, scoped, tag = 'scoped memory for tpu_custom_call.1']
    #allocation6 [shape = 'u8[16384]{0}', space=vmem, size = 0x4000, scoped, tag = 'input window, operand 4, single buffered']
    #allocation7 [shape = 's32[1]{0}', space=sflag, size = 0x4, scoped, tag = 'scoped memory for tpu_custom_call.1']
    #allocation8 [shape = 'u8[16384]{0}', space=vmem, size = 0x4000, scoped, tag = 'output window, operand 0']
    %12 = vsyncpa [#allocation4], 0
    %13 = vsyncpa [#allocation7], 0
    %14 = vsyncpa [#allocation5], 0
    %s15 = scalar_lea.sflag [#allocation5], 1
    %16 = vsyncpa %s15, 0
    loop: start=0, step=1, limit=4
    $region2: #{tpu_custom_call.1} parent=1 // loop_pre_header
      _
    $region3: #{tpu_custom_call.1} parent=1 // loop_header
      %s18 = sphi 0, %s22
      %p19 = scmp.ge.s32.totalorder %s18, 4
      %s28 = sphi 0, %s30
      %s31 = sphi 0, %s28
      %s32 = sphi 0, %s31
      %s48 = sphi 0, %s32
      %s52 = sphi 0, %s52
      %s54 = sphi 0, %s52
      %s55 = sphi 0, %s54
      %s69 = sphi 0, %s55
      %s73 = sphi 0, %s73
      %s75 = sphi 0, %s73
      %s76 = sphi 0, %s75
      %s90 = sphi 0, %s76
      %s94 = sphi 0, %s94
      %s96 = sphi 0, %s94
      %s97 = sphi 0, %s96
      %s111 = sphi 0, %s97
      %s115 = sphi 0, %s115
      %s117 = sphi 0, %s115
      %s118 = sphi 0, %s117
      %s132 = sphi 0, %s118
      %s136 = sphi 0, %s136
      %s138 = sphi 0, %s136
      %s139 = sphi 0, %s138
      %s153 = sphi 0, %s139
      %s157 = sphi 0, %s157
      %s159 = sphi 0, %s157
      %s160 = sphi 0, %s159
      %s174 = sphi 0, %s160
      %s180 = sphi 0, %s182
      %s183 = sphi 0, %s180
      %s184 = sphi 0, %s183
      %s200 = sphi 0, %s184
    $region4: #{tpu_custom_call.1} parent=1 // loop_header_branch
      %21 = sbr.rel (%p19) target = $region8
    $region5: #{tpu_custom_call.1} parent=1 // loop_body
      %s23 = ssub.s32 %s18, 1
      %s24 = ssub.s32 %s18, 2
      %s25 = sadd.s32 %s18, 1
      %s26 = ssub.s32 %s18, %s25
      %p27 = scmp.eq.s32.totalorder %s26, 0
      %s29 = sadd.s32 %s28, 1
      %s30 = scalar_select %p27, %s28, %s29
      %p33 = pneg %p27
      %p34 = scmp.eq.s32.totalorder %s18, 1
      %p35 = por %p33, %p34
      %p36 = scmp.ne.s32.totalorder %s28, %s31
      %p37 = scmp.eq.s32.totalorder %s18, 0
      %p38 = por %p36, %p37
      %p39 = scmp.ne.s32.totalorder %s28, %s31
      %p40 = scmp.eq.s32.totalorder %s23, 1
      %p41 = por %p39, %p40
      %p42 = scmp.ne.s32.totalorder %s31, %s32
      %p43 = scmp.eq.s32.totalorder %s23, 0
      %p44 = por %p42, %p43
      %p45 = scmp.ne.s32.totalorder %s31, %s32
      %p46 = scmp.eq.s32.totalorder %s24, 1
      %p47 = por %p45, %p46
      %p49 = scmp.ne.s32.totalorder %s32, %s48
      %p50 = scmp.eq.s32.totalorder %s24, 0
      %p51 = por %p49, %p50
      %s53 = sadd.s32 %s52, 1
      %p56 = scmp.eq.s32.totalorder %s18, 1
      %p57 = scmp.ne.s32.totalorder %s52, %s54
      %p58 = scmp.eq.s32.totalorder %s18, 0
      %p59 = por %p57, %p58
      %p60 = scmp.ne.s32.totalorder %s52, %s54
      %p61 = scmp.eq.s32.totalorder %s23, 1
      %p62 = por %p60, %p61
      %p63 = scmp.ne.s32.totalorder %s54, %s55
      %p64 = scmp.eq.s32.totalorder %s23, 0
      %p65 = por %p63, %p64
      %p66 = scmp.ne.s32.totalorder %s54, %s55
      %p67 = scmp.eq.s32.totalorder %s24, 1
      %p68 = por %p66, %p67
      %p70 = scmp.ne.s32.totalorder %s55, %s69
      %p71 = scmp.eq.s32.totalorder %s24, 0
      %p72 = por %p70, %p71
      %s74 = sadd.s32 %s73, 1
      %p77 = scmp.eq.s32.totalorder %s18, 1
      %p78 = scmp.ne.s32.totalorder %s73, %s75
      %p79 = scmp.eq.s32.totalorder %s18, 0
      %p80 = por %p78, %p79
      %p81 = scmp.ne.s32.totalorder %s73, %s75
      %p82 = scmp.eq.s32.totalorder %s23, 1
      %p83 = por %p81, %p82
      %p84 = scmp.ne.s32.totalorder %s75, %s76
      %p85 = scmp.eq.s32.totalorder %s23, 0
      %p86 = por %p84, %p85
      %p87 = scmp.ne.s32.totalorder %s75, %s76
      %p88 = scmp.eq.s32.totalorder %s24, 1
      %p89 = por %p87, %p88
      %p91 = scmp.ne.s32.totalorder %s76, %s90
      %p92 = scmp.eq.s32.totalorder %s24, 0
      %p93 = por %p91, %p92
      %s95 = sadd.s32 %s94, 1
      %p98 = scmp.eq.s32.totalorder %s18, 1
      %p99 = scmp.ne.s32.totalorder %s94, %s96
      %p100 = scmp.eq.s32.totalorder %s18, 0
      %p101 = por %p99, %p100
      %p102 = scmp.ne.s32.totalorder %s94, %s96
      %p103 = scmp.eq.s32.totalorder %s23, 1
      %p104 = por %p102, %p103
      %p105 = scmp.ne.s32.totalorder %s96, %s97
      %p106 = scmp.eq.s32.totalorder %s23, 0
      %p107 = por %p105, %p106
      %p108 = scmp.ne.s32.totalorder %s96, %s97
      %p109 = scmp.eq.s32.totalorder %s24, 1
      %p110 = por %p108, %p109
      %p112 = scmp.ne.s32.totalorder %s97, %s111
      %p113 = scmp.eq.s32.totalorder %s24, 0
      %p114 = por %p112, %p113
      %s116 = sadd.s32 %s115, 1
      %p119 = scmp.eq.s32.totalorder %s18, 1
      %p120 = scmp.ne.s32.totalorder %s115, %s117
      %p121 = scmp.eq.s32.totalorder %s18, 0
      %p122 = por %p120, %p121
      %p123 = scmp.ne.s32.totalorder %s115, %s117
      %p124 = scmp.eq.s32.totalorder %s23, 1
      %p125 = por %p123, %p124
      %p126 = scmp.ne.s32.totalorder %s117, %s118
      %p127 = scmp.eq.s32.totalorder %s23, 0
      %p128 = por %p126, %p127
      %p129 = scmp.ne.s32.totalorder %s117, %s118
      %p130 = scmp.eq.s32.totalorder %s24, 1
      %p131 = por %p129, %p130
      %p133 = scmp.ne.s32.totalorder %s118, %s132
      %p134 = scmp.eq.s32.totalorder %s24, 0
      %p135 = por %p133, %p134
      %s137 = sadd.s32 %s136, 1
      %p140 = scmp.eq.s32.totalorder %s18, 1
      %p141 = scmp.ne.s32.totalorder %s136, %s138
      %p142 = scmp.eq.s32.totalorder %s18, 0
      %p143 = por %p141, %p142
      %p144 = scmp.ne.s32.totalorder %s136, %s138
      %p145 = scmp.eq.s32.totalorder %s23, 1
      %p146 = por %p144, %p145
      %p147 = scmp.ne.s32.totalorder %s138, %s139
      %p148 = scmp.eq.s32.totalorder %s23, 0
      %p149 = por %p147, %p148
      %p150 = scmp.ne.s32.totalorder %s138, %s139
      %p151 = scmp.eq.s32.totalorder %s24, 1
      %p152 = por %p150, %p151
      %p154 = scmp.ne.s32.totalorder %s139, %s153
      %p155 = scmp.eq.s32.totalorder %s24, 0
      %p156 = por %p154, %p155
      %s158 = sadd.s32 %s157, 1
      %p161 = scmp.eq.s32.totalorder %s18, 1
      %p162 = scmp.ne.s32.totalorder %s157, %s159
      %p163 = scmp.eq.s32.totalorder %s18, 0
      %p164 = por %p162, %p163
      %p165 = scmp.ne.s32.totalorder %s157, %s159
      %p166 = scmp.eq.s32.totalorder %s23, 1
      %p167 = por %p165, %p166
      %p168 = scmp.ne.s32.totalorder %s159, %s160
      %p169 = scmp.eq.s32.totalorder %s23, 0
      %p170 = por %p168, %p169
      %p171 = scmp.ne.s32.totalorder %s159, %s160
      %p172 = scmp.eq.s32.totalorder %s24, 1
      %p173 = por %p171, %p172
      %p175 = scmp.ne.s32.totalorder %s160, %s174
      %p176 = scmp.eq.s32.totalorder %s24, 0
      %p177 = por %p175, %p176
      %s178 = ssub.s32 %s18, %s25
      %p179 = scmp.eq.s32.totalorder %s178, 0
      %s181 = sadd.s32 %s180, 1
      %s182 = scalar_select %p179, %s180, %s181
      %p185 = pneg %p179
      %p186 = scmp.eq.s32.totalorder %s18, 1
      %p187 = por %p185, %p186
      %p188 = scmp.ne.s32.totalorder %s180, %s183
      %p189 = scmp.eq.s32.totalorder %s18, 0
      %p190 = por %p188, %p189
      %p191 = scmp.ne.s32.totalorder %s180, %s183
      %p192 = scmp.eq.s32.totalorder %s23, 1
      %p193 = por %p191, %p192
      %p194 = scmp.ne.s32.totalorder %s183, %s184
      %p195 = scmp.eq.s32.totalorder %s23, 0
      %p196 = por %p194, %p195
      %p197 = scmp.ne.s32.totalorder %s183, %s184
      %p198 = scmp.eq.s32.totalorder %s24, 1
      %p199 = por %p197, %p198
      %p201 = scmp.ne.s32.totalorder %s184, %s200
      %p202 = scmp.eq.s32.totalorder %s24, 0
      %p203 = por %p201, %p202
      %p204 = scmp.le.s32.totalorder 1, %s18
      %p205 = scmp.lt.s32.totalorder %s18, 3
      %p206 = pnand %p204, %p205
      %p207 = pneg %p206
      // Predicated region
      $region9: #{tpu_custom_call.1} parent=5 // pred_check
        _
      $region10: #{tpu_custom_call.1} parent=5 // pred_check_branch
        %209 = sbr.rel (%p206) target = $region12
      $region11: #{tpu_custom_call.1} parent=5 // pred_region
        %s210 = ssub.s32 %s18, 1
        // Predicated region
        $region13: #{tpu_custom_call.1} parent=11 // pred_check
          %p211 = pneg %p65
        $region14: #{tpu_custom_call.1} parent=11 // pred_check_branch
          %213 = sbr.rel (%p211) target = $region16
        $region15: #{tpu_custom_call.1} parent=11 // pred_region
          %s215 = ssub.s32 128, 128
          %216 = vsyncadd [#allocation4], %s215
          %s218 = sshll.u32 [#allocation3], 4
          %s219 = int_to_ptr.vmem [resolvable:$true] %s218
          %221 = dma.hbm_to_vmem [thread:$0]  %s1, 128, %s219, [#allocation4]
        $region16: #{tpu_custom_call.1} parent=11 // pred_fallthru
          _
        // Predicated region
        $region17: #{tpu_custom_call.1} parent=11 // pred_check
          %p222 = pneg %p86
        $region18: #{tpu_custom_call.1} parent=11 // pred_check_branch
          %224 = sbr.rel (%p222) target = $region20
        $region19: #{tpu_custom_call.1} parent=11 // pred_region
          _
        $region20: #{tpu_custom_call.1} parent=11 // pred_fallthru
          _
        // Predicated region
        $region21: #{tpu_custom_call.1} parent=11 // pred_check
          %p225 = pneg %p107
        $region22: #{tpu_custom_call.1} parent=11 // pred_check_branch
          %227 = sbr.rel (%p225) target = $region24
        $region23: #{tpu_custom_call.1} parent=11 // pred_region
          _
        $region24: #{tpu_custom_call.1} parent=11 // pred_fallthru
          _
        // Predicated region
        $region25: #{tpu_custom_call.1} parent=11 // pred_check
          %p228 = pneg %p128
        $region26: #{tpu_custom_call.1} parent=11 // pred_check_branch
          %230 = sbr.rel (%p228) target = $region28
        $region27: #{tpu_custom_call.1} parent=11 // pred_region
          %s232 = ssub.s32 512, 512
          %233 = vsyncadd [#allocation7], %s232
          %s234 = sshll.u32 [#allocation6], 4
          %s235 = int_to_ptr.vmem [resolvable:$true] %s234
          %240 = dma.hbm_to_vmem [thread:$0]  %s4, 512, %s235, [#allocation7], 128, 128, 8
        $region28: #{tpu_custom_call.1} parent=11 // pred_fallthru
          _
        // Predicated region
        $region29: #{tpu_custom_call.1} parent=11 // pred_check
          %p241 = pneg %p149
        $region30: #{tpu_custom_call.1} parent=11 // pred_check_branch
          %243 = sbr.rel (%p241) target = $region32
        $region31: #{tpu_custom_call.1} parent=11 // pred_region
          _
        $region32: #{tpu_custom_call.1} parent=11 // pred_fallthru
          _
        // Predicated region
        $region33: #{tpu_custom_call.1} parent=11 // pred_check
          %p244 = pneg %p170
        $region34: #{tpu_custom_call.1} parent=11 // pred_check_branch
          %246 = sbr.rel (%p244) target = $region36
        $region35: #{tpu_custom_call.1} parent=11 // pred_region
          _
        $region36: #{tpu_custom_call.1} parent=11 // pred_fallthru
          _
      $region12: #{tpu_custom_call.1} parent=5 // pred_fallthru
        _
      %p247 = scmp.lt.s32.totalorder %s18, 2
      // Predicated region
      $region37: #{tpu_custom_call.1} parent=5 // pred_check
        %p248 = pneg %p247
      $region38: #{tpu_custom_call.1} parent=5 // pred_check_branch
        %250 = sbr.rel (%p248) target = $region40
      $region39: #{tpu_custom_call.1} parent=5 // pred_region
        // Predicated region
        $region41: #{tpu_custom_call.1} parent=39 // pred_check
          %p251 = pneg %p38
        $region42: #{tpu_custom_call.1} parent=39 // pred_check_branch
          %253 = sbr.rel (%p251) target = $region44
        $region43: #{tpu_custom_call.1} parent=39 // pred_region
          %p254 = scmp.lt.s32.totalorder %s18, 1
          %s255 = scalar_select %p254, %s18, 1
          %s256 = smul.addr %s255, 2
          %s257 = smul.addr %s256, 8
          %s258 = scalar_lea.vmem %s0, %s257
        $region44: #{tpu_custom_call.1} parent=39 // pred_fallthru
          _
      $region40: #{tpu_custom_call.1} parent=5 // pred_fallthru
        _
      %p259 = scmp.le.s32.totalorder 1, %s18
      %p260 = scmp.lt.s32.totalorder %s18, 3
      %p261 = pnand %p259, %p260
      %p262 = pneg %p261
      // Predicated region
      $region45: #{tpu_custom_call.1} parent=5 // pred_check
        _
      $region46: #{tpu_custom_call.1} parent=5 // pred_check_branch
        %264 = sbr.rel (%p261) target = $region48
      $region47: #{tpu_custom_call.1} parent=5 // pred_region
        %s265 = ssub.s32 %s18, 1
        // Predicated region
        $region49: #{tpu_custom_call.1} parent=47 // pred_check
          %p266 = pneg %p65
        $region50: #{tpu_custom_call.1} parent=47 // pred_check_branch
          %268 = sbr.rel (%p266) target = $region52
        $region51: #{tpu_custom_call.1} parent=47 // pred_region
          %269 = dma.done [#allocation4], 128
        $region52: #{tpu_custom_call.1} parent=47 // pred_fallthru
          _
        // Predicated region
        $region53: #{tpu_custom_call.1} parent=47 // pred_check
          %p270 = pneg %p128
        $region54: #{tpu_custom_call.1} parent=47 // pred_check_branch
          %272 = sbr.rel (%p270) target = $region56
        $region55: #{tpu_custom_call.1} parent=47 // pred_region
          %273 = dma.done [#allocation7], 512
        $region56: #{tpu_custom_call.1} parent=47 // pred_fallthru
          _
        %p274 = scmp.lt.s32.totalorder %s23, 1
        %s275 = scalar_select %p274, %s23, 1
        %s276 = smul.addr %s275, 2
        %s277 = smul.addr %s276, 8
        %s278 = scalar_lea.vmem %s0, %s277
        %p279 = pneg %p44
        %p280 = pneg %p41
        %p281 = pneg %p65
        %p282 = pneg %p62
        %p283 = pneg %p86
        %p284 = pneg %p83
        %p285 = pneg %p107
        %p286 = pneg %p104
        %p287 = pneg %p128
        %p288 = pneg %p125
        %p289 = pneg %p149
        %p290 = pneg %p146
        %p291 = pneg %p170
        %p292 = pneg %p167
        %p293 = pneg %p196
        %p294 = pneg %p193
        %s295 = sand.u32 %s183, 1
        %s296 = scalar_lea.sflag [#allocation5], %s295
        %s297 = sand.u32 %s183, 1
        %s298 = smul.addr %s297, 16
        %s299 = scalar_lea.vmem [#allocation8], %s298
        %p300 = scmp.lt.s32.totalorder %s23, 1
        %s301 = scalar_select %p300, %s23, 1
        %s302 = smul.addr %s301, 2
        %s303 = smul.addr %s302, 8
        %s304 = scalar_lea.vmem %s0, %s303
        %v305 = vld [vmem:[#allocation3] sm:$0xff]
        %v306 = vld [vmem:[%s304] sm:$0xff]
        %v307 = vld [vmem:[%s304 + $0x8] sm:$0xff]
        %308 = vadd.xlane.f32.xlu0 %v306
        %v309 = vpop.xlane.xlu0 %308
        %310 = vadd.xlane.f32.xlu0 %v307
        %v311 = vpop.xlane.xlu0 %310
        %v312 = vmul.f32 %v309, 0.03125
        %v313 = vmul.f32 %v311, 0.03125
        %v314 = vmul.f32 %v306, %v306
        %v315 = vmul.f32 %v307, %v307
        %316 = vadd.xlane.f32.xlu0 %v314
        %v317 = vpop.xlane.xlu0 %316
        %318 = vadd.xlane.f32.xlu0 %v315
        %v319 = vpop.xlane.xlu0 %318
        %v320 = vmul.f32 %v317, 0.03125
        %v321 = vmul.f32 %v319, 0.03125
        %v322 = vmul.f32 %v312, %v312
        %v323 = vmul.f32 %v313, %v313
        %v324 = vsub.f32 %v320, %v322
        %v325 = vsub.f32 %v321, %v323
        %v326 = vsub.f32 %v306, %v312
        %v327 = vsub.f32 %v307, %v313
        %v328 = vadd.f32 %v324, 1e-05
        %v329 = vadd.f32 %v325, 1e-05
        %v330 = vrsqrt.pop %v328
        %v331 = vrsqrt.pop %v329
        %v332 = vmul.f32 %v326, %v330
        %v333 = vmul.f32 %v327, %v331
        %v334 = vlaneseq
        %v335 = vshrl.u32 %v334, 7
        %v336 = vsub.s32 0, %v335
        %v337 = vrot.slane %v305, %v336
        %v338 = vmul.f32 %v332, %v337
        %v339 = vmul.f32 %v333, %v337
        %v340 = vlaneseq
        %v341 = vshrl.u32 %v340, 7
        %v342 = vsub.s32 1, %v341
        %v343 = vrot.slane %v305, %v342
        %v344 = vadd.f32 %v338, %v343
        %v345 = vadd.f32 %v339, %v343
        %v346 = vld [vmem:[%s2] sm:$0xff]
        %v347 = vld [vmem:[%s2 + $0x8] sm:$0xff]
        %v348 = vld [vmem:[%s2 + $0x10] sm:$0xff]
        %v349 = vld [vmem:[%s2 + $0x18] sm:$0xff]
        %v350 = vld [vmem:[%s2 + $0x20] sm:$0xff]
        %v351 = vld [vmem:[%s2 + $0x28] sm:$0xff]
        %v352 = vld [vmem:[%s2 + $0x30] sm:$0xff]
        %v353 = vld [vmem:[%s2 + $0x38] sm:$0xff]
        %v354 = vld [vmem:[%s2 + $0x40] sm:$0xff]
        %v355 = vld [vmem:[%s2 + $0x48] sm:$0xff]
        %v356 = vld [vmem:[%s2 + $0x50] sm:$0xff]
        %v357 = vld [vmem:[%s2 + $0x58] sm:$0xff]
        %v358 = vld [vmem:[%s2 + $0x60] sm:$0xff]
        %v359 = vld [vmem:[%s2 + $0x68] sm:$0xff]
        %v360 = vld [vmem:[%s2 + $0x70] sm:$0xff]
        %v361 = vld [vmem:[%s2 + $0x78] sm:$0xff]
        %v362 = vlaneseq
        %v363 = vshrl.u32 %v362, 7
        %v364 = vsub.s32 7, %v363
        %v365 = vrot.slane %v305, %v364
        %366 = vmatprep.subr.mxu0 0.0
        %367 = vmatpush1.msra.mxu0 %v346
        %368 = vmatprep.subr.mxu0 0.0
        %369 = vmatpush1.msra.mxu0 %v347
        %370 = vmatprep.subr.mxu0 0.0
        %371 = vmatpush1.msra.mxu0 %v348
        %372 = vmatprep.subr.mxu0 0.0
        %373 = vmatpush1.msra.mxu0 %v349
        %374 = vmatprep.subr.mxu0 0.0
        %375 = vmatpush1.msra.mxu0 %v350
        %376 = vmatprep.subr.mxu0 0.0
        %377 = vmatpush1.msra.mxu0 %v351
        %378 = vmatprep.subr.mxu0 0.0
        %379 = vmatpush1.msra.mxu0 %v352
        %380 = vmatprep.subr.mxu0 0.0
        %381 = vmatpush1.msra.mxu0 %v353
        %382 = vmatprep.subr.mxu0 0.0
        %383 = vmatpush1.msra.mxu0 %v354
        %384 = vmatprep.subr.mxu0 0.0
        %385 = vmatpush1.msra.mxu0 %v355
        %386 = vmatprep.subr.mxu0 0.0
        %387 = vmatpush1.msra.mxu0 %v356
        %388 = vmatprep.subr.mxu0 0.0
        %389 = vmatpush1.msra.mxu0 %v357
        %390 = vmatprep.subr.mxu0 0.0
        %391 = vmatpush1.msra.mxu0 %v358
        %392 = vmatprep.subr.mxu0 0.0
        %393 = vmatpush1.msra.mxu0 %v359
        %394 = vmatprep.subr.mxu0 0.0
        %395 = vmatpush1.msra.mxu0 %v360
        %396 = vmatprep.subr.mxu0 0.0
        %397 = vmatpush1.msra.mxu0 %v361
        %398 = vmatprep.subr.mxu0 0.0
        %399 = vmatpush1.msra.mxu0 0.0
        %400 = vmatprep.subr.mxu0 0.0
        %401 = vmatpush1.msra.mxu0 0.0
        %402 = vmatprep.subr.mxu0 0.0
        %403 = vmatpush1.msra.mxu0 0.0
        %404 = vmatprep.subr.mxu0 0.0
        %405 = vmatpush1.msra.mxu0 0.0
        %406 = vmatprep.subr.mxu0 0.0
        %407 = vmatpush1.msra.mxu0 0.0
        %408 = vmatprep.subr.mxu0 0.0
        %409 = vmatpush1.msra.mxu0 0.0
        %410 = vmatprep.subr.mxu0 0.0
        %411 = vmatpush1.msra.mxu0 0.0
        %412 = vmatprep.subr.mxu0 0.0
        %413 = vmatpush1.msra.mxu0 0.0
        %414 = vmatprep.subr.mxu0 0.0
        %415 = vmatpush1.msra.mxu0 0.0
        %416 = vmatprep.subr.mxu0 0.0
        %417 = vmatpush1.msra.mxu0 0.0
        %418 = vmatprep.subr.mxu0 0.0
        %419 = vmatpush1.msra.mxu0 0.0
        %420 = vmatprep.subr.mxu0 0.0
        %421 = vmatpush1.msra.mxu0 0.0
        %422 = vmatprep.subr.mxu0 0.0
        %423 = vmatpush1.msra.mxu0 0.0
        %424 = vmatprep.subr.mxu0 0.0
        %425 = vmatpush1.msra.mxu0 0.0
        %426 = vmatprep.subr.mxu0 0.0
        %427 = vmatpush1.msra.mxu0 0.0
        %428 = vmatprep.subr.mxu0 0.0
        %429 = vmatpush1.msra.mxu0 0.0
        %430 = vmatprep.mubr.f32.mxu0 0.0
        %431 = vmatmul.mubr.f32.gmra.mrb[0].mxu0 %v344
        %v432 = vpop.f32.mrb[0].mxu0
        %v433 = vadd.f32 %v365, %v432
        %v434 = vpop.f32.mrb[0].mxu0
        %435 = vmatprep.mubr.f32.mxu0 0.0
        %436 = vmatmul.mubr.f32.gmra.mrb[0].mxu0 %v345
        %v437 = vpop.f32.mrb[0].mxu0
        %v438 = vadd.f32 %v365, %v437
        %v439 = vpop.f32.mrb[0].mxu0
        %440 = vdwg.mxu0
        %v441 = vld [vmem:[%s3] sm:$0xff]
        %v442 = vld [vmem:[%s3 + $0x8] sm:$0xff]
        %v443 = vld [vmem:[%s3 + $0x10] sm:$0xff]
        %v444 = vld [vmem:[%s3 + $0x18] sm:$0xff]
        %v445 = vld [vmem:[%s3 + $0x20] sm:$0xff]
        %v446 = vld [vmem:[%s3 + $0x28] sm:$0xff]
        %v447 = vld [vmem:[%s3 + $0x30] sm:$0xff]
        %v448 = vld [vmem:[%s3 + $0x38] sm:$0xff]
        %v449 = vld [vmem:[%s3 + $0x40] sm:$0xff]
        %v450 = vld [vmem:[%s3 + $0x48] sm:$0xff]
        %v451 = vld [vmem:[%s3 + $0x50] sm:$0xff]
        %v452 = vld [vmem:[%s3 + $0x58] sm:$0xff]
        %v453 = vld [vmem:[%s3 + $0x60] sm:$0xff]
        %v454 = vld [vmem:[%s3 + $0x68] sm:$0xff]
        %v455 = vld [vmem:[%s3 + $0x70] sm:$0xff]
        %v456 = vld [vmem:[%s3 + $0x78] sm:$0xff]
        %458 = vrot.lane.b32.xlu0 %v365, 96
        %v459 = vpop.permute.xlu0 %458
        %461 = vmatprep.subr.mxu0 0.0
        %462 = vmatpush1.msra.mxu0 %v441
        %463 = vmatprep.subr.mxu0 0.0
        %464 = vmatpush1.msra.mxu0 %v442
        %465 = vmatprep.subr.mxu0 0.0
        %466 = vmatpush1.msra.mxu0 %v443
        %467 = vmatprep.subr.mxu0 0.0
        %468 = vmatpush1.msra.mxu0 %v444
        %469 = vmatprep.subr.mxu0 0.0
        %470 = vmatpush1.msra.mxu0 %v445
        %471 = vmatprep.subr.mxu0 0.0
        %472 = vmatpush1.msra.mxu0 %v446
        %473 = vmatprep.subr.mxu0 0.0
        %474 = vmatpush1.msra.mxu0 %v447
        %475 = vmatprep.subr.mxu0 0.0
        %476 = vmatpush1.msra.mxu0 %v448
        %477 = vmatprep.subr.mxu0 0.0
        %478 = vmatpush1.msra.mxu0 %v449
        %479 = vmatprep.subr.mxu0 0.0
        %480 = vmatpush1.msra.mxu0 %v450
        %481 = vmatprep.subr.mxu0 0.0
        %482 = vmatpush1.msra.mxu0 %v451
        %483 = vmatprep.subr.mxu0 0.0
        %484 = vmatpush1.msra.mxu0 %v452
        %485 = vmatprep.subr.mxu0 0.0
        %486 = vmatpush1.msra.mxu0 %v453
        %487 = vmatprep.subr.mxu0 0.0
        %488 = vmatpush1.msra.mxu0 %v454
        %489 = vmatprep.subr.mxu0 0.0
        %490 = vmatpush1.msra.mxu0 %v455
        %491 = vmatprep.subr.mxu0 0.0
        %492 = vmatpush1.msra.mxu0 %v456
        %493 = vmatprep.subr.mxu0 0.0
        %494 = vmatpush1.msra.mxu0 0.0
        %495 = vmatprep.subr.mxu0 0.0
        %496 = vmatpush1.msra.mxu0 0.0
        %497 = vmatprep.subr.mxu0 0.0
        %498 = vmatpush1.msra.mxu0 0.0
        %499 = vmatprep.subr.mxu0 0.0
        %500 = vmatpush1.msra.mxu0 0.0
        %501 = vmatprep.subr.mxu0 0.0
        %502 = vmatpush1.msra.mxu0 0.0
        %503 = vmatprep.subr.mxu0 0.0
        %504 = vmatpush1.msra.mxu0 0.0
        %505 = vmatprep.subr.mxu0 0.0
        %506 = vmatpush1.msra.mxu0 0.0
        %507 = vmatprep.subr.mxu0 0.0
        %508 = vmatpush1.msra.mxu0 0.0
        %509 = vmatprep.subr.mxu0 0.0
        %510 = vmatpush1.msra.mxu0 0.0
        %511 = vmatprep.subr.mxu0 0.0
        %512 = vmatpush1.msra.mxu0 0.0
        %513 = vmatprep.subr.mxu0 0.0
        %514 = vmatpush1.msra.mxu0 0.0
        %515 = vmatprep.subr.mxu0 0.0
        %516 = vmatpush1.msra.mxu0 0.0
        %517 = vmatprep.subr.mxu0 0.0
        %518 = vmatpush1.msra.mxu0 0.0
        %519 = vmatprep.subr.mxu0 0.0
        %520 = vmatpush1.msra.mxu0 0.0
        %521 = vmatprep.subr.mxu0 0.0
        %522 = vmatpush1.msra.mxu0 0.0
        %523 = vmatprep.subr.mxu0 0.0
        %524 = vmatpush1.msra.mxu0 0.0
        %525 = vmatprep.mubr.f32.mxu0 0.0
        %526 = vmatmul.mubr.f32.gmra.mrb[0].mxu0 %v344
        %v527 = vpop.f32.mrb[0].mxu0
        %v528 = vadd.f32 %v459, %v527
        %v529 = vpop.f32.mrb[0].mxu0
        %530 = vmatprep.mubr.f32.mxu0 0.0
        %531 = vmatmul.mubr.f32.gmra.mrb[0].mxu0 %v345
        %v532 = vpop.f32.mrb[0].mxu0
        %v533 = vadd.f32 %v459, %v532
        %v534 = vpop.f32.mrb[0].mxu0
        %535 = vdwg.mxu0
        %vm536 = vcmask 64512
        %v538 = vsel %vm536, %v433, 0
        %v541 = vsel %vm536, %v438, 0
        %v544 = vsel %vm536, %v528, 0
        %v547 = vsel %vm536, %v533, 0
        %549 = vmatprep.subr.mxu0 0.0
        %550 = vmatpush1.xpose.msra.mxu0 %v544
        %551 = vmatprep.subr.mxu0 0.0
        %552 = vmatpush1.xpose.msra.mxu0 %v547
        %553 = vmatprep.subr.mxu0 0.0
        %554 = vmatpush1.xpose.msra.mxu0 0.0
        %555 = vmatprep.subr.mxu0 0.0
        %556 = vmatpush1.xpose.msra.mxu0 0.0
        %557 = vmatprep.subr.mxu0 0.0
        %558 = vmatpush1.xpose.msra.mxu0 0.0
        %559 = vmatprep.subr.mxu0 0.0
        %560 = vmatpush1.xpose.msra.mxu0 0.0
        %561 = vmatprep.subr.mxu0 0.0
        %562 = vmatpush1.xpose.msra.mxu0 0.0
        %563 = vmatprep.subr.mxu0 0.0
        %564 = vmatpush1.xpose.msra.mxu0 0.0
        %565 = vmatprep.subr.mxu0 0.0
        %566 = vmatpush1.xpose.msra.mxu0 0.0
        %567 = vmatprep.subr.mxu0 0.0
        %568 = vmatpush1.xpose.msra.mxu0 0.0
        %569 = vmatprep.subr.mxu0 0.0
        %570 = vmatpush1.xpose.msra.mxu0 0.0
        %571 = vmatprep.subr.mxu0 0.0
        %572 = vmatpush1.xpose.msra.mxu0 0.0
        %573 = vmatprep.subr.mxu0 0.0
        %574 = vmatpush1.xpose.msra.mxu0 0.0
        %575 = vmatprep.subr.mxu0 0.0
        %576 = vmatpush1.xpose.msra.mxu0 0.0
        %577 = vmatprep.subr.mxu0 0.0
        %578 = vmatpush1.xpose.msra.mxu0 0.0
        %579 = vmatprep.subr.mxu0 0.0
        %580 = vmatpush1.xpose.msra.mxu0 0.0
        %581 = vmatprep.subr.mxu0 0.0
        %582 = vmatpush1.xpose.msra.mxu0 0.0
        %583 = vmatprep.subr.mxu0 0.0
        %584 = vmatpush1.xpose.msra.mxu0 0.0
        %585 = vmatprep.subr.mxu0 0.0
        %586 = vmatpush1.xpose.msra.mxu0 0.0
        %587 = vmatprep.subr.mxu0 0.0
        %588 = vmatpush1.xpose.msra.mxu0 0.0
        %589 = vmatprep.subr.mxu0 0.0
        %590 = vmatpush1.xpose.msra.mxu0 0.0
        %591 = vmatprep.subr.mxu0 0.0
        %592 = vmatpush1.xpose.msra.mxu0 0.0
        %593 = vmatprep.subr.mxu0 0.0
        %594 = vmatpush1.xpose.msra.mxu0 0.0
        %595 = vmatprep.subr.mxu0 0.0
        %596 = vmatpush1.xpose.msra.mxu0 0.0
        %597 = vmatprep.subr.mxu0 0.0
        %598 = vmatpush1.xpose.msra.mxu0 0.0
        %599 = vmatprep.subr.mxu0 0.0
        %600 = vmatpush1.xpose.msra.mxu0 0.0
        %601 = vmatprep.subr.mxu0 0.0
        %602 = vmatpush1.xpose.msra.mxu0 0.0
        %603 = vmatprep.subr.mxu0 0.0
        %604 = vmatpush1.xpose.msra.mxu0 0.0
        %605 = vmatprep.subr.mxu0 0.0
        %606 = vmatpush1.xpose.msra.mxu0 0.0
        %607 = vmatprep.subr.mxu0 0.0
        %608 = vmatpush1.xpose.msra.mxu0 0.0
        %609 = vmatprep.subr.mxu0 0.0
        %610 = vmatpush1.xpose.msra.mxu0 0.0
        %611 = vmatprep.subr.mxu0 0.0
        %612 = vmatpush1.xpose.msra.mxu0 0.0
        %613 = vmatprep.mubr.f32.mxu0 0.0
        %614 = vmatmul.mubr.f32.gmra.mrb[0].mxu0 %v538
        %v615 = vpop.f32.mrb[0].mxu0
        %v616 = vadd.f32 0.0, %v615
        %v617 = vpop.f32.mrb[0].mxu0
        %618 = vmatprep.mubr.f32.mxu0 0.0
        %619 = vmatmul.mubr.f32.gmra.mrb[0].mxu0 %v541
        %v620 = vpop.f32.mrb[0].mxu0
        %v621 = vadd.f32 0.0, %v620
        %v622 = vpop.f32.mrb[0].mxu0
        %623 = vdwg.mxu0
        %vm624 = vcmask 130048
        %v625 = vsel %vm624, %v616, -inf
        %626 = vmax.xlane.f32.xlu0 %v625
        %v627 = vpop.xlane.xlu0 %626
        %v628 = vsel %vm624, %v621, -inf
        %629 = vmax.xlane.f32.xlu0 %v628
        %v630 = vpop.xlane.xlu0 %629
        %v631 = vsub.f32 %v616, %v627
        %v632 = vsub.f32 %v621, %v630
        %v633 = vmul.f32 %v631, 1.442695
        %v634 = vpow.pop %v633
        %v635 = vmul.f32 %v632, 1.442695
        %v636 = vpow.pop %v635
        %v637 = vsel %vm624, %v634, 0.0
        %638 = vadd.xlane.f32.xlu0 %v637
        %v639 = vpop.xlane.xlu0 %638
        %v640 = vsel %vm624, %v636, 0.0
        %641 = vadd.xlane.f32.xlu0 %v640
        %v642 = vpop.xlane.xlu0 %641
        %v643 = vrcp.pop %v639
        %v644 = vrcp.pop %v642
        %v645 = vmul.f32 %v634, %v643
        %v646 = vmul.f32 %v636, %v644
        %647 = vrot.lane.b32.xlu0 %v528, 96
        %v648 = vpop.permute.xlu0 %647
        %649 = vrot.lane.b32.xlu0 %v533, 96
        %v650 = vpop.permute.xlu0 %649
        %v654 = vsel %vm624, %v645, 0
        %v657 = vsel %vm624, %v646, 0
        %659 = vmatprep.subr.mxu0 0.0
        %660 = vmatpush1.msra.mxu0 %v648
        %661 = vmatprep.subr.mxu0 0.0
        %662 = vmatpush1.msra.mxu0 %v650
        %663 = vmatprep.subr.mxu0 0.0
        %664 = vmatpush1.msra.mxu0 0.0
        %665 = vmatprep.subr.mxu0 0.0
        %666 = vmatpush1.msra.mxu0 0.0
        %667 = vmatprep.subr.mxu0 0.0
        %668 = vmatpush1.msra.mxu0 0.0
        %669 = vmatprep.subr.mxu0 0.0
        %670 = vmatpush1.msra.mxu0 0.0
        %671 = vmatprep.subr.mxu0 0.0
        %672 = vmatpush1.msra.mxu0 0.0
        %673 = vmatprep.subr.mxu0 0.0
        %674 = vmatpush1.msra.mxu0 0.0
        %675 = vmatprep.subr.mxu0 0.0
        %676 = vmatpush1.msra.mxu0 0.0
        %677 = vmatprep.subr.mxu0 0.0
        %678 = vmatpush1.msra.mxu0 0.0
        %679 = vmatprep.subr.mxu0 0.0
        %680 = vmatpush1.msra.mxu0 0.0
        %681 = vmatprep.subr.mxu0 0.0
        %682 = vmatpush1.msra.mxu0 0.0
        %683 = vmatprep.subr.mxu0 0.0
        %684 = vmatpush1.msra.mxu0 0.0
        %685 = vmatprep.subr.mxu0 0.0
        %686 = vmatpush1.msra.mxu0 0.0
        %687 = vmatprep.subr.mxu0 0.0
        %688 = vmatpush1.msra.mxu0 0.0
        %689 = vmatprep.subr.mxu0 0.0
        %690 = vmatpush1.msra.mxu0 0.0
        %691 = vmatprep.subr.mxu0 0.0
        %692 = vmatpush1.msra.mxu0 0.0
        %693 = vmatprep.subr.mxu0 0.0
        %694 = vmatpush1.msra.mxu0 0.0
        %695 = vmatprep.subr.mxu0 0.0
        %696 = vmatpush1.msra.mxu0 0.0
        %697 = vmatprep.subr.mxu0 0.0
        %698 = vmatpush1.msra.mxu0 0.0
        %699 = vmatprep.subr.mxu0 0.0
        %700 = vmatpush1.msra.mxu0 0.0
        %701 = vmatprep.subr.mxu0 0.0
        %702 = vmatpush1.msra.mxu0 0.0
        %703 = vmatprep.subr.mxu0 0.0
        %704 = vmatpush1.msra.mxu0 0.0
        %705 = vmatprep.subr.mxu0 0.0
        %706 = vmatpush1.msra.mxu0 0.0
        %707 = vmatprep.subr.mxu0 0.0
        %708 = vmatpush1.msra.mxu0 0.0
        %709 = vmatprep.subr.mxu0 0.0
        %710 = vmatpush1.msra.mxu0 0.0
        %711 = vmatprep.subr.mxu0 0.0
        %712 = vmatpush1.msra.mxu0 0.0
        %713 = vmatprep.subr.mxu0 0.0
        %714 = vmatpush1.msra.mxu0 0.0
        %715 = vmatprep.subr.mxu0 0.0
        %716 = vmatpush1.msra.mxu0 0.0
        %717 = vmatprep.subr.mxu0 0.0
        %718 = vmatpush1.msra.mxu0 0.0
        %719 = vmatprep.subr.mxu0 0.0
        %720 = vmatpush1.msra.mxu0 0.0
        %721 = vmatprep.subr.mxu0 0.0
        %722 = vmatpush1.msra.mxu0 0.0
        %723 = vmatprep.mubr.f32.mxu0 0.0
        %724 = vmatmul.mubr.f32.gmra.mrb[0].mxu0 %v654
        %v725 = vpop.f32.mrb[0].mxu0
        %v726 = vadd.f32 0.0, %v725
        %v727 = vpop.f32.mrb[0].mxu0
        %728 = vmatprep.mubr.f32.mxu0 0.0
        %729 = vmatmul.mubr.f32.gmra.mrb[0].mxu0 %v657
        %v730 = vpop.f32.mrb[0].mxu0
        %v731 = vadd.f32 0.0, %v730
        %v732 = vpop.f32.mrb[0].mxu0
        %733 = vdwg.mxu0
        %734 = vst.msk [vmem:[#allocation2] sm:$0xff] %vm536, %v726
        %735 = vst.msk [vmem:[#allocation2 + $0x8] sm:$0xff] %vm536, %v731
        %736 = vrot.lane.b32.xlu0 %v433, 120
        %v737 = vpop.permute.xlu0 %736
        %738 = vrot.lane.b32.xlu0 %v438, 120
        %v739 = vpop.permute.xlu0 %738
        %740 = vrot.lane.b32.xlu0 %v528, 120
        %v741 = vpop.permute.xlu0 %740
        %742 = vrot.lane.b32.xlu0 %v533, 120
        %v743 = vpop.permute.xlu0 %742
        %v744 = vsel %vm536, %v737, 0
        %v746 = vsel %vm536, %v739, 0
        %v748 = vsel %vm536, %v741, 0
        %v750 = vsel %vm536, %v743, 0
        %752 = vmatprep.subr.mxu0 0.0
        %753 = vmatpush1.xpose.msra.mxu0 %v748
        %754 = vmatprep.subr.mxu0 0.0
        %755 = vmatpush1.xpose.msra.mxu0 %v750
        %756 = vmatprep.subr.mxu0 0.0
        %757 = vmatpush1.xpose.msra.mxu0 0.0
        %758 = vmatprep.subr.mxu0 0.0
        %759 = vmatpush1.xpose.msra.mxu0 0.0
        %760 = vmatprep.subr.mxu0 0.0
        %761 = vmatpush1.xpose.msra.mxu0 0.0
        %762 = vmatprep.subr.mxu0 0.0
        %763 = vmatpush1.xpose.msra.mxu0 0.0
        %764 = vmatprep.subr.mxu0 0.0
        %765 = vmatpush1.xpose.msra.mxu0 0.0
        %766 = vmatprep.subr.mxu0 0.0
        %767 = vmatpush1.xpose.msra.mxu0 0.0
        %768 = vmatprep.subr.mxu0 0.0
        %769 = vmatpush1.xpose.msra.mxu0 0.0
        %770 = vmatprep.subr.mxu0 0.0
        %771 = vmatpush1.xpose.msra.mxu0 0.0
        %772 = vmatprep.subr.mxu0 0.0
        %773 = vmatpush1.xpose.msra.mxu0 0.0
        %774 = vmatprep.subr.mxu0 0.0
        %775 = vmatpush1.xpose.msra.mxu0 0.0
        %776 = vmatprep.subr.mxu0 0.0
        %777 = vmatpush1.xpose.msra.mxu0 0.0
        %778 = vmatprep.subr.mxu0 0.0
        %779 = vmatpush1.xpose.msra.mxu0 0.0
        %780 = vmatprep.subr.mxu0 0.0
        %781 = vmatpush1.xpose.msra.mxu0 0.0
        %782 = vmatprep.subr.mxu0 0.0
        %783 = vmatpush1.xpose.msra.mxu0 0.0
        %784 = vmatprep.subr.mxu0 0.0
        %785 = vmatpush1.xpose.msra.mxu0 0.0
        %786 = vmatprep.subr.mxu0 0.0
        %787 = vmatpush1.xpose.msra.mxu0 0.0
        %788 = vmatprep.subr.mxu0 0.0
        %789 = vmatpush1.xpose.msra.mxu0 0.0
        %790 = vmatprep.subr.mxu0 0.0
        %791 = vmatpush1.xpose.msra.mxu0 0.0
        %792 = vmatprep.subr.mxu0 0.0
        %793 = vmatpush1.xpose.msra.mxu0 0.0
        %794 = vmatprep.subr.mxu0 0.0
        %795 = vmatpush1.xpose.msra.mxu0 0.0
        %796 = vmatprep.subr.mxu0 0.0
        %797 = vmatpush1.xpose.msra.mxu0 0.0
        %798 = vmatprep.subr.mxu0 0.0
        %799 = vmatpush1.xpose.msra.mxu0 0.0
        %800 = vmatprep.subr.mxu0 0.0
        %801 = vmatpush1.xpose.msra.mxu0 0.0
        %802 = vmatprep.subr.mxu0 0.0
        %803 = vmatpush1.xpose.msra.mxu0 0.0
        %804 = vmatprep.subr.mxu0 0.0
        %805 = vmatpush1.xpose.msra.mxu0 0.0
        %806 = vmatprep.subr.mxu0 0.0
        %807 = vmatpush1.xpose.msra.mxu0 0.0
        %808 = vmatprep.subr.mxu0 0.0
        %809 = vmatpush1.xpose.msra.mxu0 0.0
        %810 = vmatprep.subr.mxu0 0.0
        %811 = vmatpush1.xpose.msra.mxu0 0.0
        %812 = vmatprep.subr.mxu0 0.0
        %813 = vmatpush1.xpose.msra.mxu0 0.0
        %814 = vmatprep.subr.mxu0 0.0
        %815 = vmatpush1.xpose.msra.mxu0 0.0
        %816 = vmatprep.mubr.f32.mxu0 0.0
        %817 = vmatmul.mubr.f32.gmra.mrb[0].mxu0 %v744
        %v818 = vpop.f32.mrb[0].mxu0
        %v819 = vadd.f32 0.0, %v818
        %v820 = vpop.f32.mrb[0].mxu0
        %821 = vmatprep.mubr.f32.mxu0 0.0
        %822 = vmatmul.mubr.f32.gmra.mrb[0].mxu0 %v746
        %v823 = vpop.f32.mrb[0].mxu0
        %v824 = vadd.f32 0.0, %v823
        %v825 = vpop.f32.mrb[0].mxu0
        %826 = vdwg.mxu0
        %v827 = vsel %vm624, %v819, -inf
        %828 = vmax.xlane.f32.xlu0 %v827
        %v829 = vpop.xlane.xlu0 %828
        %v830 = vsel %vm624, %v824, -inf
        %831 = vmax.xlane.f32.xlu0 %v830
        %v832 = vpop.xlane.xlu0 %831
        %v833 = vsub.f32 %v819, %v829
        %v834 = vsub.f32 %v824, %v832
        %v835 = vmul.f32 %v833, 1.442695
        %v836 = vpow.pop %v835
        %v837 = vmul.f32 %v834, 1.442695
        %v838 = vpow.pop %v837
        %v839 = vsel %vm624, %v836, 0.0
        %840 = vadd.xlane.f32.xlu0 %v839
        %v841 = vpop.xlane.xlu0 %840
        %v842 = vsel %vm624, %v838, 0.0
        %843 = vadd.xlane.f32.xlu0 %v842
        %v844 = vpop.xlane.xlu0 %843
        %v845 = vrcp.pop %v841
        %v846 = vrcp.pop %v844
        %v847 = vmul.f32 %v836, %v845
        %v848 = vmul.f32 %v838, %v846
        %849 = vrot.lane.b32.xlu0 %v528, 88
        %v850 = vpop.permute.xlu0 %849
        %851 = vrot.lane.b32.xlu0 %v533, 88
        %v852 = vpop.permute.xlu0 %851
        %v856 = vsel %vm624, %v847, 0
        %v859 = vsel %vm624, %v848, 0
        %861 = vmatprep.subr.mxu0 0.0
        %862 = vmatpush1.msra.mxu0 %v850
        %863 = vmatprep.subr.mxu0 0.0
        %864 = vmatpush1.msra.mxu0 %v852
        %865 = vmatprep.subr.mxu0 0.0
        %866 = vmatpush1.msra.mxu0 0.0
        %867 = vmatprep.subr.mxu0 0.0
        %868 = vmatpush1.msra.mxu0 0.0
        %869 = vmatprep.subr.mxu0 0.0
        %870 = vmatpush1.msra.mxu0 0.0
        %871 = vmatprep.subr.mxu0 0.0
        %872 = vmatpush1.msra.mxu0 0.0
        %873 = vmatprep.subr.mxu0 0.0
        %874 = vmatpush1.msra.mxu0 0.0
        %875 = vmatprep.subr.mxu0 0.0
        %876 = vmatpush1.msra.mxu0 0.0
        %877 = vmatprep.subr.mxu0 0.0
        %878 = vmatpush1.msra.mxu0 0.0
        %879 = vmatprep.subr.mxu0 0.0
        %880 = vmatpush1.msra.mxu0 0.0
        %881 = vmatprep.subr.mxu0 0.0
        %882 = vmatpush1.msra.mxu0 0.0
        %883 = vmatprep.subr.mxu0 0.0
        %884 = vmatpush1.msra.mxu0 0.0
        %885 = vmatprep.subr.mxu0 0.0
        %886 = vmatpush1.msra.mxu0 0.0
        %887 = vmatprep.subr.mxu0 0.0
        %888 = vmatpush1.msra.mxu0 0.0
        %889 = vmatprep.subr.mxu0 0.0
        %890 = vmatpush1.msra.mxu0 0.0
        %891 = vmatprep.subr.mxu0 0.0
        %892 = vmatpush1.msra.mxu0 0.0
        %893 = vmatprep.subr.mxu0 0.0
        %894 = vmatpush1.msra.mxu0 0.0
        %895 = vmatprep.subr.mxu0 0.0
        %896 = vmatpush1.msra.mxu0 0.0
        %897 = vmatprep.subr.mxu0 0.0
        %898 = vmatpush1.msra.mxu0 0.0
        %899 = vmatprep.subr.mxu0 0.0
        %900 = vmatpush1.msra.mxu0 0.0
        %901 = vmatprep.subr.mxu0 0.0
        %902 = vmatpush1.msra.mxu0 0.0
        %903 = vmatprep.subr.mxu0 0.0
        %904 = vmatpush1.msra.mxu0 0.0
        %905 = vmatprep.subr.mxu0 0.0
        %906 = vmatpush1.msra.mxu0 0.0
        %907 = vmatprep.subr.mxu0 0.0
        %908 = vmatpush1.msra.mxu0 0.0
        %909 = vmatprep.subr.mxu0 0.0
        %910 = vmatpush1.msra.mxu0 0.0
        %911 = vmatprep.subr.mxu0 0.0
        %912 = vmatpush1.msra.mxu0 0.0
        %913 = vmatprep.subr.mxu0 0.0
        %914 = vmatpush1.msra.mxu0 0.0
        %915 = vmatprep.subr.mxu0 0.0
        %916 = vmatpush1.msra.mxu0 0.0
        %917 = vmatprep.subr.mxu0 0.0
        %918 = vmatpush1.msra.mxu0 0.0
        %919 = vmatprep.subr.mxu0 0.0
        %920 = vmatpush1.msra.mxu0 0.0
        %921 = vmatprep.subr.mxu0 0.0
        %922 = vmatpush1.msra.mxu0 0.0
        %923 = vmatprep.subr.mxu0 0.0
        %924 = vmatpush1.msra.mxu0 0.0
        %925 = vmatprep.mubr.f32.mxu0 0.0
        %926 = vmatmul.mubr.f32.gmra.mrb[0].mxu0 %v856
        %v927 = vpop.f32.mrb[0].mxu0
        %v928 = vadd.f32 0.0, %v927
        %v929 = vpop.f32.mrb[0].mxu0
        %930 = vmatprep.mubr.f32.mxu0 0.0
        %931 = vmatmul.mubr.f32.gmra.mrb[0].mxu0 %v859
        %v932 = vpop.f32.mrb[0].mxu0
        %v933 = vadd.f32 0.0, %v932
        %v934 = vpop.f32.mrb[0].mxu0
        %935 = vdwg.mxu0
        %938 = vrot.lane.b32.xlu0 %v928, 8
        %v939 = vpop.permute.xlu0 %938
        %940 = vrot.lane.b32.xlu0 %v933, 8
        %v941 = vpop.permute.xlu0 %940
        %vm944 = vcmask 130112
        %945 = vst.msk [vmem:[#allocation2] sm:$0xff] %vm944, %v939
        %946 = vst.msk [vmem:[#allocation2 + $0x8] sm:$0xff] %vm944, %v941
        %947 = vrot.lane.b32.xlu0 %v433, 112
        %v948 = vpop.permute.xlu0 %947
        %949 = vrot.lane.b32.xlu0 %v438, 112
        %v950 = vpop.permute.xlu0 %949
        %951 = vrot.lane.b32.xlu0 %v528, 112
        %v952 = vpop.permute.xlu0 %951
        %953 = vrot.lane.b32.xlu0 %v533, 112
        %v954 = vpop.permute.xlu0 %953
        %v955 = vsel %vm536, %v948, 0
        %v957 = vsel %vm536, %v950, 0
        %v959 = vsel %vm536, %v952, 0
        %v961 = vsel %vm536, %v954, 0
        %963 = vmatprep.subr.mxu0 0.0
        %964 = vmatpush1.xpose.msra.mxu0 %v959
        %965 = vmatprep.subr.mxu0 0.0
        %966 = vmatpush1.xpose.msra.mxu0 %v961
        %967 = vmatprep.subr.mxu0 0.0
        %968 = vmatpush1.xpose.msra.mxu0 0.0
        %969 = vmatprep.subr.mxu0 0.0
        %970 = vmatpush1.xpose.msra.mxu0 0.0
        %971 = vmatprep.subr.mxu0 0.0
        %972 = vmatpush1.xpose.msra.mxu0 0.0
        %973 = vmatprep.subr.mxu0 0.0
        %974 = vmatpush1.xpose.msra.mxu0 0.0
        %975 = vmatprep.subr.mxu0 0.0
        %976 = vmatpush1.xpose.msra.mxu0 0.0
        %977 = vmatprep.subr.mxu0 0.0
        %978 = vmatpush1.xpose.msra.mxu0 0.0
        %979 = vmatprep.subr.mxu0 0.0
        %980 = vmatpush1.xpose.msra.mxu0 0.0
        %981 = vmatprep.subr.mxu0 0.0
        %982 = vmatpush1.xpose.msra.mxu0 0.0
        %983 = vmatprep.subr.mxu0 0.0
        %984 = vmatpush1.xpose.msra.mxu0 0.0
        %985 = vmatprep.subr.mxu0 0.0
        %986 = vmatpush1.xpose.msra.mxu0 0.0
        %987 = vmatprep.subr.mxu0 0.0
        %988 = vmatpush1.xpose.msra.mxu0 0.0
        %989 = vmatprep.subr.mxu0 0.0
        %990 = vmatpush1.xpose.msra.mxu0 0.0
        %991 = vmatprep.subr.mxu0 0.0
        %992 = vmatpush1.xpose.msra.mxu0 0.0
        %993 = vmatprep.subr.mxu0 0.0
        %994 = vmatpush1.xpose.msra.mxu0 0.0
        %995 = vmatprep.subr.mxu0 0.0
        %996 = vmatpush1.xpose.msra.mxu0 0.0
        %997 = vmatprep.subr.mxu0 0.0
        %998 = vmatpush1.xpose.msra.mxu0 0.0
        %999 = vmatprep.subr.mxu0 0.0
        %1000 = vmatpush1.xpose.msra.mxu0 0.0
        %1001 = vmatprep.subr.mxu0 0.0
        %1002 = vmatpush1.xpose.msra.mxu0 0.0
        %1003 = vmatprep.subr.mxu0 0.0
        %1004 = vmatpush1.xpose.msra.mxu0 0.0
        %1005 = vmatprep.subr.mxu0 0.0
        %1006 = vmatpush1.xpose.msra.mxu0 0.0
        %1007 = vmatprep.subr.mxu0 0.0
        %1008 = vmatpush1.xpose.msra.mxu0 0.0
        %1009 = vmatprep.subr.mxu0 0.0
        %1010 = vmatpush1.xpose.msra.mxu0 0.0
        %1011 = vmatprep.subr.mxu0 0.0
        %1012 = vmatpush1.xpose.msra.mxu0 0.0
        %1013 = vmatprep.subr.mxu0 0.0
        %1014 = vmatpush1.xpose.msra.mxu0 0.0
        %1015 = vmatprep.subr.mxu0 0.0
        %1016 = vmatpush1.xpose.msra.mxu0 0.0
        %1017 = vmatprep.subr.mxu0 0.0
        %1018 = vmatpush1.xpose.msra.mxu0 0.0
        %1019 = vmatprep.subr.mxu0 0.0
        %1020 = vmatpush1.xpose.msra.mxu0 0.0
        %1021 = vmatprep.subr.mxu0 0.0
        %1022 = vmatpush1.xpose.msra.mxu0 0.0
        %1023 = vmatprep.subr.mxu0 0.0
        %1024 = vmatpush1.xpose.msra.mxu0 0.0
        %1025 = vmatprep.subr.mxu0 0.0
        %1026 = vmatpush1.xpose.msra.mxu0 0.0
        %1027 = vmatprep.mubr.f32.mxu0 0.0
        %1028 = vmatmul.mubr.f32.gmra.mrb[0].mxu0 %v955
        %v1029 = vpop.f32.mrb[0].mxu0
        %v1030 = vadd.f32 0.0, %v1029
        %v1031 = vpop.f32.mrb[0].mxu0
        %1032 = vmatprep.mubr.f32.mxu0 0.0
        %1033 = vmatmul.mubr.f32.gmra.mrb[0].mxu0 %v957
        %v1034 = vpop.f32.mrb[0].mxu0
        %v1035 = vadd.f32 0.0, %v1034
        %v1036 = vpop.f32.mrb[0].mxu0
        %1037 = vdwg.mxu0
        %v1038 = vsel %vm624, %v1030, -inf
        %1039 = vmax.xlane.f32.xlu0 %v1038
        %v1040 = vpop.xlane.xlu0 %1039
        %v1041 = vsel %vm624, %v1035, -inf
        %1042 = vmax.xlane.f32.xlu0 %v1041
        %v1043 = vpop.xlane.xlu0 %1042
        %v1044 = vsub.f32 %v1030, %v1040
        %v1045 = vsub.f32 %v1035, %v1043
        %v1046 = vmul.f32 %v1044, 1.442695
        %v1047 = vpow.pop %v1046
        %v1048 = vmul.f32 %v1045, 1.442695
        %v1049 = vpow.pop %v1048
        %v1050 = vsel %vm624, %v1047, 0.0
        %1051 = vadd.xlane.f32.xlu0 %v1050
        %v1052 = vpop.xlane.xlu0 %1051
        %v1053 = vsel %vm624, %v1049, 0.0
        %1054 = vadd.xlane.f32.xlu0 %v1053
        %v1055 = vpop.xlane.xlu0 %1054
        %v1056 = vrcp.pop %v1052
        %v1057 = vrcp.pop %v1055
        %v1058 = vmul.f32 %v1047, %v1056
        %v1059 = vmul.f32 %v1049, %v1057
        %1060 = vrot.lane.b32.xlu0 %v528, 80
        %v1061 = vpop.permute.xlu0 %1060
        %1062 = vrot.lane.b32.xlu0 %v533, 80
        %v1063 = vpop.permute.xlu0 %1062
        %v1067 = vsel %vm624, %v1058, 0
        %v1070 = vsel %vm624, %v1059, 0
        %1072 = vmatprep.subr.mxu0 0.0
        %1073 = vmatpush1.msra.mxu0 %v1061
        %1074 = vmatprep.subr.mxu0 0.0
        %1075 = vmatpush1.msra.mxu0 %v1063
        %1076 = vmatprep.subr.mxu0 0.0
        %1077 = vmatpush1.msra.mxu0 0.0
        %1078 = vmatprep.subr.mxu0 0.0
        %1079 = vmatpush1.msra.mxu0 0.0
        %1080 = vmatprep.subr.mxu0 0.0
        %1081 = vmatpush1.msra.mxu0 0.0
        %1082 = vmatprep.subr.mxu0 0.0
        %1083 = vmatpush1.msra.mxu0 0.0
        %1084 = vmatprep.subr.mxu0 0.0
        %1085 = vmatpush1.msra.mxu0 0.0
        %1086 = vmatprep.subr.mxu0 0.0
        %1087 = vmatpush1.msra.mxu0 0.0
        %1088 = vmatprep.subr.mxu0 0.0
        %1089 = vmatpush1.msra.mxu0 0.0
        %1090 = vmatprep.subr.mxu0 0.0
        %1091 = vmatpush1.msra.mxu0 0.0
        %1092 = vmatprep.subr.mxu0 0.0
        %1093 = vmatpush1.msra.mxu0 0.0
        %1094 = vmatprep.subr.mxu0 0.0
        %1095 = vmatpush1.msra.mxu0 0.0
        %1096 = vmatprep.subr.mxu0 0.0
        %1097 = vmatpush1.msra.mxu0 0.0
        %1098 = vmatprep.subr.mxu0 0.0
        %1099 = vmatpush1.msra.mxu0 0.0
        %1100 = vmatprep.subr.mxu0 0.0
        %1101 = vmatpush1.msra.mxu0 0.0
        %1102 = vmatprep.subr.mxu0 0.0
        %1103 = vmatpush1.msra.mxu0 0.0
        %1104 = vmatprep.subr.mxu0 0.0
        %1105 = vmatpush1.msra.mxu0 0.0
        %1106 = vmatprep.subr.mxu0 0.0
        %1107 = vmatpush1.msra.mxu0 0.0
        %1108 = vmatprep.subr.mxu0 0.0
        %1109 = vmatpush1.msra.mxu0 0.0
        %1110 = vmatprep.subr.mxu0 0.0
        %1111 = vmatpush1.msra.mxu0 0.0
        %1112 = vmatprep.subr.mxu0 0.0
        %1113 = vmatpush1.msra.mxu0 0.0
        %1114 = vmatprep.subr.mxu0 0.0
        %1115 = vmatpush1.msra.mxu0 0.0
        %1116 = vmatprep.subr.mxu0 0.0
        %1117 = vmatpush1.msra.mxu0 0.0
        %1118 = vmatprep.subr.mxu0 0.0
        %1119 = vmatpush1.msra.mxu0 0.0
        %1120 = vmatprep.subr.mxu0 0.0
        %1121 = vmatpush1.msra.mxu0 0.0
        %1122 = vmatprep.subr.mxu0 0.0
        %1123 = vmatpush1.msra.mxu0 0.0
        %1124 = vmatprep.subr.mxu0 0.0
        %1125 = vmatpush1.msra.mxu0 0.0
        %1126 = vmatprep.subr.mxu0 0.0
        %1127 = vmatpush1.msra.mxu0 0.0
        %1128 = vmatprep.subr.mxu0 0.0
        %1129 = vmatpush1.msra.mxu0 0.0
        %1130 = vmatprep.subr.mxu0 0.0
        %1131 = vmatpush1.msra.mxu0 0.0
        %1132 = vmatprep.subr.mxu0 0.0
        %1133 = vmatpush1.msra.mxu0 0.0
        %1134 = vmatprep.subr.mxu0 0.0
        %1135 = vmatpush1.msra.mxu0 0.0
        %1136 = vmatprep.mubr.f32.mxu0 0.0
        %1137 = vmatmul.mubr.f32.gmra.mrb[0].mxu0 %v1067
        %v1138 = vpop.f32.mrb[0].mxu0
        %v1139 = vadd.f32 0.0, %v1138
        %v1140 = vpop.f32.mrb[0].mxu0
        %1141 = vmatprep.mubr.f32.mxu0 0.0
        %1142 = vmatmul.mubr.f32.gmra.mrb[0].mxu0 %v1070
        %v1143 = vpop.f32.mrb[0].mxu0
        %v1144 = vadd.f32 0.0, %v1143
        %v1145 = vpop.f32.mrb[0].mxu0
        %1146 = vdwg.mxu0
        %1149 = vrot.lane.b32.xlu0 %v1139, 16
        %v1150 = vpop.permute.xlu0 %1149
        %1151 = vrot.lane.b32.xlu0 %v1144, 16
        %v1152 = vpop.permute.xlu0 %1151
        %vm1155 = vcmask 195712
        %1156 = vst.msk [vmem:[#allocation2] sm:$0xff] %vm1155, %v1150
        %1157 = vst.msk [vmem:[#allocation2 + $0x8] sm:$0xff] %vm1155, %v1152
        %1158 = vrot.lane.b32.xlu0 %v433, 104
        %v1159 = vpop.permute.xlu0 %1158
        %1160 = vrot.lane.b32.xlu0 %v438, 104
        %v1161 = vpop.permute.xlu0 %1160
        %1162 = vrot.lane.b32.xlu0 %v528, 104
        %v1163 = vpop.permute.xlu0 %1162
        %1164 = vrot.lane.b32.xlu0 %v533, 104
        %v1165 = vpop.permute.xlu0 %1164
        %v1166 = vsel %vm536, %v1159, 0
        %v1168 = vsel %vm536, %v1161, 0
        %v1170 = vsel %vm536, %v1163, 0
        %v1172 = vsel %vm536, %v1165, 0
        %1174 = vmatprep.subr.mxu0 0.0
        %1175 = vmatpush1.xpose.msra.mxu0 %v1170
        %1176 = vmatprep.subr.mxu0 0.0
        %1177 = vmatpush1.xpose.msra.mxu0 %v1172
        %1178 = vmatprep.subr.mxu0 0.0
        %1179 = vmatpush1.xpose.msra.mxu0 0.0
        %1180 = vmatprep.subr.mxu0 0.0
        %1181 = vmatpush1.xpose.msra.mxu0 0.0
        %1182 = vmatprep.subr.mxu0 0.0
        %1183 = vmatpush1.xpose.msra.mxu0 0.0
        %1184 = vmatprep.subr.mxu0 0.0
        %1185 = vmatpush1.xpose.msra.mxu0 0.0
        %1186 = vmatprep.subr.mxu0 0.0
        %1187 = vmatpush1.xpose.msra.mxu0 0.0
        %1188 = vmatprep.subr.mxu0 0.0
        %1189 = vmatpush1.xpose.msra.mxu0 0.0
        %1190 = vmatprep.subr.mxu0 0.0
        %1191 = vmatpush1.xpose.msra.mxu0 0.0
        %1192 = vmatprep.subr.mxu0 0.0
        %1193 = vmatpush1.xpose.msra.mxu0 0.0
        %1194 = vmatprep.subr.mxu0 0.0
        %1195 = vmatpush1.xpose.msra.mxu0 0.0
        %1196 = vmatprep.subr.mxu0 0.0
        %1197 = vmatpush1.xpose.msra.mxu0 0.0
        %1198 = vmatprep.subr.mxu0 0.0
        %1199 = vmatpush1.xpose.msra.mxu0 0.0
        %1200 = vmatprep.subr.mxu0 0.0
        %1201 = vmatpush1.xpose.msra.mxu0 0.0
        %1202 = vmatprep.subr.mxu0 0.0
        %1203 = vmatpush1.xpose.msra.mxu0 0.0
        %1204 = vmatprep.subr.mxu0 0.0
        %1205 = vmatpush1.xpose.msra.mxu0 0.0
        %1206 = vmatprep.subr.mxu0 0.0
        %1207 = vmatpush1.xpose.msra.mxu0 0.0
        %1208 = vmatprep.subr.mxu0 0.0
        %1209 = vmatpush1.xpose.msra.mxu0 0.0
        %1210 = vmatprep.subr.mxu0 0.0
        %1211 = vmatpush1.xpose.msra.mxu0 0.0
        %1212 = vmatprep.subr.mxu0 0.0
        %1213 = vmatpush1.xpose.msra.mxu0 0.0
        %1214 = vmatprep.subr.mxu0 0.0
        %1215 = vmatpush1.xpose.msra.mxu0 0.0
        %1216 = vmatprep.subr.mxu0 0.0
        %1217 = vmatpush1.xpose.msra.mxu0 0.0
        %1218 = vmatprep.subr.mxu0 0.0
        %1219 = vmatpush1.xpose.msra.mxu0 0.0
        %1220 = vmatprep.subr.mxu0 0.0
        %1221 = vmatpush1.xpose.msra.mxu0 0.0
        %1222 = vmatprep.subr.mxu0 0.0
        %1223 = vmatpush1.xpose.msra.mxu0 0.0
        %1224 = vmatprep.subr.mxu0 0.0
        %1225 = vmatpush1.xpose.msra.mxu0 0.0
        %1226 = vmatprep.subr.mxu0 0.0
        %1227 = vmatpush1.xpose.msra.mxu0 0.0
        %1228 = vmatprep.subr.mxu0 0.0
        %1229 = vmatpush1.xpose.msra.mxu0 0.0
        %1230 = vmatprep.subr.mxu0 0.0
        %1231 = vmatpush1.xpose.msra.mxu0 0.0
        %1232 = vmatprep.subr.mxu0 0.0
        %1233 = vmatpush1.xpose.msra.mxu0 0.0
        %1234 = vmatprep.subr.mxu0 0.0
        %1235 = vmatpush1.xpose.msra.mxu0 0.0
        %1236 = vmatprep.subr.mxu0 0.0
        %1237 = vmatpush1.xpose.msra.mxu0 0.0
        %1238 = vmatprep.mubr.f32.mxu0 0.0
        %1239 = vmatmul.mubr.f32.gmra.mrb[0].mxu0 %v1166
        %v1240 = vpop.f32.mrb[0].mxu0
        %v1241 = vadd.f32 0.0, %v1240
        %v1242 = vpop.f32.mrb[0].mxu0
        %1243 = vmatprep.mubr.f32.mxu0 0.0
        %1244 = vmatmul.mubr.f32.gmra.mrb[0].mxu0 %v1168
        %v1245 = vpop.f32.mrb[0].mxu0
        %v1246 = vadd.f32 0.0, %v1245
        %v1247 = vpop.f32.mrb[0].mxu0
        %1248 = vdwg.mxu0
        %v1249 = vsel %vm624, %v1241, -inf
        %1250 = vmax.xlane.f32.xlu0 %v1249
        %v1251 = vpop.xlane.xlu0 %1250
        %v1252 = vsel %vm624, %v1246, -inf
        %1253 = vmax.xlane.f32.xlu0 %v1252
        %v1254 = vpop.xlane.xlu0 %1253
        %v1255 = vsub.f32 %v1241, %v1251
        %v1256 = vsub.f32 %v1246, %v1254
        %v1257 = vmul.f32 %v1255, 1.442695
        %v1258 = vpow.pop %v1257
        %v1259 = vmul.f32 %v1256, 1.442695
        %v1260 = vpow.pop %v1259
        %v1261 = vsel %vm624, %v1258, 0.0
        %1262 = vadd.xlane.f32.xlu0 %v1261
        %v1263 = vpop.xlane.xlu0 %1262
        %v1264 = vsel %vm624, %v1260, 0.0
        %1265 = vadd.xlane.f32.xlu0 %v1264
        %v1266 = vpop.xlane.xlu0 %1265
        %v1267 = vrcp.pop %v1263
        %v1268 = vrcp.pop %v1266
        %v1269 = vmul.f32 %v1258, %v1267
        %v1270 = vmul.f32 %v1260, %v1268
        %1271 = vrot.lane.b32.xlu0 %v528, 72
        %v1272 = vpop.permute.xlu0 %1271
        %1273 = vrot.lane.b32.xlu0 %v533, 72
        %v1274 = vpop.permute.xlu0 %1273
        %v1278 = vsel %vm624, %v1269, 0
        %v1281 = vsel %vm624, %v1270, 0
        %1283 = vmatprep.subr.mxu0 0.0
        %1284 = vmatpush1.msra.mxu0 %v1272
        %1285 = vmatprep.subr.mxu0 0.0
        %1286 = vmatpush1.msra.mxu0 %v1274
        %1287 = vmatprep.subr.mxu0 0.0
        %1288 = vmatpush1.msra.mxu0 0.0
        %1289 = vmatprep.subr.mxu0 0.0
        %1290 = vmatpush1.msra.mxu0 0.0
        %1291 = vmatprep.subr.mxu0 0.0
        %1292 = vmatpush1.msra.mxu0 0.0
        %1293 = vmatprep.subr.mxu0 0.0
        %1294 = vmatpush1.msra.mxu0 0.0
        %1295 = vmatprep.subr.mxu0 0.0
        %1296 = vmatpush1.msra.mxu0 0.0
        %1297 = vmatprep.subr.mxu0 0.0
        %1298 = vmatpush1.msra.mxu0 0.0
        %1299 = vmatprep.subr.mxu0 0.0
        %1300 = vmatpush1.msra.mxu0 0.0
        %1301 = vmatprep.subr.mxu0 0.0
        %1302 = vmatpush1.msra.mxu0 0.0
        %1303 = vmatprep.subr.mxu0 0.0
        %1304 = vmatpush1.msra.mxu0 0.0
        %1305 = vmatprep.subr.mxu0 0.0
        %1306 = vmatpush1.msra.mxu0 0.0
        %1307 = vmatprep.subr.mxu0 0.0
        %1308 = vmatpush1.msra.mxu0 0.0
        %1309 = vmatprep.subr.mxu0 0.0
        %1310 = vmatpush1.msra.mxu0 0.0
        %1311 = vmatprep.subr.mxu0 0.0
        %1312 = vmatpush1.msra.mxu0 0.0
        %1313 = vmatprep.subr.mxu0 0.0
        %1314 = vmatpush1.msra.mxu0 0.0
        %1315 = vmatprep.subr.mxu0 0.0
        %1316 = vmatpush1.msra.mxu0 0.0
        %1317 = vmatprep.subr.mxu0 0.0
        %1318 = vmatpush1.msra.mxu0 0.0
        %1319 = vmatprep.subr.mxu0 0.0
        %1320 = vmatpush1.msra.mxu0 0.0
        %1321 = vmatprep.subr.mxu0 0.0
        %1322 = vmatpush1.msra.mxu0 0.0
        %1323 = vmatprep.subr.mxu0 0.0
        %1324 = vmatpush1.msra.mxu0 0.0
        %1325 = vmatprep.subr.mxu0 0.0
        %1326 = vmatpush1.msra.mxu0 0.0
        %1327 = vmatprep.subr.mxu0 0.0
        %1328 = vmatpush1.msra.mxu0 0.0
        %1329 = vmatprep.subr.mxu0 0.0
        %1330 = vmatpush1.msra.mxu0 0.0
        %1331 = vmatprep.subr.mxu0 0.0
        %1332 = vmatpush1.msra.mxu0 0.0
        %1333 = vmatprep.subr.mxu0 0.0
        %1334 = vmatpush1.msra.mxu0 0.0
        %1335 = vmatprep.subr.mxu0 0.0
        %1336 = vmatpush1.msra.mxu0 0.0
        %1337 = vmatprep.subr.mxu0 0.0
        %1338 = vmatpush1.msra.mxu0 0.0
        %1339 = vmatprep.subr.mxu0 0.0
        %1340 = vmatpush1.msra.mxu0 0.0
        %1341 = vmatprep.subr.mxu0 0.0
        %1342 = vmatpush1.msra.mxu0 0.0
        %1343 = vmatprep.subr.mxu0 0.0
        %1344 = vmatpush1.msra.mxu0 0.0
        %1345 = vmatprep.subr.mxu0 0.0
        %1346 = vmatpush1.msra.mxu0 0.0
        %1347 = vmatprep.mubr.f32.mxu0 0.0
        %1348 = vmatmul.mubr.f32.gmra.mrb[0].mxu0 %v1278
        %v1349 = vpop.f32.mrb[0].mxu0
        %v1350 = vadd.f32 0.0, %v1349
        %v1351 = vpop.f32.mrb[0].mxu0
        %1352 = vmatprep.mubr.f32.mxu0 0.0
        %1353 = vmatmul.mubr.f32.gmra.mrb[0].mxu0 %v1281
        %v1354 = vpop.f32.mrb[0].mxu0
        %v1355 = vadd.f32 0.0, %v1354
        %v1356 = vpop.f32.mrb[0].mxu0
        %1357 = vdwg.mxu0
        %1360 = vrot.lane.b32.xlu0 %v1350, 24
        %v1361 = vpop.permute.xlu0 %1360
        %1362 = vrot.lane.b32.xlu0 %v1355, 24
        %v1363 = vpop.permute.xlu0 %1362
        %vm1366 = vcmask 261312
        %1367 = vst.msk [vmem:[#allocation2] sm:$0xff] %vm1366, %v1361
        %1368 = vst.msk [vmem:[#allocation2 + $0x8] sm:$0xff] %vm1366, %v1363
        %v1369 = vld [vmem:[#allocation2] sm:$0xff]
        %v1370 = vld [vmem:[#allocation2 + $0x8] sm:$0xff]
        %v1371 = vld [vmem:[#allocation6] sm:$0xff]
        %v1372 = vld [vmem:[#allocation6 + $0x8] sm:$0xff]
        %v1373 = vld [vmem:[#allocation6 + $0x10] sm:$0xff]
        %v1374 = vld [vmem:[#allocation6 + $0x18] sm:$0xff]
        %v1375 = vlaneseq
        %v1376 = vshrl.u32 %v1375, 7
        %v1377 = vsub.s32 2, %v1376
        %v1378 = vrot.slane %v305, %v1377
        %vm1379 = vcmask 261120
        %v1381 = vsel %vm1379, %v1369, 0
        %v1384 = vsel %vm1379, %v1370, 0
        %1386 = vmatprep.subr.mxu0 0.0
        %1387 = vmatpush1.msra.mxu0 %v1371
        %1388 = vmatprep.subr.mxu0 0.0
        %1389 = vmatpush1.msra.mxu0 %v1372
        %1390 = vmatprep.subr.mxu0 0.0
        %1391 = vmatpush1.msra.mxu0 %v1373
        %1392 = vmatprep.subr.mxu0 0.0
        %1393 = vmatpush1.msra.mxu0 %v1374
        %1394 = vmatprep.subr.mxu0 0.0
        %1395 = vmatpush1.msra.mxu0 0.0
        %1396 = vmatprep.subr.mxu0 0.0
        %1397 = vmatpush1.msra.mxu0 0.0
        %1398 = vmatprep.subr.mxu0 0.0
        %1399 = vmatpush1.msra.mxu0 0.0
        %1400 = vmatprep.subr.mxu0 0.0
        %1401 = vmatpush1.msra.mxu0 0.0
        %1402 = vmatprep.subr.mxu0 0.0
        %1403 = vmatpush1.msra.mxu0 0.0
        %1404 = vmatprep.subr.mxu0 0.0
        %1405 = vmatpush1.msra.mxu0 0.0
        %1406 = vmatprep.subr.mxu0 0.0
        %1407 = vmatpush1.msra.mxu0 0.0
        %1408 = vmatprep.subr.mxu0 0.0
        %1409 = vmatpush1.msra.mxu0 0.0
        %1410 = vmatprep.subr.mxu0 0.0
        %1411 = vmatpush1.msra.mxu0 0.0
        %1412 = vmatprep.subr.mxu0 0.0
        %1413 = vmatpush1.msra.mxu0 0.0
        %1414 = vmatprep.subr.mxu0 0.0
        %1415 = vmatpush1.msra.mxu0 0.0
        %1416 = vmatprep.subr.mxu0 0.0
        %1417 = vmatpush1.msra.mxu0 0.0
        %1418 = vmatprep.subr.mxu0 0.0
        %1419 = vmatpush1.msra.mxu0 0.0
        %1420 = vmatprep.subr.mxu0 0.0
        %1421 = vmatpush1.msra.mxu0 0.0
        %1422 = vmatprep.subr.mxu0 0.0
        %1423 = vmatpush1.msra.mxu0 0.0
        %1424 = vmatprep.subr.mxu0 0.0
        %1425 = vmatpush1.msra.mxu0 0.0
        %1426 = vmatprep.subr.mxu0 0.0
        %1427 = vmatpush1.msra.mxu0 0.0
        %1428 = vmatprep.subr.mxu0 0.0
        %1429 = vmatpush1.msra.mxu0 0.0
        %1430 = vmatprep.subr.mxu0 0.0
        %1431 = vmatpush1.msra.mxu0 0.0
        %1432 = vmatprep.subr.mxu0 0.0
        %1433 = vmatpush1.msra.mxu0 0.0
        %1434 = vmatprep.subr.mxu0 0.0
        %1435 = vmatpush1.msra.mxu0 0.0
        %1436 = vmatprep.subr.mxu0 0.0
        %1437 = vmatpush1.msra.mxu0 0.0
        %1438 = vmatprep.subr.mxu0 0.0
        %1439 = vmatpush1.msra.mxu0 0.0
        %1440 = vmatprep.subr.mxu0 0.0
        %1441 = vmatpush1.msra.mxu0 0.0
        %1442 = vmatprep.subr.mxu0 0.0
        %1443 = vmatpush1.msra.mxu0 0.0
        %1444 = vmatprep.subr.mxu0 0.0
        %1445 = vmatpush1.msra.mxu0 0.0
        %1446 = vmatprep.subr.mxu0 0.0
        %1447 = vmatpush1.msra.mxu0 0.0
        %1448 = vmatprep.subr.mxu0 0.0
        %1449 = vmatpush1.msra.mxu0 0.0
        %1450 = vmatprep.mubr.f32.mxu0 0.0
        %1451 = vmatmul.mubr.f32.gmra.mrb[0].mxu0 %v1381
        %v1452 = vpop.f32.mrb[0].mxu0
        %v1453 = vadd.f32 %v1378, %v1452
        %v1454 = vpop.f32.mrb[0].mxu0
        %1455 = vmatprep.mubr.f32.mxu0 0.0
        %1456 = vmatmul.mubr.f32.gmra.mrb[0].mxu0 %v1384
        %v1457 = vpop.f32.mrb[0].mxu0
        %v1458 = vadd.f32 %v1378, %v1457
        %v1459 = vpop.f32.mrb[0].mxu0
        %1460 = vdwg.mxu0
        %v1461 = vadd.f32 %v1453, %v306
        %v1462 = vadd.f32 %v1458, %v307
        %1463 = vadd.xlane.f32.xlu0 %v1461
        %v1464 = vpop.xlane.xlu0 %1463
        %1465 = vadd.xlane.f32.xlu0 %v1462
        %v1466 = vpop.xlane.xlu0 %1465
        %v1467 = vmul.f32 %v1464, 0.03125
        %v1468 = vmul.f32 %v1466, 0.03125
        %v1469 = vmul.f32 %v1461, %v1461
        %v1470 = vmul.f32 %v1462, %v1462
        %1471 = vadd.xlane.f32.xlu0 %v1469
        %v1472 = vpop.xlane.xlu0 %1471
        %1473 = vadd.xlane.f32.xlu0 %v1470
        %v1474 = vpop.xlane.xlu0 %1473
        %v1475 = vmul.f32 %v1472, 0.03125
        %v1476 = vmul.f32 %v1474, 0.03125
        %v1477 = vmul.f32 %v1467, %v1467
        %v1478 = vmul.f32 %v1468, %v1468
        %v1479 = vsub.f32 %v1475, %v1477
        %v1480 = vsub.f32 %v1476, %v1478
        %v1481 = vsub.f32 %v1461, %v1467
        %v1482 = vsub.f32 %v1462, %v1468
        %v1483 = vadd.f32 %v1479, 1e-05
        %v1484 = vadd.f32 %v1480, 1e-05
        %v1485 = vrsqrt.pop %v1483
        %v1486 = vrsqrt.pop %v1484
        %v1487 = vmul.f32 %v1481, %v1485
        %v1488 = vmul.f32 %v1482, %v1486
        %v1489 = vlaneseq
        %v1490 = vshrl.u32 %v1489, 7
        %v1491 = vsub.s32 3, %v1490
        %v1492 = vrot.slane %v305, %v1491
        %v1493 = vmul.f32 %v1487, %v1492
        %v1494 = vmul.f32 %v1488, %v1492
        %v1495 = vlaneseq
        %v1496 = vshrl.u32 %v1495, 7
        %v1497 = vsub.s32 4, %v1496
        %v1498 = vrot.slane %v305, %v1497
        %v1499 = vadd.f32 %v1493, %v1498
        %v1500 = vadd.f32 %v1494, %v1498
        %v1501 = vld [vmem:[%s5] sm:$0xff]
        %v1502 = vld [vmem:[%s5 + $0x8] sm:$0xff]
        %v1503 = vld [vmem:[%s5 + $0x10] sm:$0xff]
        %v1504 = vld [vmem:[%s5 + $0x18] sm:$0xff]
        %v1505 = vld [vmem:[%s5 + $0x20] sm:$0xff]
        %v1506 = vld [vmem:[%s5 + $0x28] sm:$0xff]
        %v1507 = vld [vmem:[%s5 + $0x30] sm:$0xff]
        %v1508 = vld [vmem:[%s5 + $0x38] sm:$0xff]
        %v1509 = vld [vmem:[%s5 + $0x40] sm:$0xff]
        %v1510 = vld [vmem:[%s5 + $0x48] sm:$0xff]
        %v1511 = vld [vmem:[%s5 + $0x50] sm:$0xff]
        %v1512 = vld [vmem:[%s5 + $0x58] sm:$0xff]
        %v1513 = vld [vmem:[%s5 + $0x60] sm:$0xff]
        %v1514 = vld [vmem:[%s5 + $0x68] sm:$0xff]
        %v1515 = vld [vmem:[%s5 + $0x70] sm:$0xff]
        %v1516 = vld [vmem:[%s5 + $0x78] sm:$0xff]
        %v1517 = vlaneseq
        %v1518 = vshrl.u32 %v1517, 7
        %v1519 = vsub.s32 5, %v1518
        %v1520 = vrot.slane %v305, %v1519
        %1521 = vmatprep.subr.mxu0 0.0
        %1522 = vmatpush1.msra.mxu0 %v1501
        %1523 = vmatprep.subr.mxu0 0.0
        %1524 = vmatpush1.msra.mxu0 %v1502
        %1525 = vmatprep.subr.mxu0 0.0
        %1526 = vmatpush1.msra.mxu0 %v1503
        %1527 = vmatprep.subr.mxu0 0.0
        %1528 = vmatpush1.msra.mxu0 %v1504
        %1529 = vmatprep.subr.mxu0 0.0
        %1530 = vmatpush1.msra.mxu0 %v1505
        %1531 = vmatprep.subr.mxu0 0.0
        %1532 = vmatpush1.msra.mxu0 %v1506
        %1533 = vmatprep.subr.mxu0 0.0
        %1534 = vmatpush1.msra.mxu0 %v1507
        %1535 = vmatprep.subr.mxu0 0.0
        %1536 = vmatpush1.msra.mxu0 %v1508
        %1537 = vmatprep.subr.mxu0 0.0
        %1538 = vmatpush1.msra.mxu0 %v1509
        %1539 = vmatprep.subr.mxu0 0.0
        %1540 = vmatpush1.msra.mxu0 %v1510
        %1541 = vmatprep.subr.mxu0 0.0
        %1542 = vmatpush1.msra.mxu0 %v1511
        %1543 = vmatprep.subr.mxu0 0.0
        %1544 = vmatpush1.msra.mxu0 %v1512
        %1545 = vmatprep.subr.mxu0 0.0
        %1546 = vmatpush1.msra.mxu0 %v1513
        %1547 = vmatprep.subr.mxu0 0.0
        %1548 = vmatpush1.msra.mxu0 %v1514
        %1549 = vmatprep.subr.mxu0 0.0
        %1550 = vmatpush1.msra.mxu0 %v1515
        %1551 = vmatprep.subr.mxu0 0.0
        %1552 = vmatpush1.msra.mxu0 %v1516
        %1553 = vmatprep.subr.mxu0 0.0
        %1554 = vmatpush1.msra.mxu0 0.0
        %1555 = vmatprep.subr.mxu0 0.0
        %1556 = vmatpush1.msra.mxu0 0.0
        %1557 = vmatprep.subr.mxu0 0.0
        %1558 = vmatpush1.msra.mxu0 0.0
        %1559 = vmatprep.subr.mxu0 0.0
        %1560 = vmatpush1.msra.mxu0 0.0
        %1561 = vmatprep.subr.mxu0 0.0
        %1562 = vmatpush1.msra.mxu0 0.0
        %1563 = vmatprep.subr.mxu0 0.0
        %1564 = vmatpush1.msra.mxu0 0.0
        %1565 = vmatprep.subr.mxu0 0.0
        %1566 = vmatpush1.msra.mxu0 0.0
        %1567 = vmatprep.subr.mxu0 0.0
        %1568 = vmatpush1.msra.mxu0 0.0
        %1569 = vmatprep.subr.mxu0 0.0
        %1570 = vmatpush1.msra.mxu0 0.0
        %1571 = vmatprep.subr.mxu0 0.0
        %1572 = vmatpush1.msra.mxu0 0.0
        %1573 = vmatprep.subr.mxu0 0.0
        %1574 = vmatpush1.msra.mxu0 0.0
        %1575 = vmatprep.subr.mxu0 0.0
        %1576 = vmatpush1.msra.mxu0 0.0
        %1577 = vmatprep.subr.mxu0 0.0
        %1578 = vmatpush1.msra.mxu0 0.0
        %1579 = vmatprep.subr.mxu0 0.0
        %1580 = vmatpush1.msra.mxu0 0.0
        %1581 = vmatprep.subr.mxu0 0.0
        %1582 = vmatpush1.msra.mxu0 0.0
        %1583 = vmatprep.subr.mxu0 0.0
        %1584 = vmatpush1.msra.mxu0 0.0
        %1585 = vmatprep.mubr.f32.mxu0 0.0
        %1586 = vmatmul.mubr.f32.gmra.mrb[0].mxu0 %v1499
        %v1587 = vpop.f32.mrb[0].mxu0
        %v1588 = vadd.f32 %v1520, %v1587
        %v1589 = vpop.f32.mrb[0].mxu0
        %1590 = vmatprep.mubr.f32.mxu0 0.0
        %1591 = vmatmul.mubr.f32.gmra.mrb[0].mxu0 %v1500
        %v1592 = vpop.f32.mrb[0].mxu0
        %v1593 = vadd.f32 %v1520, %v1592
        %v1594 = vpop.f32.mrb[0].mxu0
        %1595 = vdwg.mxu0
        %v1596 = vmul.f32 %v1588, 0.5
        %v1597 = vmul.f32 %v1593, 0.5
        %v1598 = vmul.f32 %v1588, 0.70710677
        %v1599 = vmul.f32 %v1593, 0.70710677
        %v1600 = verf.f32.pop %v1598
        %v1601 = verf.f32.pop %v1599
        %v1602 = vadd.f32 %v1600, 1.0
        %v1603 = vadd.f32 %v1601, 1.0
        %v1604 = vmul.f32 %v1596, %v1602
        %v1605 = vmul.f32 %v1597, %v1603
        %v1606 = vld [vmem:[%s6] sm:$0xff]
        %v1607 = vld [vmem:[%s6 + $0x8] sm:$0xff]
        %v1608 = vld [vmem:[%s6 + $0x10] sm:$0xff]
        %v1609 = vld [vmem:[%s6 + $0x18] sm:$0xff]
        %v1610 = vld [vmem:[%s6 + $0x20] sm:$0xff]
        %v1611 = vld [vmem:[%s6 + $0x28] sm:$0xff]
        %v1612 = vld [vmem:[%s6 + $0x30] sm:$0xff]
        %v1613 = vld [vmem:[%s6 + $0x38] sm:$0xff]
        %v1614 = vld [vmem:[%s6 + $0x40] sm:$0xff]
        %v1615 = vld [vmem:[%s6 + $0x48] sm:$0xff]
        %v1616 = vld [vmem:[%s6 + $0x50] sm:$0xff]
        %v1617 = vld [vmem:[%s6 + $0x58] sm:$0xff]
        %v1618 = vld [vmem:[%s6 + $0x60] sm:$0xff]
        %v1619 = vld [vmem:[%s6 + $0x68] sm:$0xff]
        %v1620 = vld [vmem:[%s6 + $0x70] sm:$0xff]
        %v1621 = vld [vmem:[%s6 + $0x78] sm:$0xff]
        %v1622 = vlaneseq
        %v1623 = vshrl.u32 %v1622, 7
        %v1624 = vsub.s32 6, %v1623
        %v1625 = vrot.slane %v305, %v1624
        %1626 = vmatprep.subr.mxu0 0.0
        %1627 = vmatpush1.msra.mxu0 %v1606
        %1628 = vmatprep.subr.mxu0 0.0
        %1629 = vmatpush1.msra.mxu0 %v1607
        %1630 = vmatprep.subr.mxu0 0.0
        %1631 = vmatpush1.msra.mxu0 %v1608
        %1632 = vmatprep.subr.mxu0 0.0
        %1633 = vmatpush1.msra.mxu0 %v1609
        %1634 = vmatprep.subr.mxu0 0.0
        %1635 = vmatpush1.msra.mxu0 %v1610
        %1636 = vmatprep.subr.mxu0 0.0
        %1637 = vmatpush1.msra.mxu0 %v1611
        %1638 = vmatprep.subr.mxu0 0.0
        %1639 = vmatpush1.msra.mxu0 %v1612
        %1640 = vmatprep.subr.mxu0 0.0
        %1641 = vmatpush1.msra.mxu0 %v1613
        %1642 = vmatprep.subr.mxu0 0.0
        %1643 = vmatpush1.msra.mxu0 %v1614
        %1644 = vmatprep.subr.mxu0 0.0
        %1645 = vmatpush1.msra.mxu0 %v1615
        %1646 = vmatprep.subr.mxu0 0.0
        %1647 = vmatpush1.msra.mxu0 %v1616
        %1648 = vmatprep.subr.mxu0 0.0
        %1649 = vmatpush1.msra.mxu0 %v1617
        %1650 = vmatprep.subr.mxu0 0.0
        %1651 = vmatpush1.msra.mxu0 %v1618
        %1652 = vmatprep.subr.mxu0 0.0
        %1653 = vmatpush1.msra.mxu0 %v1619
        %1654 = vmatprep.subr.mxu0 0.0
        %1655 = vmatpush1.msra.mxu0 %v1620
        %1656 = vmatprep.subr.mxu0 0.0
        %1657 = vmatpush1.msra.mxu0 %v1621
        %1658 = vmatprep.subr.mxu0 0.0
        %1659 = vmatpush1.msra.mxu0 0.0
        %1660 = vmatprep.subr.mxu0 0.0
        %1661 = vmatpush1.msra.mxu0 0.0
        %1662 = vmatprep.subr.mxu0 0.0
        %1663 = vmatpush1.msra.mxu0 0.0
        %1664 = vmatprep.subr.mxu0 0.0
        %1665 = vmatpush1.msra.mxu0 0.0
        %1666 = vmatprep.subr.mxu0 0.0
        %1667 = vmatpush1.msra.mxu0 0.0
        %1668 = vmatprep.subr.mxu0 0.0
        %1669 = vmatpush1.msra.mxu0 0.0
        %1670 = vmatprep.subr.mxu0 0.0
        %1671 = vmatpush1.msra.mxu0 0.0
        %1672 = vmatprep.subr.mxu0 0.0
        %1673 = vmatpush1.msra.mxu0 0.0
        %1674 = vmatprep.subr.mxu0 0.0
        %1675 = vmatpush1.msra.mxu0 0.0
        %1676 = vmatprep.subr.mxu0 0.0
        %1677 = vmatpush1.msra.mxu0 0.0
        %1678 = vmatprep.subr.mxu0 0.0
        %1679 = vmatpush1.msra.mxu0 0.0
        %1680 = vmatprep.subr.mxu0 0.0
        %1681 = vmatpush1.msra.mxu0 0.0
        %1682 = vmatprep.subr.mxu0 0.0
        %1683 = vmatpush1.msra.mxu0 0.0
        %1684 = vmatprep.subr.mxu0 0.0
        %1685 = vmatpush1.msra.mxu0 0.0
        %1686 = vmatprep.subr.mxu0 0.0
        %1687 = vmatpush1.msra.mxu0 0.0
        %1688 = vmatprep.subr.mxu0 0.0
        %1689 = vmatpush1.msra.mxu0 0.0
        %1690 = vmatprep.mubr.f32.mxu0 0.0
        %1691 = vmatmul.mubr.f32.gmra.mrb[0].mxu0 %v1604
        %v1692 = vpop.f32.mrb[0].mxu0
        %v1693 = vadd.f32 %v1625, %v1692
        %v1694 = vpop.f32.mrb[0].mxu0
        %1695 = vmatprep.mubr.f32.mxu0 0.0
        %1696 = vmatmul.mubr.f32.gmra.mrb[0].mxu0 %v1605
        %v1697 = vpop.f32.mrb[0].mxu0
        %v1698 = vadd.f32 %v1625, %v1697
        %v1699 = vpop.f32.mrb[0].mxu0
        %1700 = vdwg.mxu0
        %v1701 = vadd.f32 %v1693, %v1461
        %v1702 = vadd.f32 %v1698, %v1462
        %1703 = vst [vmem:[%s299] sm:$0xff] %v1701
        %1704 = vst [vmem:[%s299 + $0x8] sm:$0xff] %v1702
        %s1705 = sand.u32 %s183, 1
        %s1706 = scalar_lea.sflag [#allocation5], %s1705
        %s1707 = sand.u32 %s183, 1
        %s1708 = smul.addr %s1707, 16
        %s1709 = scalar_lea.vmem [#allocation8], %s1708
        // Predicated region
        $region57: #{tpu_custom_call.1} parent=47 // pred_check
          %p1710 = pneg %p193
        $region58: #{tpu_custom_call.1} parent=47 // pred_check_branch
          %1712 = sbr.rel (%p1710) target = $region60
        $region59: #{tpu_custom_call.1} parent=47 // pred_region
          %s1714 = ssub.s32 256, 256
          %1715 = vsyncadd %s1706, %s1714
          %s1716 = smul.addr %s23, 2
          %s1717 = smul.addr %s1716, 128
          %s1718 = scalar_lea.hbm %s7, %s1717
          %s1719 = sshll.u32 %s1709, 4
          %s1720 = int_to_ptr.vmem [resolvable:$true] %s1719
          %1725 = dma.vmem_to_hbm [thread:$0]  %s1720, 256, %s1718, %s1706, 128, 128, 8
        $region60: #{tpu_custom_call.1} parent=47 // pred_fallthru
          _
      $region48: #{tpu_custom_call.1} parent=5 // pred_fallthru
        _
      %p1726 = scmp.le.s32.totalorder 2, %s18
      // Predicated region
      $region61: #{tpu_custom_call.1} parent=5 // pred_check
        %p1727 = pneg %p1726
      $region62: #{tpu_custom_call.1} parent=5 // pred_check_branch
        %1729 = sbr.rel (%p1727) target = $region64
      $region63: #{tpu_custom_call.1} parent=5 // pred_region
        %s1730 = ssub.s32 %s18, 2
        // Predicated region
        $region65: #{tpu_custom_call.1} parent=63 // pred_check
          %p1731 = pneg %p199
        $region66: #{tpu_custom_call.1} parent=63 // pred_check_branch
          %1733 = sbr.rel (%p1731) target = $region68
        $region67: #{tpu_custom_call.1} parent=63 // pred_region
          %s1734 = sand.u32 %s184, 1
          %s1735 = scalar_lea.sflag [#allocation5], %s1734
          %s1736 = sand.u32 %s184, 1
          %s1737 = smul.addr %s1736, 16
          %s1738 = scalar_lea.vmem [#allocation8], %s1737
          %1739 = dma.done %s1735, 256
        $region68: #{tpu_custom_call.1} parent=63 // pred_fallthru
          _
      $region64: #{tpu_custom_call.1} parent=5 // pred_fallthru
        _
    $region6: #{tpu_custom_call.1} parent=1 // loop_footer
      %s22 = sadd.s32 1, %s18
    $region7: #{tpu_custom_call.1} parent=1 // loop_footer_branch
      %17 = sbr.rel target = $region3
    $region8: #{tpu_custom_call.1} parent=1 // loop_exit
      _
    %1740 = vsyncpa [#allocation4], 1
    %s1741 = scalar_lea.sflag [#allocation4], 1
    %1742 = vsyncpa %s1741, 1
    %1743 = vsyncpa [#allocation7], 1
    %1744 = vsyncpa [#allocation5], 1
    %s1745 = scalar_lea.sflag [#allocation5], 1
    %1746 = vsyncpa %s1745, 1

// kernel: tpu_custom_call.1
$region0: #{tpu_custom_call.1}
  #allocation0 [shape = 'u32[]', space=smem, size = 0x4, offset = 0x4, fixed_abs, tag = 'smem constant byte address 0x4 - core index']
  #allocation1 [shape = 'u32[144,128]{1,0:T(1,128)}', space=vmem, size = 0x12000, scoped, tag = 'internal scratch']
  #allocation2 [shape = 'f32[16,32]{1,0:T(8,128)}', space=vmem, size = 0x2000, scoped, tag = 'scratch operand']
  %s0 = inlined_call_operand.vmem [shape: f32[2,16,128], index: 0, kind: input, shape index: {}]
  %s1 = inlined_call_operand.hbm [shape: f32[8,128], index: 1, kind: input, shape index: {}]
  %s2 = inlined_call_operand.vmem [shape: f32[128,32], index: 2, kind: input, shape index: {}]
  %s3 = inlined_call_operand.vmem [shape: f32[128,64], index: 3, kind: input, shape index: {}]
  %s4 = inlined_call_operand.hbm [shape: f32[32,128], index: 4, kind: input, shape index: {}]
  %s5 = inlined_call_operand.vmem [shape: f32[128,128], index: 5, kind: input, shape index: {}]
  %s6 = inlined_call_operand.vmem [shape: f32[128,128], index: 6, kind: input, shape index: {}]
  %s7 = inlined_call_operand.hbm [shape: f32[2,16,128], index: 7, kind: output, shape index: {}]
  %s8 = sld [smem:[#allocation0]]
  $region69: #{tpu_custom_call.1} parent=0
    _
  %s10 = ssub.s32 1, %s8
  %s11 = scalar_select 0, %s10, %s8
  $region1: #{tpu_custom_call.1} parent=0
    #allocation3 [shape = 'u8[4096]{0}', space=vmem, size = 0x1000, scoped, tag = 'input window, operand 1, single buffered']
    #allocation4 [shape = 's32[2]{0}', space=sflag, size = 0x8, scoped, tag = 'scoped memory for tpu_custom_call.1']
    #allocation5 [shape = 's32[2]{0}', space=sflag, size = 0x8, scoped, tag = 'scoped memory for tpu_custom_call.1']
    #allocation6 [shape = 'u8[16384]{0}', space=vmem, size = 0x4000, scoped, tag = 'input window, operand 4, single buffered']
    #allocation7 [shape = 's32[1]{0}', space=sflag, size = 0x4, scoped, tag = 'scoped memory for tpu_custom_call.1']
    #allocation8 [shape = 'u8[16384]{0}', space=vmem, size = 0x4000, scoped, tag = 'output window, operand 0']
    %12 = vsyncpa [#allocation4], 0
    %13 = vsyncpa [#allocation7], 0
    %14 = vsyncpa [#allocation5], 0
    %s15 = scalar_lea.sflag [#allocation5], 1
    %16 = vsyncpa %s15, 0
    loop: start=0, step=1, limit=4
    $region2: #{tpu_custom_call.1} parent=1 // loop_pre_header
      _
    $region3: #{tpu_custom_call.1} parent=1 // loop_header
      %s18 = sphi 0, %s22
      %p19 = scmp.ge.s32.totalorder %s18, 4
      %s28 = sphi 0, %s30
      %s31 = sphi 0, %s28
      %s32 = sphi 0, %s31
      %s48 = sphi 0, %s32
      %s52 = sphi 0, %s52
      %s54 = sphi 0, %s52
      %s55 = sphi 0, %s54
      %s69 = sphi 0, %s55
      %s73 = sphi 0, %s73
      %s75 = sphi 0, %s73
      %s76 = sphi 0, %s75
      %s90 = sphi 0, %s76
      %s94 = sphi 0, %s94
      %s96 = sphi 0, %s94
      %s97 = sphi 0, %s96
      %s111 = sphi 0, %s97
      %s115 = sphi 0, %s115
      %s117 = sphi 0, %s115
      %s118 = sphi 0, %s117
      %s132 = sphi 0, %s118
      %s136 = sphi 0, %s136
      %s138 = sphi 0, %s136
      %s139 = sphi 0, %s138
      %s153 = sphi 0, %s139
      %s157 = sphi 0, %s157
      %s159 = sphi 0, %s157
      %s160 = sphi 0, %s159
      %s174 = sphi 0, %s160
      %s180 = sphi 0, %s182
      %s183 = sphi 0, %s180
      %s184 = sphi 0, %s183
      %s200 = sphi 0, %s184
    $region4: #{tpu_custom_call.1} parent=1 // loop_header_branch
      %21 = sbr.rel (%p19) target = $region8
    $region5: #{tpu_custom_call.1} parent=1 // loop_body
      %s23 = ssub.s32 %s18, 1
      %s24 = ssub.s32 %s18, 2
      %s25 = sadd.s32 %s18, 1
      %s26 = ssub.s32 %s18, %s25
      %p27 = scmp.eq.s32.totalorder %s26, 0
      %s29 = sadd.s32 %s28, 1
      %s30 = scalar_select %p27, %s28, %s29
      %p33 = pneg %p27
      %p34 = scmp.eq.s32.totalorder %s18, 1
      %p35 = por %p33, %p34
      %p36 = scmp.ne.s32.totalorder %s28, %s31
      %p37 = scmp.eq.s32.totalorder %s18, 0
      %p38 = por %p36, %p37
      %p39 = scmp.ne.s32.totalorder %s28, %s31
      %p40 = scmp.eq.s32.totalorder %s23, 1
      %p41 = por %p39, %p40
      %p42 = scmp.ne.s32.totalorder %s31, %s32
      %p43 = scmp.eq.s32.totalorder %s23, 0
      %p44 = por %p42, %p43
      %p45 = scmp.ne.s32.totalorder %s31, %s32
      %p46 = scmp.eq.s32.totalorder %s24, 1
      %p47 = por %p45, %p46
      %p49 = scmp.ne.s32.totalorder %s32, %s48
      %p50 = scmp.eq.s32.totalorder %s24, 0
      %p51 = por %p49, %p50
      %s53 = sadd.s32 %s52, 1
      %p56 = scmp.eq.s32.totalorder %s18, 1
      %p57 = scmp.ne.s32.totalorder %s52, %s54
      %p58 = scmp.eq.s32.totalorder %s18, 0
      %p59 = por %p57, %p58
      %p60 = scmp.ne.s32.totalorder %s52, %s54
      %p61 = scmp.eq.s32.totalorder %s23, 1
      %p62 = por %p60, %p61
      %p63 = scmp.ne.s32.totalorder %s54, %s55
      %p64 = scmp.eq.s32.totalorder %s23, 0
      %p65 = por %p63, %p64
      %p66 = scmp.ne.s32.totalorder %s54, %s55
      %p67 = scmp.eq.s32.totalorder %s24, 1
      %p68 = por %p66, %p67
      %p70 = scmp.ne.s32.totalorder %s55, %s69
      %p71 = scmp.eq.s32.totalorder %s24, 0
      %p72 = por %p70, %p71
      %s74 = sadd.s32 %s73, 1
      %p77 = scmp.eq.s32.totalorder %s18, 1
      %p78 = scmp.ne.s32.totalorder %s73, %s75
      %p79 = scmp.eq.s32.totalorder %s18, 0
      %p80 = por %p78, %p79
      %p81 = scmp.ne.s32.totalorder %s73, %s75
      %p82 = scmp.eq.s32.totalorder %s23, 1
      %p83 = por %p81, %p82
      %p84 = scmp.ne.s32.totalorder %s75, %s76
      %p85 = scmp.eq.s32.totalorder %s23, 0
      %p86 = por %p84, %p85
      %p87 = scmp.ne.s32.totalorder %s75, %s76
      %p88 = scmp.eq.s32.totalorder %s24, 1
      %p89 = por %p87, %p88
      %p91 = scmp.ne.s32.totalorder %s76, %s90
      %p92 = scmp.eq.s32.totalorder %s24, 0
      %p93 = por %p91, %p92
      %s95 = sadd.s32 %s94, 1
      %p98 = scmp.eq.s32.totalorder %s18, 1
      %p99 = scmp.ne.s32.totalorder %s94, %s96
      %p100 = scmp.eq.s32.totalorder %s18, 0
      %p101 = por %p99, %p100
      %p102 = scmp.ne.s32.totalorder %s94, %s96
      %p103 = scmp.eq.s32.totalorder %s23, 1
      %p104 = por %p102, %p103
      %p105 = scmp.ne.s32.totalorder %s96, %s97
      %p106 = scmp.eq.s32.totalorder %s23, 0
      %p107 = por %p105, %p106
      %p108 = scmp.ne.s32.totalorder %s96, %s97
      %p109 = scmp.eq.s32.totalorder %s24, 1
      %p110 = por %p108, %p109
      %p112 = scmp.ne.s32.totalorder %s97, %s111
      %p113 = scmp.eq.s32.totalorder %s24, 0
      %p114 = por %p112, %p113
      %s116 = sadd.s32 %s115, 1
      %p119 = scmp.eq.s32.totalorder %s18, 1
      %p120 = scmp.ne.s32.totalorder %s115, %s117
      %p121 = scmp.eq.s32.totalorder %s18, 0
      %p122 = por %p120, %p121
      %p123 = scmp.ne.s32.totalorder %s115, %s117
      %p124 = scmp.eq.s32.totalorder %s23, 1
      %p125 = por %p123, %p124
      %p126 = scmp.ne.s32.totalorder %s117, %s118
      %p127 = scmp.eq.s32.totalorder %s23, 0
      %p128 = por %p126, %p127
      %p129 = scmp.ne.s32.totalorder %s117, %s118
      %p130 = scmp.eq.s32.totalorder %s24, 1
      %p131 = por %p129, %p130
      %p133 = scmp.ne.s32.totalorder %s118, %s132
      %p134 = scmp.eq.s32.totalorder %s24, 0
      %p135 = por %p133, %p134
      %s137 = sadd.s32 %s136, 1
      %p140 = scmp.eq.s32.totalorder %s18, 1
      %p141 = scmp.ne.s32.totalorder %s136, %s138
      %p142 = scmp.eq.s32.totalorder %s18, 0
      %p143 = por %p141, %p142
      %p144 = scmp.ne.s32.totalorder %s136, %s138
      %p145 = scmp.eq.s32.totalorder %s23, 1
      %p146 = por %p144, %p145
      %p147 = scmp.ne.s32.totalorder %s138, %s139
      %p148 = scmp.eq.s32.totalorder %s23, 0
      %p149 = por %p147, %p148
      %p150 = scmp.ne.s32.totalorder %s138, %s139
      %p151 = scmp.eq.s32.totalorder %s24, 1
      %p152 = por %p150, %p151
      %p154 = scmp.ne.s32.totalorder %s139, %s153
      %p155 = scmp.eq.s32.totalorder %s24, 0
      %p156 = por %p154, %p155
      %s158 = sadd.s32 %s157, 1
      %p161 = scmp.eq.s32.totalorder %s18, 1
      %p162 = scmp.ne.s32.totalorder %s157, %s159
      %p163 = scmp.eq.s32.totalorder %s18, 0
      %p164 = por %p162, %p163
      %p165 = scmp.ne.s32.totalorder %s157, %s159
      %p166 = scmp.eq.s32.totalorder %s23, 1
      %p167 = por %p165, %p166
      %p168 = scmp.ne.s32.totalorder %s159, %s160
      %p169 = scmp.eq.s32.totalorder %s23, 0
      %p170 = por %p168, %p169
      %p171 = scmp.ne.s32.totalorder %s159, %s160
      %p172 = scmp.eq.s32.totalorder %s24, 1
      %p173 = por %p171, %p172
      %p175 = scmp.ne.s32.totalorder %s160, %s174
      %p176 = scmp.eq.s32.totalorder %s24, 0
      %p177 = por %p175, %p176
      %s178 = ssub.s32 %s18, %s25
      %p179 = scmp.eq.s32.totalorder %s178, 0
      %s181 = sadd.s32 %s180, 1
      %s182 = scalar_select %p179, %s180, %s181
      %p185 = pneg %p179
      %p186 = scmp.eq.s32.totalorder %s18, 1
      %p187 = por %p185, %p186
      %p188 = scmp.ne.s32.totalorder %s180, %s183
      %p189 = scmp.eq.s32.totalorder %s18, 0
      %p190 = por %p188, %p189
      %p191 = scmp.ne.s32.totalorder %s180, %s183
      %p192 = scmp.eq.s32.totalorder %s23, 1
      %p193 = por %p191, %p192
      %p194 = scmp.ne.s32.totalorder %s183, %s184
      %p195 = scmp.eq.s32.totalorder %s23, 0
      %p196 = por %p194, %p195
      %p197 = scmp.ne.s32.totalorder %s183, %s184
      %p198 = scmp.eq.s32.totalorder %s24, 1
      %p199 = por %p197, %p198
      %p201 = scmp.ne.s32.totalorder %s184, %s200
      %p202 = scmp.eq.s32.totalorder %s24, 0
      %p203 = por %p201, %p202
      %p204 = scmp.le.s32.totalorder 1, %s18
      %p205 = scmp.lt.s32.totalorder %s18, 3
      %p206 = pnand %p204, %p205
      %p207 = pneg %p206
      // Predicated region
      $region9: #{tpu_custom_call.1} parent=5 // pred_check
        _
      $region10: #{tpu_custom_call.1} parent=5 // pred_check_branch
        %209 = sbr.rel (%p206) target = $region12
      $region11: #{tpu_custom_call.1} parent=5 // pred_region
        %s210 = ssub.s32 %s18, 1
        // Predicated region
        $region13: #{tpu_custom_call.1} parent=11 // pred_check
          %p211 = pneg %p65
        $region14: #{tpu_custom_call.1} parent=11 // pred_check_branch
          %213 = sbr.rel (%p211) target = $region16
        $region15: #{tpu_custom_call.1} parent=11 // pred_region
          %s215 = ssub.s32 128, 128
          %216 = vsyncadd [#allocation4], %s215
          %s218 = sshll.u32 [#allocation3], 4
          %s219 = int_to_ptr.vmem [resolvable:$true] %s218
          %221 = dma.hbm_to_vmem [thread:$0]  %s1, 128, %s219, [#allocation4]
        $region16: #{tpu_custom_call.1} parent=11 // pred_fallthru
          _
        // Predicated region
        $region17: #{tpu_custom_call.1} parent=11 // pred_check
          %p222 = pneg %p86
        $region18: #{tpu_custom_call.1} parent=11 // pred_check_branch
          %224 = sbr.rel (%p222) target = $region20
        $region19: #{tpu_custom_call.1} parent=11 // pred_region
          _
        $region20: #{tpu_custom_call.1} parent=11 // pred_fallthru
          _
        // Predicated region
        $region21: #{tpu_custom_call.1} parent=11 // pred_check
          %p225 = pneg %p107
        $region22: #{tpu_custom_call.1} parent=11 // pred_check_branch
          %227 = sbr.rel (%p225) target = $region24
        $region23: #{tpu_custom_call.1} parent=11 // pred_region
          _
        $region24: #{tpu_custom_call.1} parent=11 // pred_fallthru
          _
        // Predicated region
        $region25: #{tpu_custom_call.1} parent=11 // pred_check
          %p228 = pneg %p128
        $region26: #{tpu_custom_call.1} parent=11 // pred_check_branch
          %230 = sbr.rel (%p228) target = $region28
        $region27: #{tpu_custom_call.1} parent=11 // pred_region
          %s232 = ssub.s32 512, 512
          %233 = vsyncadd [#allocation7], %s232
          %s234 = sshll.u32 [#allocation6], 4
          %s235 = int_to_ptr.vmem [resolvable:$true] %s234
          %240 = dma.hbm_to_vmem [thread:$0]  %s4, 512, %s235, [#allocation7], 128, 128, 8
        $region28: #{tpu_custom_call.1} parent=11 // pred_fallthru
          _
        // Predicated region
        $region29: #{tpu_custom_call.1} parent=11 // pred_check
          %p241 = pneg %p149
        $region30: #{tpu_custom_call.1} parent=11 // pred_check_branch
          %243 = sbr.rel (%p241) target = $region32
        $region31: #{tpu_custom_call.1} parent=11 // pred_region
          _
        $region32: #{tpu_custom_call.1} parent=11 // pred_fallthru
          _
        // Predicated region
        $region33: #{tpu_custom_call.1} parent=11 // pred_check
          %p244 = pneg %p170
        $region34: #{tpu_custom_call.1} parent=11 // pred_check_branch
          %246 = sbr.rel (%p244) target = $region36
        $region35: #{tpu_custom_call.1} parent=11 // pred_region
          _
        $region36: #{tpu_custom_call.1} parent=11 // pred_fallthru
          _
      $region12: #{tpu_custom_call.1} parent=5 // pred_fallthru
        _
      %p247 = scmp.lt.s32.totalorder %s18, 2
      // Predicated region
      $region37: #{tpu_custom_call.1} parent=5 // pred_check
        %p248 = pneg %p247
      $region38: #{tpu_custom_call.1} parent=5 // pred_check_branch
        %250 = sbr.rel (%p248) target = $region40
      $region39: #{tpu_custom_call.1} parent=5 // pred_region
        // Predicated region
        $region41: #{tpu_custom_call.1} parent=39 // pred_check
          %p251 = pneg %p38
        $region42: #{tpu_custom_call.1} parent=39 // pred_check_branch
          %253 = sbr.rel (%p251) target = $region44
        $region43: #{tpu_custom_call.1} parent=39 // pred_region
          %p254 = scmp.lt.s32.totalorder %s18, 1
          %s255 = scalar_select %p254, %s18, 1
          %s256 = smul.addr %s255, 2
          %s257 = smul.addr %s256, 8
          %s258 = scalar_lea.vmem %s0, %s257
        $region44: #{tpu_custom_call.1} parent=39 // pred_fallthru
          _
      $region40: #{tpu_custom_call.1} parent=5 // pred_fallthru
        _
      %p259 = scmp.le.s32.totalorder 1, %s18
      %p260 = scmp.lt.s32.totalorder %s18, 3
      %p261 = pnand %p259, %p260
      %p262 = pneg %p261
      // Predicated region
      $region45: #{tpu_custom_call.1} parent=5 // pred_check
        _
      $region46: #{tpu_custom_call.1} parent=5 // pred_check_branch
        %264 = sbr.rel (%p261) target = $region48
      $region47: #{tpu_custom_call.1} parent=5 // pred_region
        %s265 = ssub.s32 %s18, 1
        // Predicated region
        $region49: #{tpu_custom_call.1} parent=47 // pred_check
          %p266 = pneg %p65
        $region50: #{tpu_custom_call.1} parent=47 // pred_check_branch
          %268 = sbr.rel (%p266) target = $region52
        $region51: #{tpu_custom_call.1} parent=47 // pred_region
          %269 = dma.done [#allocation4], 128
        $region52: #{tpu_custom_call.1} parent=47 // pred_fallthru
          _
        // Predicated region
        $region53: #{tpu_custom_call.1} parent=47 // pred_check
          %p270 = pneg %p128
        $region54: #{tpu_custom_call.1} parent=47 // pred_check_branch
          %272 = sbr.rel (%p270) target = $region56
        $region55: #{tpu_custom_call.1} parent=47 // pred_region
          %273 = dma.done [#allocation7], 512
        $region56: #{tpu_custom_call.1} parent=47 // pred_fallthru
          _
        %p274 = scmp.lt.s32.totalorder %s23, 1
        %s275 = scalar_select %p274, %s23, 1
        %s276 = smul.addr %s275, 2
        %s277 = smul.addr %s276, 8
        %s278 = scalar_lea.vmem %s0, %s277
        %p279 = pneg %p44
        %p280 = pneg %p41
        %p281 = pneg %p65
        %p282 = pneg %p62
        %p283 = pneg %p86
        %p284 = pneg %p83
        %p285 = pneg %p107
        %p286 = pneg %p104
        %p287 = pneg %p128
        %p288 = pneg %p125
        %p289 = pneg %p149
        %p290 = pneg %p146
        %p291 = pneg %p170
        %p292 = pneg %p167
        %p293 = pneg %p196
        %p294 = pneg %p193
        %s295 = sand.u32 %s183, 1
        %s296 = scalar_lea.sflag [#allocation5], %s295
        %s297 = sand.u32 %s183, 1
        %s298 = smul.addr %s297, 16
        %s299 = scalar_lea.vmem [#allocation8], %s298
        %p300 = scmp.lt.s32.totalorder %s23, 1
        %s301 = scalar_select %p300, %s23, 1
        %s302 = smul.addr %s301, 2
        %s303 = smul.addr %s302, 8
        %s304 = scalar_lea.vmem %s0, %s303
        %v305 = vld [vmem:[#allocation3] sm:$0xff]
        %v306 = vld [vmem:[%s304] sm:$0xff]
        %v307 = vld [vmem:[%s304 + $0x8] sm:$0xff]
        %308 = vadd.xlane.f32.xlu0 %v306
        %v309 = vpop.xlane.xlu0 %308
        %310 = vadd.xlane.f32.xlu0 %v307
        %v311 = vpop.xlane.xlu0 %310
        %v312 = vmul.f32 %v309, 0.03125
        %v313 = vmul.f32 %v311, 0.03125
        %v314 = vmul.f32 %v306, %v306
        %v315 = vmul.f32 %v307, %v307
        %316 = vadd.xlane.f32.xlu0 %v314
        %v317 = vpop.xlane.xlu0 %316
        %318 = vadd.xlane.f32.xlu0 %v315
        %v319 = vpop.xlane.xlu0 %318
        %v320 = vmul.f32 %v317, 0.03125
        %v321 = vmul.f32 %v319, 0.03125
        %v322 = vmul.f32 %v312, %v312
        %v323 = vmul.f32 %v313, %v313
        %v324 = vsub.f32 %v320, %v322
        %v325 = vsub.f32 %v321, %v323
        %v326 = vsub.f32 %v306, %v312
        %v327 = vsub.f32 %v307, %v313
        %v328 = vadd.f32 %v324, 1e-05
        %v329 = vadd.f32 %v325, 1e-05
        %v330 = vrsqrt.pop %v328
        %v331 = vrsqrt.pop %v329
        %v332 = vmul.f32 %v326, %v330
        %v333 = vmul.f32 %v327, %v331
        %v334 = vlaneseq
        %v335 = vshrl.u32 %v334, 7
        %v336 = vsub.s32 0, %v335
        %v337 = vrot.slane %v305, %v336
        %v338 = vmul.f32 %v332, %v337
        %v339 = vmul.f32 %v333, %v337
        %v340 = vlaneseq
        %v341 = vshrl.u32 %v340, 7
        %v342 = vsub.s32 1, %v341
        %v343 = vrot.slane %v305, %v342
        %v344 = vadd.f32 %v338, %v343
        %v345 = vadd.f32 %v339, %v343
        %v346 = vld [vmem:[%s2] sm:$0xff]
        %v347 = vld [vmem:[%s2 + $0x8] sm:$0xff]
        %v348 = vld [vmem:[%s2 + $0x10] sm:$0xff]
        %v349 = vld [vmem:[%s2 + $0x18] sm:$0xff]
        %v350 = vld [vmem:[%s2 + $0x20] sm:$0xff]
        %v351 = vld [vmem:[%s2 + $0x28] sm:$0xff]
        %v352 = vld [vmem:[%s2 + $0x30] sm:$0xff]
        %v353 = vld [vmem:[%s2 + $0x38] sm:$0xff]
        %v354 = vld [vmem:[%s2 + $0x40] sm:$0xff]
        %v355 = vld [vmem:[%s2 + $0x48] sm:$0xff]
        %v356 = vld [vmem:[%s2 + $0x50] sm:$0xff]
        %v357 = vld [vmem:[%s2 + $0x58] sm:$0xff]
        %v358 = vld [vmem:[%s2 + $0x60] sm:$0xff]
        %v359 = vld [vmem:[%s2 + $0x68] sm:$0xff]
        %v360 = vld [vmem:[%s2 + $0x70] sm:$0xff]
        %v361 = vld [vmem:[%s2 + $0x78] sm:$0xff]
        %v362 = vlaneseq
        %v363 = vshrl.u32 %v362, 7
        %v364 = vsub.s32 7, %v363
        %v365 = vrot.slane %v305, %v364
        %366 = vmatprep.subr.mxu0 0.0
        %367 = vmatpush1.msra.mxu0 %v346
        %368 = vmatprep.subr.mxu0 0.0
        %369 = vmatpush1.msra.mxu0 %v347
        %370 = vmatprep.subr.mxu0 0.0
        %371 = vmatpush1.msra.mxu0 %v348
        %372 = vmatprep.subr.mxu0 0.0
        %373 = vmatpush1.msra.mxu0 %v349
        %374 = vmatprep.subr.mxu0 0.0
        %375 = vmatpush1.msra.mxu0 %v350
        %376 = vmatprep.subr.mxu0 0.0
        %377 = vmatpush1.msra.mxu0 %v351
        %378 = vmatprep.subr.mxu0 0.0
        %379 = vmatpush1.msra.mxu0 %v352
        %380 = vmatprep.subr.mxu0 0.0
        %381 = vmatpush1.msra.mxu0 %v353
        %382 = vmatprep.subr.mxu0 0.0
        %383 = vmatpush1.msra.mxu0 %v354
        %384 = vmatprep.subr.mxu0 0.0
        %385 = vmatpush1.msra.mxu0 %v355
        %386 = vmatprep.subr.mxu0 0.0
        %387 = vmatpush1.msra.mxu0 %v356
        %388 = vmatprep.subr.mxu0 0.0
        %389 = vmatpush1.msra.mxu0 %v357
        %390 = vmatprep.subr.mxu0 0.0
        %391 = vmatpush1.msra.mxu0 %v358
        %392 = vmatprep.subr.mxu0 0.0
        %393 = vmatpush1.msra.mxu0 %v359
        %394 = vmatprep.subr.mxu0 0.0
        %395 = vmatpush1.msra.mxu0 %v360
        %396 = vmatprep.subr.mxu0 0.0
        %397 = vmatpush1.msra.mxu0 %v361
        %398 = vmatprep.subr.mxu0 0.0
        %399 = vmatpush1.msra.mxu0 0.0
        %400 = vmatprep.subr.mxu0 0.0
        %401 = vmatpush1.msra.mxu0 0.0
        %402 = vmatprep.subr.mxu0 0.0
        %403 = vmatpush1.msra.mxu0 0.0
        %404 = vmatprep.subr.mxu0 0.0
        %405 = vmatpush1.msra.mxu0 0.0
        %406 = vmatprep.subr.mxu0 0.0
        %407 = vmatpush1.msra.mxu0 0.0
        %408 = vmatprep.subr.mxu0 0.0
        %409 = vmatpush1.msra.mxu0 0.0
        %410 = vmatprep.subr.mxu0 0.0
        %411 = vmatpush1.msra.mxu0 0.0
        %412 = vmatprep.subr.mxu0 0.0
        %413 = vmatpush1.msra.mxu0 0.0
        %414 = vmatprep.subr.mxu0 0.0
        %415 = vmatpush1.msra.mxu0 0.0
        %416 = vmatprep.subr.mxu0 0.0
        %417 = vmatpush1.msra.mxu0 0.0
        %418 = vmatprep.subr.mxu0 0.0
        %419 = vmatpush1.msra.mxu0 0.0
        %420 = vmatprep.subr.mxu0 0.0
        %421 = vmatpush1.msra.mxu0 0.0
        %422 = vmatprep.subr.mxu0 0.0
        %423 = vmatpush1.msra.mxu0 0.0
        %424 = vmatprep.subr.mxu0 0.0
        %425 = vmatpush1.msra.mxu0 0.0
        %426 = vmatprep.subr.mxu0 0.0
        %427 = vmatpush1.msra.mxu0 0.0
        %428 = vmatprep.subr.mxu0 0.0
        %429 = vmatpush1.msra.mxu0 0.0
        %430 = vmatprep.mubr.f32.mxu0 0.0
        %431 = vmatmul.mubr.f32.gmra.mrb[0].mxu0 %v344
        %v432 = vpop.f32.mrb[0].mxu0
        %v433 = vadd.f32 %v365, %v432
        %v434 = vpop.f32.mrb[0].mxu0
        %435 = vmatprep.mubr.f32.mxu0 0.0
        %436 = vmatmul.mubr.f32.gmra.mrb[0].mxu0 %v345
        %v437 = vpop.f32.mrb[0].mxu0
        %v438 = vadd.f32 %v365, %v437
        %v439 = vpop.f32.mrb[0].mxu0
        %440 = vdwg.mxu0
        %v441 = vld [vmem:[%s3] sm:$0xff]
        %v442 = vld [vmem:[%s3 + $0x8] sm:$0xff]
        %v443 = vld [vmem:[%s3 + $0x10] sm:$0xff]
        %v444 = vld [vmem:[%s3 + $0x18] sm:$0xff]
        %v445 = vld [vmem:[%s3 + $0x20] sm:$0xff]
        %v446 = vld [vmem:[%s3 + $0x28] sm:$0xff]
        %v447 = vld [vmem:[%s3 + $0x30] sm:$0xff]
        %v448 = vld [vmem:[%s3 + $0x38] sm:$0xff]
        %v449 = vld [vmem:[%s3 + $0x40] sm:$0xff]
        %v450 = vld [vmem:[%s3 + $0x48] sm:$0xff]
        %v451 = vld [vmem:[%s3 + $0x50] sm:$0xff]
        %v452 = vld [vmem:[%s3 + $0x58] sm:$0xff]
        %v453 = vld [vmem:[%s3 + $0x60] sm:$0xff]
        %v454 = vld [vmem:[%s3 + $0x68] sm:$0xff]
        %v455 = vld [vmem:[%s3 + $0x70] sm:$0xff]
        %v456 = vld [vmem:[%s3 + $0x78] sm:$0xff]
        %458 = vrot.lane.b32.xlu0 %v365, 96
        %v459 = vpop.permute.xlu0 %458
        %461 = vmatprep.subr.mxu0 0.0
        %462 = vmatpush1.msra.mxu0 %v441
        %463 = vmatprep.subr.mxu0 0.0
        %464 = vmatpush1.msra.mxu0 %v442
        %465 = vmatprep.subr.mxu0 0.0
        %466 = vmatpush1.msra.mxu0 %v443
        %467 = vmatprep.subr.mxu0 0.0
        %468 = vmatpush1.msra.mxu0 %v444
        %469 = vmatprep.subr.mxu0 0.0
        %470 = vmatpush1.msra.mxu0 %v445
        %471 = vmatprep.subr.mxu0 0.0
        %472 = vmatpush1.msra.mxu0 %v446
        %473 = vmatprep.subr.mxu0 0.0
        %474 = vmatpush1.msra.mxu0 %v447
        %475 = vmatprep.subr.mxu0 0.0
        %476 = vmatpush1.msra.mxu0 %v448
        %477 = vmatprep.subr.mxu0 0.0
        %478 = vmatpush1.msra.mxu0 %v449
        %479 = vmatprep.subr.mxu0 0.0
        %480 = vmatpush1.msra.mxu0 %v450
        %481 = vmatprep.subr.mxu0 0.0
        %482 = vmatpush1.msra.mxu0 %v451
        %483 = vmatprep.subr.mxu0 0.0
        %484 = vmatpush1.msra.mxu0 %v452
        %485 = vmatprep.subr.mxu0 0.0
        %486 = vmatpush1.msra.mxu0 %v453
        %487 = vmatprep.subr.mxu0 0.0
        %488 = vmatpush1.msra.mxu0 %v454
        %489 = vmatprep.subr.mxu0 0.0
        %490 = vmatpush1.msra.mxu0 %v455
        %491 = vmatprep.subr.mxu0 0.0
        %492 = vmatpush1.msra.mxu0 %v456
        %493 = vmatprep.subr.mxu0 0.0
        %494 = vmatpush1.msra.mxu0 0.0
        %495 = vmatprep.subr.mxu0 0.0
        %496 = vmatpush1.msra.mxu0 0.0
        %497 = vmatprep.subr.mxu0 0.0
        %498 = vmatpush1.msra.mxu0 0.0
        %499 = vmatprep.subr.mxu0 0.0
        %500 = vmatpush1.msra.mxu0 0.0
        %501 = vmatprep.subr.mxu0 0.0
        %502 = vmatpush1.msra.mxu0 0.0
        %503 = vmatprep.subr.mxu0 0.0
        %504 = vmatpush1.msra.mxu0 0.0
        %505 = vmatprep.subr.mxu0 0.0
        %506 = vmatpush1.msra.mxu0 0.0
        %507 = vmatprep.subr.mxu0 0.0
        %508 = vmatpush1.msra.mxu0 0.0
        %509 = vmatprep.subr.mxu0 0.0
        %510 = vmatpush1.msra.mxu0 0.0
        %511 = vmatprep.subr.mxu0 0.0
        %512 = vmatpush1.msra.mxu0 0.0
        %513 = vmatprep.subr.mxu0 0.0
        %514 = vmatpush1.msra.mxu0 0.0
        %515 = vmatprep.subr.mxu0 0.0
        %516 = vmatpush1.msra.mxu0 0.0
        %517 = vmatprep.subr.mxu0 0.0
        %518 = vmatpush1.msra.mxu0 0.0
        %519 = vmatprep.subr.mxu0 0.0
        %520 = vmatpush1.msra.mxu0 0.0
        %521 = vmatprep.subr.mxu0 0.0
        %522 = vmatpush1.msra.mxu0 0.0
        %523 = vmatprep.subr.mxu0 0.0
        %524 = vmatpush1.msra.mxu0 0.0
        %525 = vmatprep.mubr.f32.mxu0 0.0
        %526 = vmatmul.mubr.f32.gmra.mrb[0].mxu0 %v344
        %v527 = vpop.f32.mrb[0].mxu0
        %v528 = vadd.f32 %v459, %v527
        %v529 = vpop.f32.mrb[0].mxu0
        %530 = vmatprep.mubr.f32.mxu0 0.0
        %531 = vmatmul.mubr.f32.gmra.mrb[0].mxu0 %v345
        %v532 = vpop.f32.mrb[0].mxu0
        %v533 = vadd.f32 %v459, %v532
        %v534 = vpop.f32.mrb[0].mxu0
        %535 = vdwg.mxu0
        %vm536 = vcmask 64512
        %v538 = vsel %vm536, %v433, 0
        %v541 = vsel %vm536, %v438, 0
        %v544 = vsel %vm536, %v528, 0
        %v547 = vsel %vm536, %v533, 0
        %549 = vmatprep.subr.mxu0 0.0
        %550 = vmatpush1.xpose.msra.mxu0 %v544
        %551 = vmatprep.subr.mxu0 0.0
        %552 = vmatpush1.xpose.msra.mxu0 %v547
        %553 = vmatprep.subr.mxu0 0.0
        %554 = vmatpush1.xpose.msra.mxu0 0.0
        %555 = vmatprep.subr.mxu0 0.0
        %556 = vmatpush1.xpose.msra.mxu0 0.0
        %557 = vmatprep.subr.mxu0 0.0
        %558 = vmatpush1.xpose.msra.mxu0 0.0
        %559 = vmatprep.subr.mxu0 0.0
        %560 = vmatpush1.xpose.msra.mxu0 0.0
        %561 = vmatprep.subr.mxu0 0.0
        %562 = vmatpush1.xpose.msra.mxu0 0.0
        %563 = vmatprep.subr.mxu0 0.0
        %564 = vmatpush1.xpose.msra.mxu0 0.0
        %565 = vmatprep.subr.mxu0 0.0
        %566 = vmatpush1.xpose.msra.mxu0 0.0
        %567 = vmatprep.subr.mxu0 0.0
        %568 = vmatpush1.xpose.msra.mxu0 0.0
        %569 = vmatprep.subr.mxu0 0.0
        %570 = vmatpush1.xpose.msra.mxu0 0.0
        %571 = vmatprep.subr.mxu0 0.0
        %572 = vmatpush1.xpose.msra.mxu0 0.0
        %573 = vmatprep.subr.mxu0 0.0
        %574 = vmatpush1.xpose.msra.mxu0 0.0
        %575 = vmatprep.subr.mxu0 0.0
        %576 = vmatpush1.xpose.msra.mxu0 0.0
        %577 = vmatprep.subr.mxu0 0.0
        %578 = vmatpush1.xpose.msra.mxu0 0.0
        %579 = vmatprep.subr.mxu0 0.0
        %580 = vmatpush1.xpose.msra.mxu0 0.0
        %581 = vmatprep.subr.mxu0 0.0
        %582 = vmatpush1.xpose.msra.mxu0 0.0
        %583 = vmatprep.subr.mxu0 0.0
        %584 = vmatpush1.xpose.msra.mxu0 0.0
        %585 = vmatprep.subr.mxu0 0.0
        %586 = vmatpush1.xpose.msra.mxu0 0.0
        %587 = vmatprep.subr.mxu0 0.0
        %588 = vmatpush1.xpose.msra.mxu0 0.0
        %589 = vmatprep.subr.mxu0 0.0
        %590 = vmatpush1.xpose.msra.mxu0 0.0
        %591 = vmatprep.subr.mxu0 0.0
        %592 = vmatpush1.xpose.msra.mxu0 0.0
        %593 = vmatprep.subr.mxu0 0.0
        %594 = vmatpush1.xpose.msra.mxu0 0.0
        %595 = vmatprep.subr.mxu0 0.0
        %596 = vmatpush1.xpose.msra.mxu0 0.0
        %597 = vmatprep.subr.mxu0 0.0
        %598 = vmatpush1.xpose.msra.mxu0 0.0
        %599 = vmatprep.subr.mxu0 0.0
        %600 = vmatpush1.xpose.msra.mxu0 0.0
        %601 = vmatprep.subr.mxu0 0.0
        %602 = vmatpush1.xpose.msra.mxu0 0.0
        %603 = vmatprep.subr.mxu0 0.0
        %604 = vmatpush1.xpose.msra.mxu0 0.0
        %605 = vmatprep.subr.mxu0 0.0
        %606 = vmatpush1.xpose.msra.mxu0 0.0
        %607 = vmatprep.subr.mxu0 0.0
        %608 = vmatpush1.xpose.msra.mxu0 0.0
        %609 = vmatprep.subr.mxu0 0.0
        %610 = vmatpush1.xpose.msra.mxu0 0.0
        %611 = vmatprep.subr.mxu0 0.0
        %612 = vmatpush1.xpose.msra.mxu0 0.0
        %613 = vmatprep.mubr.f32.mxu0 0.0
        %614 = vmatmul.mubr.f32.gmra.mrb[0].mxu0 %v538
        %v615 = vpop.f32.mrb[0].mxu0
        %v616 = vadd.f32 0.0, %v615
        %v617 = vpop.f32.mrb[0].mxu0
        %618 = vmatprep.mubr.f32.mxu0 0.0
        %619 = vmatmul.mubr.f32.gmra.mrb[0].mxu0 %v541
        %v620 = vpop.f32.mrb[0].mxu0
        %v621 = vadd.f32 0.0, %v620
        %v622 = vpop.f32.mrb[0].mxu0
        %623 = vdwg.mxu0
        %vm624 = vcmask 130048
        %v625 = vsel %vm624, %v616, -inf
        %626 = vmax.xlane.f32.xlu0 %v625
        %v627 = vpop.xlane.xlu0 %626
        %v628 = vsel %vm624, %v621, -inf
        %629 = vmax.xlane.f32.xlu0 %v628
        %v630 = vpop.xlane.xlu0 %629
        %v631 = vsub.f32 %v616, %v627
        %v632 = vsub.f32 %v621, %v630
        %v633 = vmul.f32 %v631, 1.442695
        %v634 = vpow.pop %v633
        %v635 = vmul.f32 %v632, 1.442695
        %v636 = vpow.pop %v635
        %v637 = vsel %vm624, %v634, 0.0
        %638 = vadd.xlane.f32.xlu0 %v637
        %v639 = vpop.xlane.xlu0 %638
        %v640 = vsel %vm624, %v636, 0.0
        %641 = vadd.xlane.f32.xlu0 %v640
        %v642 = vpop.xlane.xlu0 %641
        %v643 = vrcp.pop %v639
        %v644 = vrcp.pop %v642
        %v645 = vmul.f32 %v634, %v643
        %v646 = vmul.f32 %v636, %v644
        %647 = vrot.lane.b32.xlu0 %v528, 96
        %v648 = vpop.permute.xlu0 %647
        %649 = vrot.lane.b32.xlu0 %v533, 96
        %v650 = vpop.permute.xlu0 %649
        %v654 = vsel %vm624, %v645, 0
        %v657 = vsel %vm624, %v646, 0
        %659 = vmatprep.subr.mxu0 0.0
        %660 = vmatpush1.msra.mxu0 %v648
        %661 = vmatprep.subr.mxu0 0.0
        %662 = vmatpush1.msra.mxu0 %v650
        %663 = vmatprep.subr.mxu0 0.0
        %664 = vmatpush1.msra.mxu0 0.0
        %665 = vmatprep.subr.mxu0 0.0
        %666 = vmatpush1.msra.mxu0 0.0
        %667 = vmatprep.subr.mxu0 0.0
        %668 = vmatpush1.msra.mxu0 0.0
        %669 = vmatprep.subr.mxu0 0.0
        %670 = vmatpush1.msra.mxu0 0.0
        %671 = vmatprep.subr.mxu0 0.0
        %672 = vmatpush1.msra.mxu0 0.0
        %673 = vmatprep.subr.mxu0 0.0
        %674 = vmatpush1.msra.mxu0 0.0
        %675 = vmatprep.subr.mxu0 0.0
        %676 = vmatpush1.msra.mxu0 0.0
        %677 = vmatprep.subr.mxu0 0.0
        %678 = vmatpush1.msra.mxu0 0.0
        %679 = vmatprep.subr.mxu0 0.0
        %680 = vmatpush1.msra.mxu0 0.0
        %681 = vmatprep.subr.mxu0 0.0
        %682 = vmatpush1.msra.mxu0 0.0
        %683 = vmatprep.subr.mxu0 0.0
        %684 = vmatpush1.msra.mxu0 0.0
        %685 = vmatprep.subr.mxu0 0.0
        %686 = vmatpush1.msra.mxu0 0.0
        %687 = vmatprep.subr.mxu0 0.0
        %688 = vmatpush1.msra.mxu0 0.0
        %689 = vmatprep.subr.mxu0 0.0
        %690 = vmatpush1.msra.mxu0 0.0
        %691 = vmatprep.subr.mxu0 0.0
        %692 = vmatpush1.msra.mxu0 0.0
        %693 = vmatprep.subr.mxu0 0.0
        %694 = vmatpush1.msra.mxu0 0.0
        %695 = vmatprep.subr.mxu0 0.0
        %696 = vmatpush1.msra.mxu0 0.0
        %697 = vmatprep.subr.mxu0 0.0
        %698 = vmatpush1.msra.mxu0 0.0
        %699 = vmatprep.subr.mxu0 0.0
        %700 = vmatpush1.msra.mxu0 0.0
        %701 = vmatprep.subr.mxu0 0.0
        %702 = vmatpush1.msra.mxu0 0.0
        %703 = vmatprep.subr.mxu0 0.0
        %704 = vmatpush1.msra.mxu0 0.0
        %705 = vmatprep.subr.mxu0 0.0
        %706 = vmatpush1.msra.mxu0 0.0
        %707 = vmatprep.subr.mxu0 0.0
        %708 = vmatpush1.msra.mxu0 0.0
        %709 = vmatprep.subr.mxu0 0.0
        %710 = vmatpush1.msra.mxu0 0.0
        %711 = vmatprep.subr.mxu0 0.0
        %712 = vmatpush1.msra.mxu0 0.0
        %713 = vmatprep.subr.mxu0 0.0
        %714 = vmatpush1.msra.mxu0 0.0
        %715 = vmatprep.subr.mxu0 0.0
        %716 = vmatpush1.msra.mxu0 0.0
        %717 = vmatprep.subr.mxu0 0.0
        %718 = vmatpush1.msra.mxu0 0.0
        %719 = vmatprep.subr.mxu0 0.0
        %720 = vmatpush1.msra.mxu0 0.0
        %721 = vmatprep.subr.mxu0 0.0
        %722 = vmatpush1.msra.mxu0 0.0
        %723 = vmatprep.mubr.f32.mxu0 0.0
        %724 = vmatmul.mubr.f32.gmra.mrb[0].mxu0 %v654
        %v725 = vpop.f32.mrb[0].mxu0
        %v726 = vadd.f32 0.0, %v725
        %v727 = vpop.f32.mrb[0].mxu0
        %728 = vmatprep.mubr.f32.mxu0 0.0
        %729 = vmatmul.mubr.f32.gmra.mrb[0].mxu0 %v657
        %v730 = vpop.f32.mrb[0].mxu0
        %v731 = vadd.f32 0.0, %v730
        %v732 = vpop.f32.mrb[0].mxu0
        %733 = vdwg.mxu0
        %734 = vst.msk [vmem:[#allocation2] sm:$0xff] %vm536, %v726
        %735 = vst.msk [vmem:[#allocation2 + $0x8] sm:$0xff] %vm536, %v731
        %736 = vrot.lane.b32.xlu0 %v433, 120
        %v737 = vpop.permute.xlu0 %736
        %738 = vrot.lane.b32.xlu0 %v438, 120
        %v739 = vpop.permute.xlu0 %738
        %740 = vrot.lane.b32.xlu0 %v528, 120
        %v741 = vpop.permute.xlu0 %740
        %742 = vrot.lane.b32.xlu0 %v533, 120
        %v743 = vpop.permute.xlu0 %742
        %v744 = vsel %vm536, %v737, 0
        %v746 = vsel %vm536, %v739, 0
        %v748 = vsel %vm536, %v741, 0
        %v750 = vsel %vm536, %v743, 0
        %752 = vmatprep.subr.mxu0 0.0
        %753 = vmatpush1.xpose.msra.mxu0 %v748
        %754 = vmatprep.subr.mxu0 0.0
        %755 = vmatpush1.xpose.msra.mxu0 %v750
        %756 = vmatprep.subr.mxu0 0.0
        %757 = vmatpush1.xpose.msra.mxu0 0.0
        %758 = vmatprep.subr.mxu0 0.0
        %759 = vmatpush1.xpose.msra.mxu0 0.0
        %760 = vmatprep.subr.mxu0 0.0
        %761 = vmatpush1.xpose.msra.mxu0 0.0
        %762 = vmatprep.subr.mxu0 0.0
        %763 = vmatpush1.xpose.msra.mxu0 0.0
        %764 = vmatprep.subr.mxu0 0.0
        %765 = vmatpush1.xpose.msra.mxu0 0.0
        %766 = vmatprep.subr.mxu0 0.0
        %767 = vmatpush1.xpose.msra.mxu0 0.0
        %768 = vmatprep.subr.mxu0 0.0
        %769 = vmatpush1.xpose.msra.mxu0 0.0
        %770 = vmatprep.subr.mxu0 0.0
        %771 = vmatpush1.xpose.msra.mxu0 0.0
        %772 = vmatprep.subr.mxu0 0.0
        %773 = vmatpush1.xpose.msra.mxu0 0.0
        %774 = vmatprep.subr.mxu0 0.0
        %775 = vmatpush1.xpose.msra.mxu0 0.0
        %776 = vmatprep.subr.mxu0 0.0
        %777 = vmatpush1.xpose.msra.mxu0 0.0
        %778 = vmatprep.subr.mxu0 0.0
        %779 = vmatpush1.xpose.msra.mxu0 0.0
        %780 = vmatprep.subr.mxu0 0.0
        %781 = vmatpush1.xpose.msra.mxu0 0.0
        %782 = vmatprep.subr.mxu0 0.0
        %783 = vmatpush1.xpose.msra.mxu0 0.0
        %784 = vmatprep.subr.mxu0 0.0
        %785 = vmatpush1.xpose.msra.mxu0 0.0
        %786 = vmatprep.subr.mxu0 0.0
        %787 = vmatpush1.xpose.msra.mxu0 0.0
        %788 = vmatprep.subr.mxu0 0.0
        %789 = vmatpush1.xpose.msra.mxu0 0.0
        %790 = vmatprep.subr.mxu0 0.0
        %791 = vmatpush1.xpose.msra.mxu0 0.0
        %792 = vmatprep.subr.mxu0 0.0
        %793 = vmatpush1.xpose.msra.mxu0 0.0
        %794 = vmatprep.subr.mxu0 0.0
        %795 = vmatpush1.xpose.msra.mxu0 0.0
        %796 = vmatprep.subr.mxu0 0.0
        %797 = vmatpush1.xpose.msra.mxu0 0.0
        %798 = vmatprep.subr.mxu0 0.0
        %799 = vmatpush1.xpose.msra.mxu0 0.0
        %800 = vmatprep.subr.mxu0 0.0
        %801 = vmatpush1.xpose.msra.mxu0 0.0
        %802 = vmatprep.subr.mxu0 0.0
        %803 = vmatpush1.xpose.msra.mxu0 0.0
        %804 = vmatprep.subr.mxu0 0.0
        %805 = vmatpush1.xpose.msra.mxu0 0.0
        %806 = vmatprep.subr.mxu0 0.0
        %807 = vmatpush1.xpose.msra.mxu0 0.0
        %808 = vmatprep.subr.mxu0 0.0
        %809 = vmatpush1.xpose.msra.mxu0 0.0
        %810 = vmatprep.subr.mxu0 0.0
        %811 = vmatpush1.xpose.msra.mxu0 0.0
        %812 = vmatprep.subr.mxu0 0.0
        %813 = vmatpush1.xpose.msra.mxu0 0.0
        %814 = vmatprep.subr.mxu0 0.0
        %815 = vmatpush1.xpose.msra.mxu0 0.0
        %816 = vmatprep.mubr.f32.mxu0 0.0
        %817 = vmatmul.mubr.f32.gmra.mrb[0].mxu0 %v744
        %v818 = vpop.f32.mrb[0].mxu0
        %v819 = vadd.f32 0.0, %v818
        %v820 = vpop.f32.mrb[0].mxu0
        %821 = vmatprep.mubr.f32.mxu0 0.0
        %822 = vmatmul.mubr.f32.gmra.mrb[0].mxu0 %v746
        %v823 = vpop.f32.mrb[0].mxu0
        %v824 = vadd.f32 0.0, %v823
        %v825 = vpop.f32.mrb[0].mxu0
        %826 = vdwg.mxu0
        %v827 = vsel %vm624, %v819, -inf
        %828 = vmax.xlane.f32.xlu0 %v827
        %v829 = vpop.xlane.xlu0 %828
        %v830 = vsel %vm624, %v824, -inf
        %831 = vmax.xlane.f32.xlu0 %v830
        %v832 = vpop.xlane.xlu0 %831
        %v833 = vsub.f32 %v819, %v829
        %v834 = vsub.f32 %v824, %v832
        %v835 = vmul.f32 %v833, 1.442695
        %v836 = vpow.pop %v835
        %v837 = vmul.f32 %v834, 1.442695
        %v838 = vpow.pop %v837
        %v839 = vsel %vm624, %v836, 0.0
        %840 = vadd.xlane.f32.xlu0 %v839
        %v841 = vpop.xlane.xlu0 %840
        %v842 = vsel %vm624, %v838, 0.0
        %843 = vadd.xlane.f32.xlu0 %v842
        %v844 = vpop.xlane.xlu0 %843
        %v845 = vrcp.pop %v841
        %v846 = vrcp.pop %v844
        %v847 = vmul.f32 %v836, %v845
        %v848 = vmul.f32 %v838, %v846
        %849 = vrot.lane.b32.xlu0 %v528, 88
        %v850 = vpop.permute.xlu0 %849
        %851 = vrot.lane.b32.xlu0 %v533, 88
        %v852 = vpop.permute.xlu0 %851
        %v856 = vsel %vm624, %v847, 0
        %v859 = vsel %vm624, %v848, 0
        %861 = vmatprep.subr.mxu0 0.0
        %862 = vmatpush1.msra.mxu0 %v850
        %863 = vmatprep.subr.mxu0 0.0
        %864 = vmatpush1.msra.mxu0 %v852
        %865 = vmatprep.subr.mxu0 0.0
        %866 = vmatpush1.msra.mxu0 0.0
        %867 = vmatprep.subr.mxu0 0.0
        %868 = vmatpush1.msra.mxu0 0.0
        %869 = vmatprep.subr.mxu0 0.0
        %870 = vmatpush1.msra.mxu0 0.0
        %871 = vmatprep.subr.mxu0 0.0
        %872 = vmatpush1.msra.mxu0 0.0
        %873 = vmatprep.subr.mxu0 0.0
        %874 = vmatpush1.msra.mxu0 0.0
        %875 = vmatprep.subr.mxu0 0.0
        %876 = vmatpush1.msra.mxu0 0.0
        %877 = vmatprep.subr.mxu0 0.0
        %878 = vmatpush1.msra.mxu0 0.0
        %879 = vmatprep.subr.mxu0 0.0
        %880 = vmatpush1.msra.mxu0 0.0
        %881 = vmatprep.subr.mxu0 0.0
        %882 = vmatpush1.msra.mxu0 0.0
        %883 = vmatprep.subr.mxu0 0.0
        %884 = vmatpush1.msra.mxu0 0.0
        %885 = vmatprep.subr.mxu0 0.0
        %886 = vmatpush1.msra.mxu0 0.0
        %887 = vmatprep.subr.mxu0 0.0
        %888 = vmatpush1.msra.mxu0 0.0
        %889 = vmatprep.subr.mxu0 0.0
        %890 = vmatpush1.msra.mxu0 0.0
        %891 = vmatprep.subr.mxu0 0.0
        %892 = vmatpush1.msra.mxu0 0.0
        %893 = vmatprep.subr.mxu0 0.0
        %894 = vmatpush1.msra.mxu0 0.0
        %895 = vmatprep.subr.mxu0 0.0
        %896 = vmatpush1.msra.mxu0 0.0
        %897 = vmatprep.subr.mxu0 0.0
        %898 = vmatpush1.msra.mxu0 0.0
        %899 = vmatprep.subr.mxu0 0.0
        %900 = vmatpush1.msra.mxu0 0.0
        %901 = vmatprep.subr.mxu0 0.0
        %902 = vmatpush1.msra.mxu0 0.0
        %903 = vmatprep.subr.mxu0 0.0
        %904 = vmatpush1.msra.mxu0 0.0
        %905 = vmatprep.subr.mxu0 0.0
        %906 = vmatpush1.msra.mxu0 0.0
        %907 = vmatprep.subr.mxu0 0.0
        %908 = vmatpush1.msra.mxu0 0.0
        %909 = vmatprep.subr.mxu0 0.0
        %910 = vmatpush1.msra.mxu0 0.0
        %911 = vmatprep.subr.mxu0 0.0
        %912 = vmatpush1.msra.mxu0 0.0
        %913 = vmatprep.subr.mxu0 0.0
        %914 = vmatpush1.msra.mxu0 0.0
        %915 = vmatprep.subr.mxu0 0.0
        %916 = vmatpush1.msra.mxu0 0.0
        %917 = vmatprep.subr.mxu0 0.0
        %918 = vmatpush1.msra.mxu0 0.0
        %919 = vmatprep.subr.mxu0 0.0
        %920 = vmatpush1.msra.mxu0 0.0
        %921 = vmatprep.subr.mxu0 0.0
        %922 = vmatpush1.msra.mxu0 0.0
        %923 = vmatprep.subr.mxu0 0.0
        %924 = vmatpush1.msra.mxu0 0.0
        %925 = vmatprep.mubr.f32.mxu0 0.0
        %926 = vmatmul.mubr.f32.gmra.mrb[0].mxu0 %v856
        %v927 = vpop.f32.mrb[0].mxu0
        %v928 = vadd.f32 0.0, %v927
        %v929 = vpop.f32.mrb[0].mxu0
        %930 = vmatprep.mubr.f32.mxu0 0.0
        %931 = vmatmul.mubr.f32.gmra.mrb[0].mxu0 %v859
        %v932 = vpop.f32.mrb[0].mxu0
        %v933 = vadd.f32 0.0, %v932
        %v934 = vpop.f32.mrb[0].mxu0
        %935 = vdwg.mxu0
        %938 = vrot.lane.b32.xlu0 %v928, 8
        %v939 = vpop.permute.xlu0 %938
        %940 = vrot.lane.b32.xlu0 %v933, 8
        %v941 = vpop.permute.xlu0 %940
        %vm944 = vcmask 130112
        %945 = vst.msk [vmem:[#allocation2] sm:$0xff] %vm944, %v939
        %946 = vst.msk [vmem:[#allocation2 + $0x8] sm:$0xff] %vm944, %v941
        %947 = vrot.lane.b32.xlu0 %v433, 112
        %v948 = vpop.permute.xlu0 %947
        %949 = vrot.lane.b32.xlu0 %v438, 112
        %v950 = vpop.permute.xlu0 %949
        %951 = vrot.lane.b32.xlu0 %v528, 112
        %v952 = vpop.permute.xlu0 %951
        %953 = vrot.lane.b32.xlu0 %v533, 112
        %v954 = vpop.permute.xlu0 %953
        %v955 = vsel %vm536, %v948, 0
        %v957 = vsel %vm536, %v950, 0
        %v959 = vsel %vm536, %v952, 0
        %v961 = vsel %vm536, %v954, 0
        %963 = vmatprep.subr.mxu0 0.0
        %964 = vmatpush1.xpose.msra.mxu0 %v959
        %965 = vmatprep.subr.mxu0 0.0
        %966 = vmatpush1.xpose.msra.mxu0 %v961
        %967 = vmatprep.subr.mxu0 0.0
        %968 = vmatpush1.xpose.msra.mxu0 0.0
        %969 = vmatprep.subr.mxu0 0.0
        %970 = vmatpush1.xpose.msra.mxu0 0.0
        %971 = vmatprep.subr.mxu0 0.0
        %972 = vmatpush1.xpose.msra.mxu0 0.0
        %973 = vmatprep.subr.mxu0 0.0
        %974 = vmatpush1.xpose.msra.mxu0 0.0
        %975 = vmatprep.subr.mxu0 0.0
        %976 = vmatpush1.xpose.msra.mxu0 0.0
        %977 = vmatprep.subr.mxu0 0.0
        %978 = vmatpush1.xpose.msra.mxu0 0.0
        %979 = vmatprep.subr.mxu0 0.0
        %980 = vmatpush1.xpose.msra.mxu0 0.0
        %981 = vmatprep.subr.mxu0 0.0
        %982 = vmatpush1.xpose.msra.mxu0 0.0
        %983 = vmatprep.subr.mxu0 0.0
        %984 = vmatpush1.xpose.msra.mxu0 0.0
        %985 = vmatprep.subr.mxu0 0.0
        %986 = vmatpush1.xpose.msra.mxu0 0.0
        %987 = vmatprep.subr.mxu0 0.0
        %988 = vmatpush1.xpose.msra.mxu0 0.0
        %989 = vmatprep.subr.mxu0 0.0
        %990 = vmatpush1.xpose.msra.mxu0 0.0
        %991 = vmatprep.subr.mxu0 0.0
        %992 = vmatpush1.xpose.msra.mxu0 0.0
        %993 = vmatprep.subr.mxu0 0.0
        %994 = vmatpush1.xpose.msra.mxu0 0.0
        %995 = vmatprep.subr.mxu0 0.0
        %996 = vmatpush1.xpose.msra.mxu0 0.0
        %997 = vmatprep.subr.mxu0 0.0
        %998 = vmatpush1.xpose.msra.mxu0 0.0
        %999 = vmatprep.subr.mxu0 0.0
        %1000 = vmatpush1.xpose.msra.mxu0 0.0
        %1001 = vmatprep.subr.mxu0 0.0
        %1002 = vmatpush1.xpose.msra.mxu0 0.0
        %1003 = vmatprep.subr.mxu0 0.0
        %1004 = vmatpush1.xpose.msra.mxu0 0.0
        %1005 = vmatprep.subr.mxu0 0.0
        %1006 = vmatpush1.xpose.msra.mxu0 0.0
        %1007 = vmatprep.subr.mxu0 0.0
        %1008 = vmatpush1.xpose.msra.mxu0 0.0
        %1009 = vmatprep.subr.mxu0 0.0
        %1010 = vmatpush1.xpose.msra.mxu0 0.0
        %1011 = vmatprep.subr.mxu0 0.0
        %1012 = vmatpush1.xpose.msra.mxu0 0.0
        %1013 = vmatprep.subr.mxu0 0.0
        %1014 = vmatpush1.xpose.msra.mxu0 0.0
        %1015 = vmatprep.subr.mxu0 0.0
        %1016 = vmatpush1.xpose.msra.mxu0 0.0
        %1017 = vmatprep.subr.mxu0 0.0
        %1018 = vmatpush1.xpose.msra.mxu0 0.0
        %1019 = vmatprep.subr.mxu0 0.0
        %1020 = vmatpush1.xpose.msra.mxu0 0.0
        %1021 = vmatprep.subr.mxu0 0.0
        %1022 = vmatpush1.xpose.msra.mxu0 0.0
        %1023 = vmatprep.subr.mxu0 0.0
        %1024 = vmatpush1.xpose.msra.mxu0 0.0
        %1025 = vmatprep.subr.mxu0 0.0
        %1026 = vmatpush1.xpose.msra.mxu0 0.0
        %1027 = vmatprep.mubr.f32.mxu0 0.0
        %1028 = vmatmul.mubr.f32.gmra.mrb[0].mxu0 %v955
        %v1029 = vpop.f32.mrb[0].mxu0
        %v1030 = vadd.f32 0.0, %v1029
        %v1031 = vpop.f32.mrb[0].mxu0
        %1032 = vmatprep.mubr.f32.mxu0 0.0
        %1033 = vmatmul.mubr.f32.gmra.mrb[0].mxu0 %v957
        %v1034 = vpop.f32.mrb[0].mxu0
        %v1035 = vadd.f32 0.0, %v1034
        %v1036 = vpop.f32.mrb[0].mxu0
        %1037 = vdwg.mxu0
        %v1038 = vsel %vm624, %v1030, -inf
        %1039 = vmax.xlane.f32.xlu0 %v1038
        %v1040 = vpop.xlane.xlu0 %1039
        %v1041 = vsel %vm624, %v1035, -inf
        %1042 = vmax.xlane.f32.xlu0 %v1041
        %v1043 = vpop.xlane.xlu0 %1042
        %v1044 = vsub.f32 %v1030, %v1040
        %v1045 = vsub.f32 %v1035, %v1043
        %v1046 = vmul.f32 %v1044, 1.442695
        %v1047 = vpow.pop %v1046
        %v1048 = vmul.f32 %v1045, 1.442695
        %v1049 = vpow.pop %v1048
        %v1050 = vsel %vm624, %v1047, 0.0
        %1051 = vadd.xlane.f32.xlu0 %v1050
        %v1052 = vpop.xlane.xlu0 %1051
        %v1053 = vsel %vm624, %v1049, 0.0
        %1054 = vadd.xlane.f32.xlu0 %v1053
        %v1055 = vpop.xlane.xlu0 %1054
        %v1056 = vrcp.pop %v1052
        %v1057 = vrcp.pop %v1055
        %v1058 = vmul.f32 %v1047, %v1056
        %v1059 = vmul.f32 %v1049, %v1057
        %1060 = vrot.lane.b32.xlu0 %v528, 80
        %v1061 = vpop.permute.xlu0 %1060
        %1062 = vrot.lane.b32.xlu0 %v533, 80
        %v1063 = vpop.permute.xlu0 %1062
        %v1067 = vsel %vm624, %v1058, 0
        %v1070 = vsel %vm624, %v1059, 0
        %1072 = vmatprep.subr.mxu0 0.0
        %1073 = vmatpush1.msra.mxu0 %v1061
        %1074 = vmatprep.subr.mxu0 0.0
        %1075 = vmatpush1.msra.mxu0 %v1063
        %1076 = vmatprep.subr.mxu0 0.0
        %1077 = vmatpush1.msra.mxu0 0.0
        %1078 = vmatprep.subr.mxu0 0.0
        %1079 = vmatpush1.msra.mxu0 0.0
        %1080 = vmatprep.subr.mxu0 0.0
        %1081 = vmatpush1.msra.mxu0 0.0
        %1082 = vmatprep.subr.mxu0 0.0
        %1083 = vmatpush1.msra.mxu0 0.0
        %1084 = vmatprep.subr.mxu0 0.0
        %1085 = vmatpush1.msra.mxu0 0.0
        %1086 = vmatprep.subr.mxu0 0.0
        %1087 = vmatpush1.msra.mxu0 0.0
        %1088 = vmatprep.subr.mxu0 0.0
        %1089 = vmatpush1.msra.mxu0 0.0
        %1090 = vmatprep.subr.mxu0 0.0
        %1091 = vmatpush1.msra.mxu0 0.0
        %1092 = vmatprep.subr.mxu0 0.0
        %1093 = vmatpush1.msra.mxu0 0.0
        %1094 = vmatprep.subr.mxu0 0.0
        %1095 = vmatpush1.msra.mxu0 0.0
        %1096 = vmatprep.subr.mxu0 0.0
        %1097 = vmatpush1.msra.mxu0 0.0
        %1098 = vmatprep.subr.mxu0 0.0
        %1099 = vmatpush1.msra.mxu0 0.0
        %1100 = vmatprep.subr.mxu0 0.0
        %1101 = vmatpush1.msra.mxu0 0.0
        %1102 = vmatprep.subr.mxu0 0.0
        %1103 = vmatpush1.msra.mxu0 0.0
        %1104 = vmatprep.subr.mxu0 0.0
        %1105 = vmatpush1.msra.mxu0 0.0
        %1106 = vmatprep.subr.mxu0 0.0
        %1107 = vmatpush1.msra.mxu0 0.0
        %1108 = vmatprep.subr.mxu0 0.0
        %1109 = vmatpush1.msra.mxu0 0.0
        %1110 = vmatprep.subr.mxu0 0.0
        %1111 = vmatpush1.msra.mxu0 0.0
        %1112 = vmatprep.subr.mxu0 0.0
        %1113 = vmatpush1.msra.mxu0 0.0
        %1114 = vmatprep.subr.mxu0 0.0
        %1115 = vmatpush1.msra.mxu0 0.0
        %1116 = vmatprep.subr.mxu0 0.0
        %1117 = vmatpush1.msra.mxu0 0.0
        %1118 = vmatprep.subr.mxu0 0.0
        %1119 = vmatpush1.msra.mxu0 0.0
        %1120 = vmatprep.subr.mxu0 0.0
        %1121 = vmatpush1.msra.mxu0 0.0
        %1122 = vmatprep.subr.mxu0 0.0
        %1123 = vmatpush1.msra.mxu0 0.0
        %1124 = vmatprep.subr.mxu0 0.0
        %1125 = vmatpush1.msra.mxu0 0.0
        %1126 = vmatprep.subr.mxu0 0.0
        %1127 = vmatpush1.msra.mxu0 0.0
        %1128 = vmatprep.subr.mxu0 0.0
        %1129 = vmatpush1.msra.mxu0 0.0
        %1130 = vmatprep.subr.mxu0 0.0
        %1131 = vmatpush1.msra.mxu0 0.0
        %1132 = vmatprep.subr.mxu0 0.0
        %1133 = vmatpush1.msra.mxu0 0.0
        %1134 = vmatprep.subr.mxu0 0.0
        %1135 = vmatpush1.msra.mxu0 0.0
        %1136 = vmatprep.mubr.f32.mxu0 0.0
        %1137 = vmatmul.mubr.f32.gmra.mrb[0].mxu0 %v1067
        %v1138 = vpop.f32.mrb[0].mxu0
        %v1139 = vadd.f32 0.0, %v1138
        %v1140 = vpop.f32.mrb[0].mxu0
        %1141 = vmatprep.mubr.f32.mxu0 0.0
        %1142 = vmatmul.mubr.f32.gmra.mrb[0].mxu0 %v1070
        %v1143 = vpop.f32.mrb[0].mxu0
        %v1144 = vadd.f32 0.0, %v1143
        %v1145 = vpop.f32.mrb[0].mxu0
        %1146 = vdwg.mxu0
        %1149 = vrot.lane.b32.xlu0 %v1139, 16
        %v1150 = vpop.permute.xlu0 %1149
        %1151 = vrot.lane.b32.xlu0 %v1144, 16
        %v1152 = vpop.permute.xlu0 %1151
        %vm1155 = vcmask 195712
        %1156 = vst.msk [vmem:[#allocation2] sm:$0xff] %vm1155, %v1150
        %1157 = vst.msk [vmem:[#allocation2 + $0x8] sm:$0xff] %vm1155, %v1152
        %1158 = vrot.lane.b32.xlu0 %v433, 104
        %v1159 = vpop.permute.xlu0 %1158
        %1160 = vrot.lane.b32.xlu0 %v438, 104
        %v1161 = vpop.permute.xlu0 %1160
        %1162 = vrot.lane.b32.xlu0 %v528, 104
        %v1163 = vpop.permute.xlu0 %1162
        %1164 = vrot.lane.b32.xlu0 %v533, 104
        %v1165 = vpop.permute.xlu0 %1164
        %v1166 = vsel %vm536, %v1159, 0
        %v1168 = vsel %vm536, %v1161, 0
        %v1170 = vsel %vm536, %v1163, 0
        %v1172 = vsel %vm536, %v1165, 0
        %1174 = vmatprep.subr.mxu0 0.0
        %1175 = vmatpush1.xpose.msra.mxu0 %v1170
        %1176 = vmatprep.subr.mxu0 0.0
        %1177 = vmatpush1.xpose.msra.mxu0 %v1172
        %1178 = vmatprep.subr.mxu0 0.0
        %1179 = vmatpush1.xpose.msra.mxu0 0.0
        %1180 = vmatprep.subr.mxu0 0.0
        %1181 = vmatpush1.xpose.msra.mxu0 0.0
        %1182 = vmatprep.subr.mxu0 0.0
        %1183 = vmatpush1.xpose.msra.mxu0 0.0
        %1184 = vmatprep.subr.mxu0 0.0
        %1185 = vmatpush1.xpose.msra.mxu0 0.0
        %1186 = vmatprep.subr.mxu0 0.0
        %1187 = vmatpush1.xpose.msra.mxu0 0.0
        %1188 = vmatprep.subr.mxu0 0.0
        %1189 = vmatpush1.xpose.msra.mxu0 0.0
        %1190 = vmatprep.subr.mxu0 0.0
        %1191 = vmatpush1.xpose.msra.mxu0 0.0
        %1192 = vmatprep.subr.mxu0 0.0
        %1193 = vmatpush1.xpose.msra.mxu0 0.0
        %1194 = vmatprep.subr.mxu0 0.0
        %1195 = vmatpush1.xpose.msra.mxu0 0.0
        %1196 = vmatprep.subr.mxu0 0.0
        %1197 = vmatpush1.xpose.msra.mxu0 0.0
        %1198 = vmatprep.subr.mxu0 0.0
        %1199 = vmatpush1.xpose.msra.mxu0 0.0
        %1200 = vmatprep.subr.mxu0 0.0
        %1201 = vmatpush1.xpose.msra.mxu0 0.0
        %1202 = vmatprep.subr.mxu0 0.0
        %1203 = vmatpush1.xpose.msra.mxu0 0.0
        %1204 = vmatprep.subr.mxu0 0.0
        %1205 = vmatpush1.xpose.msra.mxu0 0.0
        %1206 = vmatprep.subr.mxu0 0.0
        %1207 = vmatpush1.xpose.msra.mxu0 0.0
        %1208 = vmatprep.subr.mxu0 0.0
        %1209 = vmatpush1.xpose.msra.mxu0 0.0
        %1210 = vmatprep.subr.mxu0 0.0
        %1211 = vmatpush1.xpose.msra.mxu0 0.0
        %1212 = vmatprep.subr.mxu0 0.0
        %1213 = vmatpush1.xpose.msra.mxu0 0.0
        %1214 = vmatprep.subr.mxu0 0.0
        %1215 = vmatpush1.xpose.msra.mxu0 0.0
        %1216 = vmatprep.subr.mxu0 0.0
        %1217 = vmatpush1.xpose.msra.mxu0 0.0
        %1218 = vmatprep.subr.mxu0 0.0
        %1219 = vmatpush1.xpose.msra.mxu0 0.0
        %1220 = vmatprep.subr.mxu0 0.0
        %1221 = vmatpush1.xpose.msra.mxu0 0.0
        %1222 = vmatprep.subr.mxu0 0.0
        %1223 = vmatpush1.xpose.msra.mxu0 0.0
        %1224 = vmatprep.subr.mxu0 0.0
        %1225 = vmatpush1.xpose.msra.mxu0 0.0
        %1226 = vmatprep.subr.mxu0 0.0
        %1227 = vmatpush1.xpose.msra.mxu0 0.0
        %1228 = vmatprep.subr.mxu0 0.0
        %1229 = vmatpush1.xpose.msra.mxu0 0.0
        %1230 = vmatprep.subr.mxu0 0.0
        %1231 = vmatpush1.xpose.msra.mxu0 0.0
        %1232 = vmatprep.subr.mxu0 0.0
        %1233 = vmatpush1.xpose.msra.mxu0 0.0
        %1234 = vmatprep.subr.mxu0 0.0
        %1235 = vmatpush1.xpose.msra.mxu0 0.0
        %1236 = vmatprep.subr.mxu0 0.0
        %1237 = vmatpush1.xpose.msra.mxu0 0.0
        %1238 = vmatprep.mubr.f32.mxu0 0.0
        %1239 = vmatmul.mubr.f32.gmra.mrb[0].mxu0 %v1166
        %v1240 = vpop.f32.mrb[0].mxu0
        %v1241 = vadd.f32 0.0, %v1240
        %v1242 = vpop.f32.mrb[0].mxu0
        %1243 = vmatprep.mubr.f32.mxu0 0.0
        %1244 = vmatmul.mubr.f32.gmra.mrb[0].mxu0 %v1168
        %v1245 = vpop.f32.mrb[0].mxu0
        %v1246 = vadd.f32 0.0, %v1245
        %v1247 = vpop.f32.mrb[0].mxu0
        %1248 = vdwg.mxu0
        %v1249 = vsel %vm624, %v1241, -inf
        %1250 = vmax.xlane.f32.xlu0 %v1249
        %v1251 = vpop.xlane.xlu0 %1250
        %v1252 = vsel %vm624, %v1246, -inf
        %1253 = vmax.xlane.f32.xlu0 %v1252
        %v1254 = vpop.xlane.xlu0 %1253
        %v1255 = vsub.f32 %v1241, %v1251
        %v1256 = vsub.f32 %v1246, %v1254
        %v1257 = vmul.f32 %v1255, 1.442695
        %v1258 = vpow.pop %v1257
        %v1259 = vmul.f32 %v1256, 1.442695
        %v1260 = vpow.pop %v1259
        %v1261 = vsel %vm624, %v1258, 0.0
        %1262 = vadd.xlane.f32.xlu0 %v1261
        %v1263 = vpop.xlane.xlu0 %1262
        %v1264 = vsel %vm624, %v1260, 0.0
        %1265 = vadd.xlane.f32.xlu0 %v1264
        %v1266 = vpop.xlane.xlu0 %1265
        %v1267 = vrcp.pop %v1263
        %v1268 = vrcp.pop %v1266
        %v1269 = vmul.f32 %v1258, %v1267
        %v1270 = vmul.f32 %v1260, %v1268
        %1271 = vrot.lane.b32.xlu0 %v528, 72
        %v1272 = vpop.permute.xlu0 %1271
        %1273 = vrot.lane.b32.xlu0 %v533, 72
        %v1274 = vpop.permute.xlu0 %1273
        %v1278 = vsel %vm624, %v1269, 0
        %v1281 = vsel %vm624, %v1270, 0
        %1283 = vmatprep.subr.mxu0 0.0
        %1284 = vmatpush1.msra.mxu0 %v1272
        %1285 = vmatprep.subr.mxu0 0.0
        %1286 = vmatpush1.msra.mxu0 %v1274
        %1287 = vmatprep.subr.mxu0 0.0
        %1288 = vmatpush1.msra.mxu0 0.0
        %1289 = vmatprep.subr.mxu0 0.0
        %1290 = vmatpush1.msra.mxu0 0.0
        %1291 = vmatprep.subr.mxu0 0.0
        %1292 = vmatpush1.msra.mxu0 0.0
        %1293 = vmatprep.subr.mxu0 0.0
        %1294 = vmatpush1.msra.mxu0 0.0
        %1295 = vmatprep.subr.mxu0 0.0
        %1296 = vmatpush1.msra.mxu0 0.0
        %1297 = vmatprep.subr.mxu0 0.0
        %1298 = vmatpush1.msra.mxu0 0.0
        %1299 = vmatprep.subr.mxu0 0.0
        %1300 = vmatpush1.msra.mxu0 0.0
        %1301 = vmatprep.subr.mxu0 0.0
        %1302 = vmatpush1.msra.mxu0 0.0
        %1303 = vmatprep.subr.mxu0 0.0
        %1304 = vmatpush1.msra.mxu0 0.0
        %1305 = vmatprep.subr.mxu0 0.0
        %1306 = vmatpush1.msra.mxu0 0.0
        %1307 = vmatprep.subr.mxu0 0.0
        %1308 = vmatpush1.msra.mxu0 0.0
        %1309 = vmatprep.subr.mxu0 0.0
        %1310 = vmatpush1.msra.mxu0 0.0
        %1311 = vmatprep.subr.mxu0 0.0
        %1312 = vmatpush1.msra.mxu0 0.0
        %1313 = vmatprep.subr.mxu0 0.0
        %1314 = vmatpush1.msra.mxu0 0.0
        %1315 = vmatprep.subr.mxu0 0.0
        %1316 = vmatpush1.msra.mxu0 0.0
        %1317 = vmatprep.subr.mxu0 0.0
        %1318 = vmatpush1.msra.mxu0 0.0
        %1319 = vmatprep.subr.mxu0 0.0
        %1320 = vmatpush1.msra.mxu0 0.0
        %1321 = vmatprep.subr.mxu0 0.0
        %1322 = vmatpush1.msra.mxu0 0.0
        %1323 = vmatprep.subr.mxu0 0.0
        %1324 = vmatpush1.msra.mxu0 0.0
        %1325 = vmatprep.subr.mxu0 0.0
        %1326 = vmatpush1.msra.mxu0 0.0
        %1327 = vmatprep.subr.mxu0 0.0
        %1328 = vmatpush1.msra.mxu0 0.0
        %1329 = vmatprep.subr.mxu0 0.0
        %1330 = vmatpush1.msra.mxu0 0.0
        %1331 = vmatprep.subr.mxu0 0.0
        %1332 = vmatpush1.msra.mxu0 0.0
        %1333 = vmatprep.subr.mxu0 0.0
        %1334 = vmatpush1.msra.mxu0 0.0
        %1335 = vmatprep.subr.mxu0 0.0
        %1336 = vmatpush1.msra.mxu0 0.0
        %1337 = vmatprep.subr.mxu0 0.0
        %1338 = vmatpush1.msra.mxu0 0.0
        %1339 = vmatprep.subr.mxu0 0.0
        %1340 = vmatpush1.msra.mxu0 0.0
        %1341 = vmatprep.subr.mxu0 0.0
        %1342 = vmatpush1.msra.mxu0 0.0
        %1343 = vmatprep.subr.mxu0 0.0
        %1344 = vmatpush1.msra.mxu0 0.0
        %1345 = vmatprep.subr.mxu0 0.0
        %1346 = vmatpush1.msra.mxu0 0.0
        %1347 = vmatprep.mubr.f32.mxu0 0.0
        %1348 = vmatmul.mubr.f32.gmra.mrb[0].mxu0 %v1278
        %v1349 = vpop.f32.mrb[0].mxu0
        %v1350 = vadd.f32 0.0, %v1349
        %v1351 = vpop.f32.mrb[0].mxu0
        %1352 = vmatprep.mubr.f32.mxu0 0.0
        %1353 = vmatmul.mubr.f32.gmra.mrb[0].mxu0 %v1281
        %v1354 = vpop.f32.mrb[0].mxu0
        %v1355 = vadd.f32 0.0, %v1354
        %v1356 = vpop.f32.mrb[0].mxu0
        %1357 = vdwg.mxu0
        %1360 = vrot.lane.b32.xlu0 %v1350, 24
        %v1361 = vpop.permute.xlu0 %1360
        %1362 = vrot.lane.b32.xlu0 %v1355, 24
        %v1363 = vpop.permute.xlu0 %1362
        %vm1366 = vcmask 261312
        %1367 = vst.msk [vmem:[#allocation2] sm:$0xff] %vm1366, %v1361
        %1368 = vst.msk [vmem:[#allocation2 + $0x8] sm:$0xff] %vm1366, %v1363
        %v1369 = vld [vmem:[#allocation2] sm:$0xff]
        %v1370 = vld [vmem:[#allocation2 + $0x8] sm:$0xff]
        %v1371 = vld [vmem:[#allocation6] sm:$0xff]
        %v1372 = vld [vmem:[#allocation6 + $0x8] sm:$0xff]
        %v1373 = vld [vmem:[#allocation6 + $0x10] sm:$0xff]
        %v1374 = vld [vmem:[#allocation6 + $0x18] sm:$0xff]
        %v1375 = vlaneseq
        %v1376 = vshrl.u32 %v1375, 7
        %v1377 = vsub.s32 2, %v1376
        %v1378 = vrot.slane %v305, %v1377
        %vm1379 = vcmask 261120
        %v1381 = vsel %vm1379, %v1369, 0
        %v1384 = vsel %vm1379, %v1370, 0
        %1386 = vmatprep.subr.mxu0 0.0
        %1387 = vmatpush1.msra.mxu0 %v1371
        %1388 = vmatprep.subr.mxu0 0.0
        %1389 = vmatpush1.msra.mxu0 %v1372
        %1390 = vmatprep.subr.mxu0 0.0
        %1391 = vmatpush1.msra.mxu0 %v1373
        %1392 = vmatprep.subr.mxu0 0.0
        %1393 = vmatpush1.msra.mxu0 %v1374
        %1394 = vmatprep.subr.mxu0 0.0
        %1395 = vmatpush1.msra.mxu0 0.0
        %1396 = vmatprep.subr.mxu0 0.0
        %1397 = vmatpush1.msra.mxu0 0.0
        %1398 = vmatprep.subr.mxu0 0.0
        %1399 = vmatpush1.msra.mxu0 0.0
        %1400 = vmatprep.subr.mxu0 0.0
        %1401 = vmatpush1.msra.mxu0 0.0
        %1402 = vmatprep.subr.mxu0 0.0
        %1403 = vmatpush1.msra.mxu0 0.0
        %1404 = vmatprep.subr.mxu0 0.0
        %1405 = vmatpush1.msra.mxu0 0.0
        %1406 = vmatprep.subr.mxu0 0.0
        %1407 = vmatpush1.msra.mxu0 0.0
        %1408 = vmatprep.subr.mxu0 0.0
        %1409 = vmatpush1.msra.mxu0 0.0
        %1410 = vmatprep.subr.mxu0 0.0
        %1411 = vmatpush1.msra.mxu0 0.0
        %1412 = vmatprep.subr.mxu0 0.0
        %1413 = vmatpush1.msra.mxu0 0.0
        %1414 = vmatprep.subr.mxu0 0.0
        %1415 = vmatpush1.msra.mxu0 0.0
        %1416 = vmatprep.subr.mxu0 0.0
        %1417 = vmatpush1.msra.mxu0 0.0
        %1418 = vmatprep.subr.mxu0 0.0
        %1419 = vmatpush1.msra.mxu0 0.0
        %1420 = vmatprep.subr.mxu0 0.0
        %1421 = vmatpush1.msra.mxu0 0.0
        %1422 = vmatprep.subr.mxu0 0.0
        %1423 = vmatpush1.msra.mxu0 0.0
        %1424 = vmatprep.subr.mxu0 0.0
        %1425 = vmatpush1.msra.mxu0 0.0
        %1426 = vmatprep.subr.mxu0 0.0
        %1427 = vmatpush1.msra.mxu0 0.0
        %1428 = vmatprep.subr.mxu0 0.0
        %1429 = vmatpush1.msra.mxu0 0.0
        %1430 = vmatprep.subr.mxu0 0.0
        %1431 = vmatpush1.msra.mxu0 0.0
        %1432 = vmatprep.subr.mxu0 0.0
        %1433 = vmatpush1.msra.mxu0 0.0
        %1434 = vmatprep.subr.mxu0 0.0
        %1435 = vmatpush1.msra.mxu0 0.0
        %1436 = vmatprep.subr.mxu0 0.0
        %1437 = vmatpush1.msra.mxu0 0.0
        %1438 = vmatprep.subr.mxu0 0.0
        %1439 = vmatpush1.msra.mxu0 0.0
        %1440 = vmatprep.subr.mxu0 0.0
        %1441 = vmatpush1.msra.mxu0 0.0
        %1442 = vmatprep.subr.mxu0 0.0
        %1443 = vmatpush1.msra.mxu0 0.0
        %1444 = vmatprep.subr.mxu0 0.0
        %1445 = vmatpush1.msra.mxu0 0.0
        %1446 = vmatprep.subr.mxu0 0.0
        %1447 = vmatpush1.msra.mxu0 0.0
        %1448 = vmatprep.subr.mxu0 0.0
        %1449 = vmatpush1.msra.mxu0 0.0
        %1450 = vmatprep.mubr.f32.mxu0 0.0
        %1451 = vmatmul.mubr.f32.gmra.mrb[0].mxu0 %v1381
        %v1452 = vpop.f32.mrb[0].mxu0
        %v1453 = vadd.f32 %v1378, %v1452
        %v1454 = vpop.f32.mrb[0].mxu0
        %1455 = vmatprep.mubr.f32.mxu0 0.0
        %1456 = vmatmul.mubr.f32.gmra.mrb[0].mxu0 %v1384
        %v1457 = vpop.f32.mrb[0].mxu0
        %v1458 = vadd.f32 %v1378, %v1457
        %v1459 = vpop.f32.mrb[0].mxu0
        %1460 = vdwg.mxu0
        %v1461 = vadd.f32 %v1453, %v306
        %v1462 = vadd.f32 %v1458, %v307
        %1463 = vadd.xlane.f32.xlu0 %v1461
        %v1464 = vpop.xlane.xlu0 %1463
        %1465 = vadd.xlane.f32.xlu0 %v1462
        %v1466 = vpop.xlane.xlu0 %1465
        %v1467 = vmul.f32 %v1464, 0.03125
        %v1468 = vmul.f32 %v1466, 0.03125
        %v1469 = vmul.f32 %v1461, %v1461
        %v1470 = vmul.f32 %v1462, %v1462
        %1471 = vadd.xlane.f32.xlu0 %v1469
        %v1472 = vpop.xlane.xlu0 %1471
        %1473 = vadd.xlane.f32.xlu0 %v1470
        %v1474 = vpop.xlane.xlu0 %1473
        %v1475 = vmul.f32 %v1472, 0.03125
        %v1476 = vmul.f32 %v1474, 0.03125
        %v1477 = vmul.f32 %v1467, %v1467
        %v1478 = vmul.f32 %v1468, %v1468
        %v1479 = vsub.f32 %v1475, %v1477
        %v1480 = vsub.f32 %v1476, %v1478
        %v1481 = vsub.f32 %v1461, %v1467
        %v1482 = vsub.f32 %v1462, %v1468
        %v1483 = vadd.f32 %v1479, 1e-05
        %v1484 = vadd.f32 %v1480, 1e-05
        %v1485 = vrsqrt.pop %v1483
        %v1486 = vrsqrt.pop %v1484
        %v1487 = vmul.f32 %v1481, %v1485
        %v1488 = vmul.f32 %v1482, %v1486
        %v1489 = vlaneseq
        %v1490 = vshrl.u32 %v1489, 7
        %v1491 = vsub.s32 3, %v1490
        %v1492 = vrot.slane %v305, %v1491
        %v1493 = vmul.f32 %v1487, %v1492
        %v1494 = vmul.f32 %v1488, %v1492
        %v1495 = vlaneseq
        %v1496 = vshrl.u32 %v1495, 7
        %v1497 = vsub.s32 4, %v1496
        %v1498 = vrot.slane %v305, %v1497
        %v1499 = vadd.f32 %v1493, %v1498
        %v1500 = vadd.f32 %v1494, %v1498
        %v1501 = vld [vmem:[%s5] sm:$0xff]
        %v1502 = vld [vmem:[%s5 + $0x8] sm:$0xff]
        %v1503 = vld [vmem:[%s5 + $0x10] sm:$0xff]
        %v1504 = vld [vmem:[%s5 + $0x18] sm:$0xff]
        %v1505 = vld [vmem:[%s5 + $0x20] sm:$0xff]
        %v1506 = vld [vmem:[%s5 + $0x28] sm:$0xff]
        %v1507 = vld [vmem:[%s5 + $0x30] sm:$0xff]
        %v1508 = vld [vmem:[%s5 + $0x38] sm:$0xff]
        %v1509 = vld [vmem:[%s5 + $0x40] sm:$0xff]
        %v1510 = vld [vmem:[%s5 + $0x48] sm:$0xff]
        %v1511 = vld [vmem:[%s5 + $0x50] sm:$0xff]
        %v1512 = vld [vmem:[%s5 + $0x58] sm:$0xff]
        %v1513 = vld [vmem:[%s5 + $0x60] sm:$0xff]
        %v1514 = vld [vmem:[%s5 + $0x68] sm:$0xff]
        %v1515 = vld [vmem:[%s5 + $0x70] sm:$0xff]
        %v1516 = vld [vmem:[%s5 + $0x78] sm:$0xff]
        %v1517 = vlaneseq
        %v1518 = vshrl.u32 %v1517, 7
        %v1519 = vsub.s32 5, %v1518
        %v1520 = vrot.slane %v305, %v1519
        %1521 = vmatprep.subr.mxu0 0.0
        %1522 = vmatpush1.msra.mxu0 %v1501
        %1523 = vmatprep.subr.mxu0 0.0
        %1524 = vmatpush1.msra.mxu0 %v1502
        %1525 = vmatprep.subr.mxu0 0.0
        %1526 = vmatpush1.msra.mxu0 %v1503
        %1527 = vmatprep.subr.mxu0 0.0
        %1528 = vmatpush1.msra.mxu0 %v1504
        %1529 = vmatprep.subr.mxu0 0.0
        %1530 = vmatpush1.msra.mxu0 %v1505
        %1531 = vmatprep.subr.mxu0 0.0
        %1532 = vmatpush1.msra.mxu0 %v1506
        %1533 = vmatprep.subr.mxu0 0.0
        %1534 = vmatpush1.msra.mxu0 %v1507
        %1535 = vmatprep.subr.mxu0 0.0
        %1536 = vmatpush1.msra.mxu0 %v1508
        %1537 = vmatprep.subr.mxu0 0.0
        %1538 = vmatpush1.msra.mxu0 %v1509
        %1539 = vmatprep.subr.mxu0 0.0
        %1540 = vmatpush1.msra.mxu0 %v1510
        %1541 = vmatprep.subr.mxu0 0.0
        %1542 = vmatpush1.msra.mxu0 %v1511
        %1543 = vmatprep.subr.mxu0 0.0
        %1544 = vmatpush1.msra.mxu0 %v1512
        %1545 = vmatprep.subr.mxu0 0.0
        %1546 = vmatpush1.msra.mxu0 %v1513
        %1547 = vmatprep.subr.mxu0 0.0
        %1548 = vmatpush1.msra.mxu0 %v1514
        %1549 = vmatprep.subr.mxu0 0.0
        %1550 = vmatpush1.msra.mxu0 %v1515
        %1551 = vmatprep.subr.mxu0 0.0
        %1552 = vmatpush1.msra.mxu0 %v1516
        %1553 = vmatprep.subr.mxu0 0.0
        %1554 = vmatpush1.msra.mxu0 0.0
        %1555 = vmatprep.subr.mxu0 0.0
        %1556 = vmatpush1.msra.mxu0 0.0
        %1557 = vmatprep.subr.mxu0 0.0
        %1558 = vmatpush1.msra.mxu0 0.0
        %1559 = vmatprep.subr.mxu0 0.0
        %1560 = vmatpush1.msra.mxu0 0.0
        %1561 = vmatprep.subr.mxu0 0.0
        %1562 = vmatpush1.msra.mxu0 0.0
        %1563 = vmatprep.subr.mxu0 0.0
        %1564 = vmatpush1.msra.mxu0 0.0
        %1565 = vmatprep.subr.mxu0 0.0
        %1566 = vmatpush1.msra.mxu0 0.0
        %1567 = vmatprep.subr.mxu0 0.0
        %1568 = vmatpush1.msra.mxu0 0.0
        %1569 = vmatprep.subr.mxu0 0.0
        %1570 = vmatpush1.msra.mxu0 0.0
        %1571 = vmatprep.subr.mxu0 0.0
        %1572 = vmatpush1.msra.mxu0 0.0
        %1573 = vmatprep.subr.mxu0 0.0
        %1574 = vmatpush1.msra.mxu0 0.0
        %1575 = vmatprep.subr.mxu0 0.0
        %1576 = vmatpush1.msra.mxu0 0.0
        %1577 = vmatprep.subr.mxu0 0.0
        %1578 = vmatpush1.msra.mxu0 0.0
        %1579 = vmatprep.subr.mxu0 0.0
        %1580 = vmatpush1.msra.mxu0 0.0
        %1581 = vmatprep.subr.mxu0 0.0
        %1582 = vmatpush1.msra.mxu0 0.0
        %1583 = vmatprep.subr.mxu0 0.0
        %1584 = vmatpush1.msra.mxu0 0.0
        %1585 = vmatprep.mubr.f32.mxu0 0.0
        %1586 = vmatmul.mubr.f32.gmra.mrb[0].mxu0 %v1499
        %v1587 = vpop.f32.mrb[0].mxu0
        %v1588 = vadd.f32 %v1520, %v1587
        %v1589 = vpop.f32.mrb[0].mxu0
        %1590 = vmatprep.mubr.f32.mxu0 0.0
        %1591 = vmatmul.mubr.f32.gmra.mrb[0].mxu0 %v1500
        %v1592 = vpop.f32.mrb[0].mxu0
        %v1593 = vadd.f32 %v1520, %v1592
        %v1594 = vpop.f32.mrb[0].mxu0
        %1595 = vdwg.mxu0
        %v1596 = vmul.f32 %v1588, 0.5
        %v1597 = vmul.f32 %v1593, 0.5
        %v1598 = vmul.f32 %v1588, 0.70710677
        %v1599 = vmul.f32 %v1593, 0.70710677
        %v1600 = verf.f32.pop %v1598
        %v1601 = verf.f32.pop %v1599
        %v1602 = vadd.f32 %v1600, 1.0
        %v1603 = vadd.f32 %v1601, 1.0
        %v1604 = vmul.f32 %v1596, %v1602
        %v1605 = vmul.f32 %v1597, %v1603
        %v1606 = vld [vmem:[%s6] sm:$0xff]
        %v1607 = vld [vmem:[%s6 + $0x8] sm:$0xff]
        %v1608 = vld [vmem:[%s6 + $0x10] sm:$0xff]
        %v1609 = vld [vmem:[%s6 + $0x18] sm:$0xff]
        %v1610 = vld [vmem:[%s6 + $0x20] sm:$0xff]
        %v1611 = vld [vmem:[%s6 + $0x28] sm:$0xff]
        %v1612 = vld [vmem:[%s6 + $0x30] sm:$0xff]
        %v1613 = vld [vmem:[%s6 + $0x38] sm:$0xff]
        %v1614 = vld [vmem:[%s6 + $0x40] sm:$0xff]
        %v1615 = vld [vmem:[%s6 + $0x48] sm:$0xff]
        %v1616 = vld [vmem:[%s6 + $0x50] sm:$0xff]
        %v1617 = vld [vmem:[%s6 + $0x58] sm:$0xff]
        %v1618 = vld [vmem:[%s6 + $0x60] sm:$0xff]
        %v1619 = vld [vmem:[%s6 + $0x68] sm:$0xff]
        %v1620 = vld [vmem:[%s6 + $0x70] sm:$0xff]
        %v1621 = vld [vmem:[%s6 + $0x78] sm:$0xff]
        %v1622 = vlaneseq
        %v1623 = vshrl.u32 %v1622, 7
        %v1624 = vsub.s32 6, %v1623
        %v1625 = vrot.slane %v305, %v1624
        %1626 = vmatprep.subr.mxu0 0.0
        %1627 = vmatpush1.msra.mxu0 %v1606
        %1628 = vmatprep.subr.mxu0 0.0
        %1629 = vmatpush1.msra.mxu0 %v1607
        %1630 = vmatprep.subr.mxu0 0.0
        %1631 = vmatpush1.msra.mxu0 %v1608
        %1632 = vmatprep.subr.mxu0 0.0
        %1633 = vmatpush1.msra.mxu0 %v1609
        %1634 = vmatprep.subr.mxu0 0.0
        %1635 = vmatpush1.msra.mxu0 %v1610
        %1636 = vmatprep.subr.mxu0 0.0
        %1637 = vmatpush1.msra.mxu0 %v1611
        %1638 = vmatprep.subr.mxu0 0.0
        %1639 = vmatpush1.msra.mxu0 %v1612
        %1640 = vmatprep.subr.mxu0 0.0
        %1641 = vmatpush1.msra.mxu0 %v1613
        %1642 = vmatprep.subr.mxu0 0.0
        %1643 = vmatpush1.msra.mxu0 %v1614
        %1644 = vmatprep.subr.mxu0 0.0
        %1645 = vmatpush1.msra.mxu0 %v1615
        %1646 = vmatprep.subr.mxu0 0.0
        %1647 = vmatpush1.msra.mxu0 %v1616
        %1648 = vmatprep.subr.mxu0 0.0
        %1649 = vmatpush1.msra.mxu0 %v1617
        %1650 = vmatprep.subr.mxu0 0.0
        %1651 = vmatpush1.msra.mxu0 %v1618
        %1652 = vmatprep.subr.mxu0 0.0
        %1653 = vmatpush1.msra.mxu0 %v1619
        %1654 = vmatprep.subr.mxu0 0.0
        %1655 = vmatpush1.msra.mxu0 %v1620
        %1656 = vmatprep.subr.mxu0 0.0
        %1657 = vmatpush1.msra.mxu0 %v1621
        %1658 = vmatprep.subr.mxu0 0.0
        %1659 = vmatpush1.msra.mxu0 0.0
        %1660 = vmatprep.subr.mxu0 0.0
        %1661 = vmatpush1.msra.mxu0 0.0
        %1662 = vmatprep.subr.mxu0 0.0
        %1663 = vmatpush1.msra.mxu0 0.0
        %1664 = vmatprep.subr.mxu0 0.0
        %1665 = vmatpush1.msra.mxu0 0.0
        %1666 = vmatprep.subr.mxu0 0.0
        %1667 = vmatpush1.msra.mxu0 0.0
        %1668 = vmatprep.subr.mxu0 0.0
        %1669 = vmatpush1.msra.mxu0 0.0
        %1670 = vmatprep.subr.mxu0 0.0
        %1671 = vmatpush1.msra.mxu0 0.0
        %1672 = vmatprep.subr.mxu0 0.0
        %1673 = vmatpush1.msra.mxu0 0.0
        %1674 = vmatprep.subr.mxu0 0.0
        %1675 = vmatpush1.msra.mxu0 0.0
        %1676 = vmatprep.subr.mxu0 0.0
        %1677 = vmatpush1.msra.mxu0 0.0
        %1678 = vmatprep.subr.mxu0 0.0
        %1679 = vmatpush1.msra.mxu0 0.0
        %1680 = vmatprep.subr.mxu0 0.0
        %1681 = vmatpush1.msra.mxu0 0.0
        %1682 = vmatprep.subr.mxu0 0.0
        %1683 = vmatpush1.msra.mxu0 0.0
        %1684 = vmatprep.subr.mxu0 0.0
        %1685 = vmatpush1.msra.mxu0 0.0
        %1686 = vmatprep.subr.mxu0 0.0
        %1687 = vmatpush1.msra.mxu0 0.0
        %1688 = vmatprep.subr.mxu0 0.0
        %1689 = vmatpush1.msra.mxu0 0.0
        %1690 = vmatprep.mubr.f32.mxu0 0.0
        %1691 = vmatmul.mubr.f32.gmra.mrb[0].mxu0 %v1604
        %v1692 = vpop.f32.mrb[0].mxu0
        %v1693 = vadd.f32 %v1625, %v1692
        %v1694 = vpop.f32.mrb[0].mxu0
        %1695 = vmatprep.mubr.f32.mxu0 0.0
        %1696 = vmatmul.mubr.f32.gmra.mrb[0].mxu0 %v1605
        %v1697 = vpop.f32.mrb[0].mxu0
        %v1698 = vadd.f32 %v1625, %v1697
        %v1699 = vpop.f32.mrb[0].mxu0
        %1700 = vdwg.mxu0
        %v1701 = vadd.f32 %v1693, %v1461
        %v1702 = vadd.f32 %v1698, %v1462
        %1703 = vst [vmem:[%s299] sm:$0xff] %v1701
        %1704 = vst [vmem:[%s299 + $0x8] sm:$0xff] %v1702
        %s1705 = sand.u32 %s183, 1
        %s1706 = scalar_lea.sflag [#allocation5], %s1705
        %s1707 = sand.u32 %s183, 1
        %s1708 = smul.addr %s1707, 16
        %s1709 = scalar_lea.vmem [#allocation8], %s1708
        // Predicated region
        $region57: #{tpu_custom_call.1} parent=47 // pred_check
          %p1710 = pneg %p193
        $region58: #{tpu_custom_call.1} parent=47 // pred_check_branch
          %1712 = sbr.rel (%p1710) target = $region60
        $region59: #{tpu_custom_call.1} parent=47 // pred_region
          %s1714 = ssub.s32 256, 256
          %1715 = vsyncadd %s1706, %s1714
          %s1716 = smul.addr %s23, 2
          %s1717 = smul.addr %s1716, 128
          %s1718 = scalar_lea.hbm %s7, %s1717
          %s1719 = sshll.u32 %s1709, 4
          %s1720 = int_to_ptr.vmem [resolvable:$true] %s1719
          %1725 = dma.vmem_to_hbm [thread:$0]  %s1720, 256, %s1718, %s1706, 128, 128, 8
        $region60: #{tpu_custom_call.1} parent=47 // pred_fallthru
          _
      $region48: #{tpu_custom_call.1} parent=5 // pred_fallthru
        _
      %p1726 = scmp.le.s32.totalorder 2, %s18
      // Predicated region
      $region61: #{tpu_custom_call.1} parent=5 // pred_check
        %p1727 = pneg %p1726
      $region62: #{tpu_custom_call.1} parent=5 // pred_check_branch
        %1729 = sbr.rel (%p1727) target = $region64
      $region63: #{tpu_custom_call.1} parent=5 // pred_region
        %s1730 = ssub.s32 %s18, 2
        // Predicated region
        $region65: #{tpu_custom_call.1} parent=63 // pred_check
          %p1731 = pneg %p199
        $region66: #{tpu_custom_call.1} parent=63 // pred_check_branch
          %1733 = sbr.rel (%p1731) target = $region68
        $region67: #{tpu_custom_call.1} parent=63 // pred_region
          %s1734 = sand.u32 %s184, 1
          %s1735 = scalar_lea.sflag [#allocation5], %s1734
          %s1736 = sand.u32 %s184, 1
          %s1737 = smul.addr %s1736, 16
          %s1738 = scalar_lea.vmem [#allocation8], %s1737
          %1739 = dma.done %s1735, 256
        $region68: #{tpu_custom_call.1} parent=63 // pred_fallthru
          _
      $region64: #{tpu_custom_call.1} parent=5 // pred_fallthru
        _
    $region6: #{tpu_custom_call.1} parent=1 // loop_footer
      %s22 = sadd.s32 1, %s18
    $region7: #{tpu_custom_call.1} parent=1 // loop_footer_branch
      %17 = sbr.rel target = $region3
    $region8: #{tpu_custom_call.1} parent=1 // loop_exit
      _
    %1740 = vsyncpa [#allocation4], 1
    %s1741 = scalar_lea.sflag [#allocation4], 1
    %1742 = vsyncpa %s1741, 1
    %1743 = vsyncpa [#allocation7], 1
    %1744 = vsyncpa [#allocation5], 1
    %s1745 = scalar_lea.sflag [#allocation5], 1
    %1746 = vsyncpa %s1745, 1

</llo_original>
